<compile_context>
chip_gen: v6e
topology: v6e:2x2x1
jax: 0.10.0
libtpu: 0.0.40
codegen_flags: <defaults>
</compile_context>

<pallas_src>
import functools

import jax
import jax.numpy as jnp
from jax.experimental import pallas as pl
from jax.experimental.pallas import tpu as pltpu


def _basic_block_kernel(x_ref, w1_ref, s1_ref, b1_ref, w2_ref, s2_ref, b2_ref,
                        o_ref, pad1_ref, pad2_ref, col_ref, *,
                        H, W, Cin, Cout, compute_dtype):
    Wp = W + 2                       # padded width
    M = H * Wp                       # padded-width matmul rows
    interior = Wp + 1                # flat index of padded pixel (1, 1)
    P = pad1_ref.shape[0]            # (H+2)*(W+2) + 8 (tap-overrun tail)

    # ---- stage the zero-padded input (flat [(H+2)*(W+2)+8, Cin]) ------------
    # One contiguous full-buffer zero (covers halo, the 2-wide inter-row gaps
    # and the tap-overrun tail), then H contiguous interior row stores.  Done
    # per step so the kernel stays correct when the parallel grid is split
    # across TensorCores.
    pad1_ref[...] = jnp.zeros_like(pad1_ref)
    for y in range(H):
        pad1_ref[pl.ds((y + 1) * Wp + 1, W), :] = x_ref[0, pl.ds(y * W, W), :]

    # slab rows whose padded-width column index lands on a halo column
    col_idx = jax.lax.broadcasted_iota(jnp.int32, (M, 1), 0) % Wp
    valid = col_idx < W

    # ---- conv1: 9 contiguous taps -> (M, 9*Cin) slab -> one MXU matmul ------
    for k in range(9):
        ky, kx = divmod(k, 3)
        tap = pad1_ref[pl.ds(ky * Wp + kx, M), :]
        col_ref[:, k * Cin:(k + 1) * Cin] = tap.astype(compute_dtype)
    acc1 = jnp.dot(col_ref[...], w1_ref[...],
                   preferred_element_type=jnp.float32)

    # ---- bn1 (folded) + relu in f32, mask halo-column rows, stage for conv2 -
    y1 = jnp.maximum(acc1 * s1_ref[...] + b1_ref[...], 0.0)
    y1 = jnp.where(valid, y1, 0.0)
    pad2_ref[pl.ds(0, interior), :] = jnp.zeros((interior, Cout), jnp.float32)
    tail = P - (interior + M)
    pad2_ref[pl.ds(interior + M, tail), :] = jnp.zeros((tail, Cout),
                                                       jnp.float32)
    pad2_ref[pl.ds(interior, M), :] = y1          # one contiguous slab store

    # ---- conv2: 9 contiguous taps -> (M, 9*Cout) slab -> one MXU matmul -----
    for k in range(9):
        ky, kx = divmod(k, 3)
        tap = pad2_ref[pl.ds(ky * Wp + kx, M), :]
        col_ref[:, k * Cout:(k + 1) * Cout] = tap.astype(compute_dtype)
    acc2 = jnp.dot(col_ref[...], w2_ref[...],
                   preferred_element_type=jnp.float32)

    # ---- bn2 + residual (contiguous re-read of the padded input) + relu -----
    identity = pad1_ref[pl.ds(interior, M), :]
    z = acc2 * s2_ref[...] + b2_ref[...] + identity
    o_ref[0] = jnp.maximum(z, 0.0).astype(o_ref.dtype)


def basic_block_forward(x_nchw, params, eps=1e-5, compute_dtype=jnp.bfloat16):
    """BasicBlock forward (stride=1, downsample=None).  x_nchw: (N, C, H, W)."""
    N, Cin, H, W = x_nchw.shape
    Cout = params["w1"].shape[0]
    assert Cin == Cout, "downsample=None requires in_channel == out_channel"

    Wp = W + 2
    M = H * Wp                       # padded-width rows per image
    P = (H + 2) * Wp + 8             # flat padded-buffer rows (+ tap overrun)

    # Fold BN (inference) into per-channel scale / bias (kept in f32).
    def fold_bn(g, b, m, v):
        scale = g / jnp.sqrt(v + eps)
        return (scale.reshape(1, -1).astype(jnp.float32),
                (b - m * scale).reshape(1, -1).astype(jnp.float32))

    s1, b1 = fold_bn(params["g1"], params["b1"], params["m1"], params["v1"])
    s2, b2 = fold_bn(params["g2"], params["b2"], params["m2"], params["v2"])

    # PyTorch conv weight (Cout, Cin, kH, kW) -> (9*Cin, Cout) im2col matrix.
    w1_mat = jnp.transpose(params["w1"], (2, 3, 1, 0)).reshape(9 * Cin, Cout)
    w2_mat = jnp.transpose(params["w2"], (2, 3, 1, 0)).reshape(9 * Cout, Cout)
    w1_mat = w1_mat.astype(compute_dtype)
    w2_mat = w2_mat.astype(compute_dtype)

    # NCHW -> flat channels-last (N, H*W, C); contiguous reshape, no pad copy.
    x_flat = jnp.transpose(x_nchw, (0, 2, 3, 1)).astype(jnp.float32)
    x_flat = x_flat.reshape(N, H * W, Cin)

    kernel = functools.partial(_basic_block_kernel, H=H, W=W, Cin=Cin,
                               Cout=Cout, compute_dtype=compute_dtype)

    # VMEM budget: double-buffered blocks + persistent scratch, +25% margin,
    # capped per generation (<=48 MiB when the chip has 64 MiB VMEM, up to
    # ~100 MiB on 128 MiB parts).
    itemsize_c = jnp.dtype(compute_dtype).itemsize
    block_bytes = (2 * H * W * Cin * 4                         # input block
                   + 2 * M * Cout * 4                          # output block
                   + 2 * 9 * (Cin + Cout) * Cout * itemsize_c  # weights
                   + 2 * 4 * Cout * 4)                         # scale / bias
    scratch_bytes = (P * (Cin + Cout) * 4                      # padded buffers
                     + M * 9 * Cin * itemsize_c)               # im2col slab
    footprint = block_bytes + scratch_bytes
    try:
        phys_vmem = int(getattr(pltpu.get_tpu_info(), "vmem_capacity_bytes",
                                64 << 20))
    except Exception:
        phys_vmem = 64 << 20
    cap = min(100 << 20, int(0.75 * phys_vmem))
    vmem_limit = int(min(max(int(1.25 * footprint), 8 << 20), cap))

    out_flat = pl.pallas_call(
        kernel,
        out_shape=jax.ShapeDtypeStruct((N, M, Cout), jnp.float32),
        grid_spec=pltpu.PrefetchScalarGridSpec(
            num_scalar_prefetch=0,
            grid=(N,),
            in_specs=[
                pl.BlockSpec((1, H * W, Cin), lambda n: (n, 0, 0)),
                pl.BlockSpec((9 * Cin, Cout), lambda n: (0, 0)),
                pl.BlockSpec((1, Cout), lambda n: (0, 0)),
                pl.BlockSpec((1, Cout), lambda n: (0, 0)),
                pl.BlockSpec((9 * Cout, Cout), lambda n: (0, 0)),
                pl.BlockSpec((1, Cout), lambda n: (0, 0)),
                pl.BlockSpec((1, Cout), lambda n: (0, 0)),
            ],
            out_specs=pl.BlockSpec((1, M, Cout), lambda n: (n, 0, 0)),
            scratch_shapes=[
                pltpu.VMEM((P, Cin), jnp.float32),        # padded x (flat)
                pltpu.VMEM((P, Cout), jnp.float32),       # padded relu1 (flat)
                pltpu.VMEM((M, 9 * Cin), compute_dtype),  # im2col slab
            ]),
        compiler_params=pltpu.CompilerParams(
            dimension_semantics=("parallel",),
            vmem_limit_bytes=vmem_limit),
    )(x_flat, w1_mat, s1, b1, w2_mat, s2, b2)

    # Strip the padded-width garbage columns and go back to NCHW.
    out_nhwc = out_flat.reshape(N, H, Wp, Cout)[:, :, :W, :]
    return jnp.transpose(out_nhwc, (0, 3, 1, 2))


def reference_forward(x, p, eps=1e-5):
    """Pure-JAX reference matching the PyTorch module (eval-mode BN)."""
    def conv(x, w):
        return jax.lax.conv_general_dilated(
            x, w, (1, 1), ((1, 1), (1, 1)),
            dimension_numbers=("NCHW", "OIHW", "NCHW"))

    def bn(x, g, b, m, v):
        sh = (1, -1, 1, 1)
        return ((x - m.reshape(sh)) / jnp.sqrt(v.reshape(sh) + eps)
                * g.reshape(sh) + b.reshape(sh))

    t = jax.nn.relu(bn(conv(x, p["w1"]), p["g1"], p["b1"], p["m1"], p["v1"]))
    t = bn(conv(t, p["w2"]), p["g2"], p["b2"], p["m2"], p["v2"])
    return jax.nn.relu(t + x)


if __name__ == "__main__":
    N, C, H, W = 2, 4, 16, 16  # in_channel == out_channel, stride=1, no downsample

    key = jax.random.PRNGKey(0)
    ks = jax.random.split(key, 11)
    params = {
        "w1": jax.random.normal(ks[0], (C, C, 3, 3), jnp.float32) * 0.1,
        "g1": jax.random.normal(ks[1], (C,), jnp.float32) * 0.1 + 1.0,
        "b1": jax.random.normal(ks[2], (C,), jnp.float32) * 0.1,
        "m1": jax.random.normal(ks[3], (C,), jnp.float32) * 0.1,
        "v1": jax.random.uniform(ks[4], (C,), jnp.float32, 0.5, 1.5),
        "w2": jax.random.normal(ks[5], (C, C, 3, 3), jnp.float32) * 0.1,
        "g2": jax.random.normal(ks[6], (C,), jnp.float32) * 0.1 + 1.0,
        "b2": jax.random.normal(ks[7], (C,), jnp.float32) * 0.1,
        "m2": jax.random.normal(ks[8], (C,), jnp.float32) * 0.1,
        "v2": jax.random.uniform(ks[9], (C,), jnp.float32, 0.5, 1.5),
    }
    x = jax.random.normal(ks[10], (N, C, H, W), jnp.float32)

    ref = reference_forward(x, params)

    # f32 MXU operands: must match the f32 reference tightly.
    out_f32 = jax.block_until_ready(
        basic_block_forward(x, params, compute_dtype=jnp.float32))
    assert out_f32.shape == ref.shape == (N, C, H, W)
    assert jnp.allclose(out_f32, ref, rtol=1e-4, atol=1e-4), "f32 mismatch"

    # bf16 MXU operands (production default): rounded operands, loose tolerance.
    out_bf16 = jax.block_until_ready(basic_block_forward(x, params))
    assert out_bf16.shape == ref.shape
    assert jnp.allclose(out_bf16, ref, rtol=1e-1, atol=1e-1), "bf16 mismatch"

    print("KERNEL_OK")
</pallas_src>

<mosaic_0001>
module attributes {stable_mosaic.version = 11 : i64} {
  func.func @_basic_block_kernel(%arg0: i32, %arg1: memref<1x256x4xf32, #tpu.memory_space<vmem>>, %arg2: memref<36x4xf32, #tpu.memory_space<vmem>>, %arg3: memref<1x4xf32, #tpu.memory_space<vmem>>, %arg4: memref<1x4xf32, #tpu.memory_space<vmem>>, %arg5: memref<36x4xf32, #tpu.memory_space<vmem>>, %arg6: memref<1x4xf32, #tpu.memory_space<vmem>>, %arg7: memref<1x4xf32, #tpu.memory_space<vmem>>, %arg8: memref<1x288x4xf32, #tpu.memory_space<vmem>>, %arg9: memref<332x4xf32, #tpu.memory_space<vmem>>, %arg10: memref<332x4xf32, #tpu.memory_space<vmem>>, %arg11: memref<288x36xf32, #tpu.memory_space<vmem>>) attributes {dimension_semantics = [#tpu.dimension_semantics<parallel>], iteration_bounds = array<i64: 2>, scalar_prefetch = 0 : i64, scratch_operands = 3 : i64, tpu.core_type = #tpu.core_type<tc>, window_params = [{transform_indices = @transform_0, window_bounds = array<i64: 1, 256, 4>}, {pipeline_mode = #tpu.pipeline_mode<synchronous>, transform_indices = @transform_1, window_bounds = array<i64: 36, 4>}, {pipeline_mode = #tpu.pipeline_mode<synchronous>, transform_indices = @transform_2, window_bounds = array<i64: 1, 4>}, {pipeline_mode = #tpu.pipeline_mode<synchronous>, transform_indices = @transform_3, window_bounds = array<i64: 1, 4>}, {pipeline_mode = #tpu.pipeline_mode<synchronous>, transform_indices = @transform_4, window_bounds = array<i64: 36, 4>}, {pipeline_mode = #tpu.pipeline_mode<synchronous>, transform_indices = @transform_5, window_bounds = array<i64: 1, 4>}, {pipeline_mode = #tpu.pipeline_mode<synchronous>, transform_indices = @transform_6, window_bounds = array<i64: 1, 4>}, {transform_indices = @transform_7, window_bounds = array<i64: 1, 288, 4>}]} {
    %cst = arith.constant 0.000000e+00 : f32
    %0 = vector.broadcast %cst : f32 to vector<332x4xf32>
    %c0 = arith.constant 0 : index
    %c0_0 = arith.constant 0 : index
    %1 = vector.load %arg9[%c0, %c0_0] : memref<332x4xf32, #tpu.memory_space<vmem>>, vector<332x4xf32>
    tpu.vector_store %arg9[%c0, %c0_0], %0 {strides = array<i32>} : memref<332x4xf32, #tpu.memory_space<vmem>>, vector<332x4xf32>,
    %c0_1 = arith.constant 0 : index
    %c0_2 = arith.constant 0 : index
    %c0_3 = arith.constant 0 : index
    %2 = vector.load %arg1[%c0_1, %c0_2, %c0_3] : memref<1x256x4xf32, #tpu.memory_space<vmem>>, vector<1x16x4xf32>
    %3 = vector.shape_cast %2 : vector<1x16x4xf32> to vector<16x4xf32>
    %c19 = arith.constant 19 : index
    %c0_4 = arith.constant 0 : index
    %4 = vector.load %arg9[%c19, %c0_4] : memref<332x4xf32, #tpu.memory_space<vmem>>, vector<16x4xf32>
    tpu.vector_store %arg9[%c19, %c0_4], %3 {strides = array<i32>} : memref<332x4xf32, #tpu.memory_space<vmem>>, vector<16x4xf32>,
    %c0_5 = arith.constant 0 : index
    %c16 = arith.constant 16 : index
    %c0_6 = arith.constant 0 : index
    %5 = vector.load %arg1[%c0_5, %c16, %c0_6] : memref<1x256x4xf32, #tpu.memory_space<vmem>>, vector<1x16x4xf32>
    %6 = vector.shape_cast %5 : vector<1x16x4xf32> to vector<16x4xf32>
    %c37 = arith.constant 37 : index
    %c0_7 = arith.constant 0 : index
    %7 = vector.load %arg9[%c37, %c0_7] : memref<332x4xf32, #tpu.memory_space<vmem>>, vector<16x4xf32>
    tpu.vector_store %arg9[%c37, %c0_7], %6 {strides = array<i32>} : memref<332x4xf32, #tpu.memory_space<vmem>>, vector<16x4xf32>,
    %c0_8 = arith.constant 0 : index
    %c32 = arith.constant 32 : index
    %c0_9 = arith.constant 0 : index
    %8 = vector.load %arg1[%c0_8, %c32, %c0_9] : memref<1x256x4xf32, #tpu.memory_space<vmem>>, vector<1x16x4xf32>
    %9 = vector.shape_cast %8 : vector<1x16x4xf32> to vector<16x4xf32>
    %c55 = arith.constant 55 : index
    %c0_10 = arith.constant 0 : index
    %10 = vector.load %arg9[%c55, %c0_10] : memref<332x4xf32, #tpu.memory_space<vmem>>, vector<16x4xf32>
    tpu.vector_store %arg9[%c55, %c0_10], %9 {strides = array<i32>} : memref<332x4xf32, #tpu.memory_space<vmem>>, vector<16x4xf32>,
    %c0_11 = arith.constant 0 : index
    %c48 = arith.constant 48 : index
    %c0_12 = arith.constant 0 : index
    %11 = vector.load %arg1[%c0_11, %c48, %c0_12] : memref<1x256x4xf32, #tpu.memory_space<vmem>>, vector<1x16x4xf32>
    %12 = vector.shape_cast %11 : vector<1x16x4xf32> to vector<16x4xf32>
    %c73 = arith.constant 73 : index
    %c0_13 = arith.constant 0 : index
    %13 = vector.load %arg9[%c73, %c0_13] : memref<332x4xf32, #tpu.memory_space<vmem>>, vector<16x4xf32>
    tpu.vector_store %arg9[%c73, %c0_13], %12 {strides = array<i32>} : memref<332x4xf32, #tpu.memory_space<vmem>>, vector<16x4xf32>,
    %c0_14 = arith.constant 0 : index
    %c64 = arith.constant 64 : index
    %c0_15 = arith.constant 0 : index
    %14 = vector.load %arg1[%c0_14, %c64, %c0_15] : memref<1x256x4xf32, #tpu.memory_space<vmem>>, vector<1x16x4xf32>
    %15 = vector.shape_cast %14 : vector<1x16x4xf32> to vector<16x4xf32>
    %c91 = arith.constant 91 : index
    %c0_16 = arith.constant 0 : index
    %16 = vector.load %arg9[%c91, %c0_16] : memref<332x4xf32, #tpu.memory_space<vmem>>, vector<16x4xf32>
    tpu.vector_store %arg9[%c91, %c0_16], %15 {strides = array<i32>} : memref<332x4xf32, #tpu.memory_space<vmem>>, vector<16x4xf32>,
    %c0_17 = arith.constant 0 : index
    %c80 = arith.constant 80 : index
    %c0_18 = arith.constant 0 : index
    %17 = vector.load %arg1[%c0_17, %c80, %c0_18] : memref<1x256x4xf32, #tpu.memory_space<vmem>>, vector<1x16x4xf32>
    %18 = vector.shape_cast %17 : vector<1x16x4xf32> to vector<16x4xf32>
    %c109 = arith.constant 109 : index
    %c0_19 = arith.constant 0 : index
    %19 = vector.load %arg9[%c109, %c0_19] : memref<332x4xf32, #tpu.memory_space<vmem>>, vector<16x4xf32>
    tpu.vector_store %arg9[%c109, %c0_19], %18 {strides = array<i32>} : memref<332x4xf32, #tpu.memory_space<vmem>>, vector<16x4xf32>,
    %c0_20 = arith.constant 0 : index
    %c96 = arith.constant 96 : index
    %c0_21 = arith.constant 0 : index
    %20 = vector.load %arg1[%c0_20, %c96, %c0_21] : memref<1x256x4xf32, #tpu.memory_space<vmem>>, vector<1x16x4xf32>
    %21 = vector.shape_cast %20 : vector<1x16x4xf32> to vector<16x4xf32>
    %c127 = arith.constant 127 : index
    %c0_22 = arith.constant 0 : index
    %22 = vector.load %arg9[%c127, %c0_22] : memref<332x4xf32, #tpu.memory_space<vmem>>, vector<16x4xf32>
    tpu.vector_store %arg9[%c127, %c0_22], %21 {strides = array<i32>} : memref<332x4xf32, #tpu.memory_space<vmem>>, vector<16x4xf32>,
    %c0_23 = arith.constant 0 : index
    %c112 = arith.constant 112 : index
    %c0_24 = arith.constant 0 : index
    %23 = vector.load %arg1[%c0_23, %c112, %c0_24] : memref<1x256x4xf32, #tpu.memory_space<vmem>>, vector<1x16x4xf32>
    %24 = vector.shape_cast %23 : vector<1x16x4xf32> to vector<16x4xf32>
    %c145 = arith.constant 145 : index
    %c0_25 = arith.constant 0 : index
    %25 = vector.load %arg9[%c145, %c0_25] : memref<332x4xf32, #tpu.memory_space<vmem>>, vector<16x4xf32>
    tpu.vector_store %arg9[%c145, %c0_25], %24 {strides = array<i32>} : memref<332x4xf32, #tpu.memory_space<vmem>>, vector<16x4xf32>,
    %c0_26 = arith.constant 0 : index
    %c128 = arith.constant 128 : index
    %c0_27 = arith.constant 0 : index
    %26 = vector.load %arg1[%c0_26, %c128, %c0_27] : memref<1x256x4xf32, #tpu.memory_space<vmem>>, vector<1x16x4xf32>
    %27 = vector.shape_cast %26 : vector<1x16x4xf32> to vector<16x4xf32>
    %c163 = arith.constant 163 : index
    %c0_28 = arith.constant 0 : index
    %28 = vector.load %arg9[%c163, %c0_28] : memref<332x4xf32, #tpu.memory_space<vmem>>, vector<16x4xf32>
    tpu.vector_store %arg9[%c163, %c0_28], %27 {strides = array<i32>} : memref<332x4xf32, #tpu.memory_space<vmem>>, vector<16x4xf32>,
    %c0_29 = arith.constant 0 : index
    %c144 = arith.constant 144 : index
    %c0_30 = arith.constant 0 : index
    %29 = vector.load %arg1[%c0_29, %c144, %c0_30] : memref<1x256x4xf32, #tpu.memory_space<vmem>>, vector<1x16x4xf32>
    %30 = vector.shape_cast %29 : vector<1x16x4xf32> to vector<16x4xf32>
    %c181 = arith.constant 181 : index
    %c0_31 = arith.constant 0 : index
    %31 = vector.load %arg9[%c181, %c0_31] : memref<332x4xf32, #tpu.memory_space<vmem>>, vector<16x4xf32>
    tpu.vector_store %arg9[%c181, %c0_31], %30 {strides = array<i32>} : memref<332x4xf32, #tpu.memory_space<vmem>>, vector<16x4xf32>,
    %c0_32 = arith.constant 0 : index
    %c160 = arith.constant 160 : index
    %c0_33 = arith.constant 0 : index
    %32 = vector.load %arg1[%c0_32, %c160, %c0_33] : memref<1x256x4xf32, #tpu.memory_space<vmem>>, vector<1x16x4xf32>
    %33 = vector.shape_cast %32 : vector<1x16x4xf32> to vector<16x4xf32>
    %c199 = arith.constant 199 : index
    %c0_34 = arith.constant 0 : index
    %34 = vector.load %arg9[%c199, %c0_34] : memref<332x4xf32, #tpu.memory_space<vmem>>, vector<16x4xf32>
    tpu.vector_store %arg9[%c199, %c0_34], %33 {strides = array<i32>} : memref<332x4xf32, #tpu.memory_space<vmem>>, vector<16x4xf32>,
    %c0_35 = arith.constant 0 : index
    %c176 = arith.constant 176 : index
    %c0_36 = arith.constant 0 : index
    %35 = vector.load %arg1[%c0_35, %c176, %c0_36] : memref<1x256x4xf32, #tpu.memory_space<vmem>>, vector<1x16x4xf32>
    %36 = vector.shape_cast %35 : vector<1x16x4xf32> to vector<16x4xf32>
    %c217 = arith.constant 217 : index
    %c0_37 = arith.constant 0 : index
    %37 = vector.load %arg9[%c217, %c0_37] : memref<332x4xf32, #tpu.memory_space<vmem>>, vector<16x4xf32>
    tpu.vector_store %arg9[%c217, %c0_37], %36 {strides = array<i32>} : memref<332x4xf32, #tpu.memory_space<vmem>>, vector<16x4xf32>,
    %c0_38 = arith.constant 0 : index
    %c192 = arith.constant 192 : index
    %c0_39 = arith.constant 0 : index
    %38 = vector.load %arg1[%c0_38, %c192, %c0_39] : memref<1x256x4xf32, #tpu.memory_space<vmem>>, vector<1x16x4xf32>
    %39 = vector.shape_cast %38 : vector<1x16x4xf32> to vector<16x4xf32>
    %c235 = arith.constant 235 : index
    %c0_40 = arith.constant 0 : index
    %40 = vector.load %arg9[%c235, %c0_40] : memref<332x4xf32, #tpu.memory_space<vmem>>, vector<16x4xf32>
    tpu.vector_store %arg9[%c235, %c0_40], %39 {strides = array<i32>} : memref<332x4xf32, #tpu.memory_space<vmem>>, vector<16x4xf32>,
    %c0_41 = arith.constant 0 : index
    %c208 = arith.constant 208 : index
    %c0_42 = arith.constant 0 : index
    %41 = vector.load %arg1[%c0_41, %c208, %c0_42] : memref<1x256x4xf32, #tpu.memory_space<vmem>>, vector<1x16x4xf32>
    %42 = vector.shape_cast %41 : vector<1x16x4xf32> to vector<16x4xf32>
    %c253 = arith.constant 253 : index
    %c0_43 = arith.constant 0 : index
    %43 = vector.load %arg9[%c253, %c0_43] : memref<332x4xf32, #tpu.memory_space<vmem>>, vector<16x4xf32>
    tpu.vector_store %arg9[%c253, %c0_43], %42 {strides = array<i32>} : memref<332x4xf32, #tpu.memory_space<vmem>>, vector<16x4xf32>,
    %c0_44 = arith.constant 0 : index
    %c224 = arith.constant 224 : index
    %c0_45 = arith.constant 0 : index
    %44 = vector.load %arg1[%c0_44, %c224, %c0_45] : memref<1x256x4xf32, #tpu.memory_space<vmem>>, vector<1x16x4xf32>
    %45 = vector.shape_cast %44 : vector<1x16x4xf32> to vector<16x4xf32>
    %c271 = arith.constant 271 : index
    %c0_46 = arith.constant 0 : index
    %46 = vector.load %arg9[%c271, %c0_46] : memref<332x4xf32, #tpu.memory_space<vmem>>, vector<16x4xf32>
    tpu.vector_store %arg9[%c271, %c0_46], %45 {strides = array<i32>} : memref<332x4xf32, #tpu.memory_space<vmem>>, vector<16x4xf32>,
    %c0_47 = arith.constant 0 : index
    %c240 = arith.constant 240 : index
    %c0_48 = arith.constant 0 : index
    %47 = vector.load %arg1[%c0_47, %c240, %c0_48] : memref<1x256x4xf32, #tpu.memory_space<vmem>>, vector<1x16x4xf32>
    %48 = vector.shape_cast %47 : vector<1x16x4xf32> to vector<16x4xf32>
    %c289 = arith.constant 289 : index
    %c0_49 = arith.constant 0 : index
    %49 = vector.load %arg9[%c289, %c0_49] : memref<332x4xf32, #tpu.memory_space<vmem>>, vector<16x4xf32>
    tpu.vector_store %arg9[%c289, %c0_49], %48 {strides = array<i32>} : memref<332x4xf32, #tpu.memory_space<vmem>>, vector<16x4xf32>,
    %50 = tpu.iota {dimensions = array<i32: 0>} : vector<288x1xi32>
    %c18_i32 = arith.constant 18 : i32
    %c0_i32 = arith.constant 0 : i32
    %51 = arith.cmpi eq, %c18_i32, %c0_i32 : i32
    %c1_i32 = arith.constant 1 : i32
    %52 = arith.select %51, %c1_i32, %c18_i32 : i32
    %53 = vector.broadcast %52 : i32 to vector<288x1xi32>
    %54 = arith.remsi %50, %53 : vector<288x1xi32>
    %c0_i32_50 = arith.constant 0 : i32
    %55 = vector.broadcast %c0_i32_50 : i32 to vector<288x1xi32>
    %56 = arith.cmpi ne, %54, %55 : vector<288x1xi32>
    %c0_i32_51 = arith.constant 0 : i32
    %57 = vector.broadcast %c0_i32_51 : i32 to vector<288x1xi32>
    %58 = arith.cmpi slt, %54, %57 : vector<288x1xi32>
    %c0_i32_52 = arith.constant 0 : i32
    %59 = arith.cmpi slt, %52, %c0_i32_52 : i32
    %60 = vector.broadcast %59 : i1 to vector<288x1xi1>
    %61 = vector.broadcast %60 : vector<288x1xi1> to vector<288x1xi1>
    %62 = arith.xori %58, %61 : vector<288x1xi1>
    %63 = arith.andi %62, %56 : vector<288x1xi1>
    %64 = vector.broadcast %52 : i32 to vector<288x1xi32>
    %65 = arith.addi %54, %64 : vector<288x1xi32>
    %66 = arith.select %63, %65, %54 : vector<288x1xi1>, vector<288x1xi32>
    %c16_i32 = arith.constant 16 : i32
    %67 = vector.broadcast %c16_i32 : i32 to vector<288x1xi32>
    %68 = arith.cmpi slt, %66, %67 : vector<288x1xi32>
    %c0_53 = arith.constant 0 : index
    %c0_54 = arith.constant 0 : index
    %69 = vector.load %arg9[%c0_53, %c0_54] : memref<332x4xf32, #tpu.memory_space<vmem>>, vector<288x4xf32>
    %c0_55 = arith.constant 0 : index
    %c0_56 = arith.constant 0 : index
    %70 = vector.load %arg11[%c0_55, %c0_56] : memref<288x36xf32, #tpu.memory_space<vmem>>, vector<288x4xf32>
    tpu.vector_store %arg11[%c0_55, %c0_56], %69 {strides = array<i32>} : memref<288x36xf32, #tpu.memory_space<vmem>>, vector<288x4xf32>,
    %c1 = arith.constant 1 : index
    %c0_57 = arith.constant 0 : index
    %71 = vector.load %arg9[%c1, %c0_57] : memref<332x4xf32, #tpu.memory_space<vmem>>, vector<288x4xf32>
    %c0_58 = arith.constant 0 : index
    %c4 = arith.constant 4 : index
    %72 = vector.load %arg11[%c0_58, %c4] : memref<288x36xf32, #tpu.memory_space<vmem>>, vector<288x4xf32>
    tpu.vector_store %arg11[%c0_58, %c4], %71 {strides = array<i32>} : memref<288x36xf32, #tpu.memory_space<vmem>>, vector<288x4xf32>,
    %c2 = arith.constant 2 : index
    %c0_59 = arith.constant 0 : index
    %73 = vector.load %arg9[%c2, %c0_59] : memref<332x4xf32, #tpu.memory_space<vmem>>, vector<288x4xf32>
    %c0_60 = arith.constant 0 : index
    %c8 = arith.constant 8 : index
    %74 = vector.load %arg11[%c0_60, %c8] : memref<288x36xf32, #tpu.memory_space<vmem>>, vector<288x4xf32>
    tpu.vector_store %arg11[%c0_60, %c8], %73 {strides = array<i32>} : memref<288x36xf32, #tpu.memory_space<vmem>>, vector<288x4xf32>,
    %c18 = arith.constant 18 : index
    %c0_61 = arith.constant 0 : index
    %75 = vector.load %arg9[%c18, %c0_61] : memref<332x4xf32, #tpu.memory_space<vmem>>, vector<288x4xf32>
    %c0_62 = arith.constant 0 : index
    %c12 = arith.constant 12 : index
    %76 = vector.load %arg11[%c0_62, %c12] : memref<288x36xf32, #tpu.memory_space<vmem>>, vector<288x4xf32>
    tpu.vector_store %arg11[%c0_62, %c12], %75 {strides = array<i32>} : memref<288x36xf32, #tpu.memory_space<vmem>>, vector<288x4xf32>,
    %c19_63 = arith.constant 19 : index
    %c0_64 = arith.constant 0 : index
    %77 = vector.load %arg9[%c19_63, %c0_64] : memref<332x4xf32, #tpu.memory_space<vmem>>, vector<288x4xf32>
    %c0_65 = arith.constant 0 : index
    %c16_66 = arith.constant 16 : index
    %78 = vector.load %arg11[%c0_65, %c16_66] : memref<288x36xf32, #tpu.memory_space<vmem>>, vector<288x4xf32>
    tpu.vector_store %arg11[%c0_65, %c16_66], %77 {strides = array<i32>} : memref<288x36xf32, #tpu.memory_space<vmem>>, vector<288x4xf32>,
    %c20 = arith.constant 20 : index
    %c0_67 = arith.constant 0 : index
    %79 = vector.load %arg9[%c20, %c0_67] : memref<332x4xf32, #tpu.memory_space<vmem>>, vector<288x4xf32>
    %c0_68 = arith.constant 0 : index
    %c20_69 = arith.constant 20 : index
    %80 = vector.load %arg11[%c0_68, %c20_69] : memref<288x36xf32, #tpu.memory_space<vmem>>, vector<288x4xf32>
    tpu.vector_store %arg11[%c0_68, %c20_69], %79 {strides = array<i32>} : memref<288x36xf32, #tpu.memory_space<vmem>>, vector<288x4xf32>,
    %c36 = arith.constant 36 : index
    %c0_70 = arith.constant 0 : index
    %81 = vector.load %arg9[%c36, %c0_70] : memref<332x4xf32, #tpu.memory_space<vmem>>, vector<288x4xf32>
    %c0_71 = arith.constant 0 : index
    %c24 = arith.constant 24 : index
    %82 = vector.load %arg11[%c0_71, %c24] : memref<288x36xf32, #tpu.memory_space<vmem>>, vector<288x4xf32>
    tpu.vector_store %arg11[%c0_71, %c24], %81 {strides = array<i32>} : memref<288x36xf32, #tpu.memory_space<vmem>>, vector<288x4xf32>,
    %c37_72 = arith.constant 37 : index
    %c0_73 = arith.constant 0 : index
    %83 = vector.load %arg9[%c37_72, %c0_73] : memref<332x4xf32, #tpu.memory_space<vmem>>, vector<288x4xf32>
    %c0_74 = arith.constant 0 : index
    %c28 = arith.constant 28 : index
    %84 = vector.load %arg11[%c0_74, %c28] : memref<288x36xf32, #tpu.memory_space<vmem>>, vector<288x4xf32>
    tpu.vector_store %arg11[%c0_74, %c28], %83 {strides = array<i32>} : memref<288x36xf32, #tpu.memory_space<vmem>>, vector<288x4xf32>,
    %c38 = arith.constant 38 : index
    %c0_75 = arith.constant 0 : index
    %85 = vector.load %arg9[%c38, %c0_75] : memref<332x4xf32, #tpu.memory_space<vmem>>, vector<288x4xf32>
    %c0_76 = arith.constant 0 : index
    %c32_77 = arith.constant 32 : index
    %86 = vector.load %arg11[%c0_76, %c32_77] : memref<288x36xf32, #tpu.memory_space<vmem>>, vector<288x4xf32>
    tpu.vector_store %arg11[%c0_76, %c32_77], %85 {strides = array<i32>} : memref<288x36xf32, #tpu.memory_space<vmem>>, vector<288x4xf32>,
    %c0_78 = arith.constant 0 : index
    %c0_79 = arith.constant 0 : index
    %87 = vector.load %arg11[%c0_78, %c0_79] : memref<288x36xf32, #tpu.memory_space<vmem>>, vector<288x36xf32>
    %c0_80 = arith.constant 0 : index
    %c0_81 = arith.constant 0 : index
    %88 = vector.load %arg2[%c0_80, %c0_81] : memref<36x4xf32, #tpu.memory_space<vmem>>, vector<36x4xf32>
    %cst_82 = arith.constant dense<0.000000e+00> : vector<288x4xf32>
    %89 = tpu.matmul %87, %88, %cst_82 {dimension_numbers = #tpu.dot_dimension_numbers<[1], [0], [0], [1], [0, 0, 1, 1], [], []>} : vector<288x36xf32>, vector<36x4xf32>, vector<288x4xf32> -> vector<288x4xf32>
    %c0_83 = arith.constant 0 : index
    %c0_84 = arith.constant 0 : index
    %90 = vector.load %arg3[%c0_83, %c0_84] : memref<1x4xf32, #tpu.memory_space<vmem>>, vector<1x4xf32>
    %91 = vector.broadcast %90 : vector<1x4xf32> to vector<288x4xf32>
    %92 = arith.mulf %89, %91 : vector<288x4xf32>
    %c0_85 = arith.constant 0 : index
    %c0_86 = arith.constant 0 : index
    %93 = vector.load %arg4[%c0_85, %c0_86] : memref<1x4xf32, #tpu.memory_space<vmem>>, vector<1x4xf32>
    %94 = vector.broadcast %93 : vector<1x4xf32> to vector<288x4xf32>
    %95 = arith.addf %92, %94 : vector<288x4xf32>
    %cst_87 = arith.constant 0.000000e+00 : f32
    %96 = vector.broadcast %cst_87 : f32 to vector<288x4xf32>
    %97 = arith.maximumf %95, %96 : vector<288x4xf32>
    %cst_88 = arith.constant 0.000000e+00 : f32
    %98 = vector.shape_cast %68 : vector<288x1xi1> to vector<288x1xi1>
    %99 = vector.broadcast %98 : vector<288x1xi1> to vector<288x4xi1>
    %100 = vector.broadcast %cst_88 : f32 to vector<288x4xf32>
    %101 = arith.select %99, %97, %100 : vector<288x4xi1>, vector<288x4xf32>
    %cst_89 = arith.constant 0.000000e+00 : f32
    %102 = vector.broadcast %cst_89 : f32 to vector<19x4xf32>
    %c0_90 = arith.constant 0 : index
    %c0_91 = arith.constant 0 : index
    %103 = vector.load %arg10[%c0_90, %c0_91] : memref<332x4xf32, #tpu.memory_space<vmem>>, vector<19x4xf32>
    tpu.vector_store %arg10[%c0_90, %c0_91], %102 {strides = array<i32>} : memref<332x4xf32, #tpu.memory_space<vmem>>, vector<19x4xf32>,
    %cst_92 = arith.constant 0.000000e+00 : f32
    %104 = vector.broadcast %cst_92 : f32 to vector<25x4xf32>
    %c307 = arith.constant 307 : index
    %c0_93 = arith.constant 0 : index
    %105 = vector.load %arg10[%c307, %c0_93] : memref<332x4xf32, #tpu.memory_space<vmem>>, vector<25x4xf32>
    tpu.vector_store %arg10[%c307, %c0_93], %104 {strides = array<i32>} : memref<332x4xf32, #tpu.memory_space<vmem>>, vector<25x4xf32>,
    %c19_94 = arith.constant 19 : index
    %c0_95 = arith.constant 0 : index
    %106 = vector.load %arg10[%c19_94, %c0_95] : memref<332x4xf32, #tpu.memory_space<vmem>>, vector<288x4xf32>
    tpu.vector_store %arg10[%c19_94, %c0_95], %101 {strides = array<i32>} : memref<332x4xf32, #tpu.memory_space<vmem>>, vector<288x4xf32>,
    %c0_96 = arith.constant 0 : index
    %c0_97 = arith.constant 0 : index
    %107 = vector.load %arg10[%c0_96, %c0_97] : memref<332x4xf32, #tpu.memory_space<vmem>>, vector<288x4xf32>
    %c0_98 = arith.constant 0 : index
    %c0_99 = arith.constant 0 : index
    %108 = vector.load %arg11[%c0_98, %c0_99] : memref<288x36xf32, #tpu.memory_space<vmem>>, vector<288x4xf32>
    tpu.vector_store %arg11[%c0_98, %c0_99], %107 {strides = array<i32>} : memref<288x36xf32, #tpu.memory_space<vmem>>, vector<288x4xf32>,
    %c1_100 = arith.constant 1 : index
    %c0_101 = arith.constant 0 : index
    %109 = vector.load %arg10[%c1_100, %c0_101] : memref<332x4xf32, #tpu.memory_space<vmem>>, vector<288x4xf32>
    %c0_102 = arith.constant 0 : index
    %c4_103 = arith.constant 4 : index
    %110 = vector.load %arg11[%c0_102, %c4_103] : memref<288x36xf32, #tpu.memory_space<vmem>>, vector<288x4xf32>
    tpu.vector_store %arg11[%c0_102, %c4_103], %109 {strides = array<i32>} : memref<288x36xf32, #tpu.memory_space<vmem>>, vector<288x4xf32>,
    %c2_104 = arith.constant 2 : index
    %c0_105 = arith.constant 0 : index
    %111 = vector.load %arg10[%c2_104, %c0_105] : memref<332x4xf32, #tpu.memory_space<vmem>>, vector<288x4xf32>
    %c0_106 = arith.constant 0 : index
    %c8_107 = arith.constant 8 : index
    %112 = vector.load %arg11[%c0_106, %c8_107] : memref<288x36xf32, #tpu.memory_space<vmem>>, vector<288x4xf32>
    tpu.vector_store %arg11[%c0_106, %c8_107], %111 {strides = array<i32>} : memref<288x36xf32, #tpu.memory_space<vmem>>, vector<288x4xf32>,
    %c18_108 = arith.constant 18 : index
    %c0_109 = arith.constant 0 : index
    %113 = vector.load %arg10[%c18_108, %c0_109] : memref<332x4xf32, #tpu.memory_space<vmem>>, vector<288x4xf32>
    %c0_110 = arith.constant 0 : index
    %c12_111 = arith.constant 12 : index
    %114 = vector.load %arg11[%c0_110, %c12_111] : memref<288x36xf32, #tpu.memory_space<vmem>>, vector<288x4xf32>
    tpu.vector_store %arg11[%c0_110, %c12_111], %113 {strides = array<i32>} : memref<288x36xf32, #tpu.memory_space<vmem>>, vector<288x4xf32>,
    %c19_112 = arith.constant 19 : index
    %c0_113 = arith.constant 0 : index
    %115 = vector.load %arg10[%c19_112, %c0_113] : memref<332x4xf32, #tpu.memory_space<vmem>>, vector<288x4xf32>
    %c0_114 = arith.constant 0 : index
    %c16_115 = arith.constant 16 : index
    %116 = vector.load %arg11[%c0_114, %c16_115] : memref<288x36xf32, #tpu.memory_space<vmem>>, vector<288x4xf32>
    tpu.vector_store %arg11[%c0_114, %c16_115], %115 {strides = array<i32>} : memref<288x36xf32, #tpu.memory_space<vmem>>, vector<288x4xf32>,
    %c20_116 = arith.constant 20 : index
    %c0_117 = arith.constant 0 : index
    %117 = vector.load %arg10[%c20_116, %c0_117] : memref<332x4xf32, #tpu.memory_space<vmem>>, vector<288x4xf32>
    %c0_118 = arith.constant 0 : index
    %c20_119 = arith.constant 20 : index
    %118 = vector.load %arg11[%c0_118, %c20_119] : memref<288x36xf32, #tpu.memory_space<vmem>>, vector<288x4xf32>
    tpu.vector_store %arg11[%c0_118, %c20_119], %117 {strides = array<i32>} : memref<288x36xf32, #tpu.memory_space<vmem>>, vector<288x4xf32>,
    %c36_120 = arith.constant 36 : index
    %c0_121 = arith.constant 0 : index
    %119 = vector.load %arg10[%c36_120, %c0_121] : memref<332x4xf32, #tpu.memory_space<vmem>>, vector<288x4xf32>
    %c0_122 = arith.constant 0 : index
    %c24_123 = arith.constant 24 : index
    %120 = vector.load %arg11[%c0_122, %c24_123] : memref<288x36xf32, #tpu.memory_space<vmem>>, vector<288x4xf32>
    tpu.vector_store %arg11[%c0_122, %c24_123], %119 {strides = array<i32>} : memref<288x36xf32, #tpu.memory_space<vmem>>, vector<288x4xf32>,
    %c37_124 = arith.constant 37 : index
    %c0_125 = arith.constant 0 : index
    %121 = vector.load %arg10[%c37_124, %c0_125] : memref<332x4xf32, #tpu.memory_space<vmem>>, vector<288x4xf32>
    %c0_126 = arith.constant 0 : index
    %c28_127 = arith.constant 28 : index
    %122 = vector.load %arg11[%c0_126, %c28_127] : memref<288x36xf32, #tpu.memory_space<vmem>>, vector<288x4xf32>
    tpu.vector_store %arg11[%c0_126, %c28_127], %121 {strides = array<i32>} : memref<288x36xf32, #tpu.memory_space<vmem>>, vector<288x4xf32>,
    %c38_128 = arith.constant 38 : index
    %c0_129 = arith.constant 0 : index
    %123 = vector.load %arg10[%c38_128, %c0_129] : memref<332x4xf32, #tpu.memory_space<vmem>>, vector<288x4xf32>
    %c0_130 = arith.constant 0 : index
    %c32_131 = arith.constant 32 : index
    %124 = vector.load %arg11[%c0_130, %c32_131] : memref<288x36xf32, #tpu.memory_space<vmem>>, vector<288x4xf32>
    tpu.vector_store %arg11[%c0_130, %c32_131], %123 {strides = array<i32>} : memref<288x36xf32, #tpu.memory_space<vmem>>, vector<288x4xf32>,
    %c0_132 = arith.constant 0 : index
    %c0_133 = arith.constant 0 : index
    %125 = vector.load %arg11[%c0_132, %c0_133] : memref<288x36xf32, #tpu.memory_space<vmem>>, vector<288x36xf32>
    %c0_134 = arith.constant 0 : index
    %c0_135 = arith.constant 0 : index
    %126 = vector.load %arg5[%c0_134, %c0_135] : memref<36x4xf32, #tpu.memory_space<vmem>>, vector<36x4xf32>
    %cst_136 = arith.constant dense<0.000000e+00> : vector<288x4xf32>
    %127 = tpu.matmul %125, %126, %cst_136 {dimension_numbers = #tpu.dot_dimension_numbers<[1], [0], [0], [1], [0, 0, 1, 1], [], []>} : vector<288x36xf32>, vector<36x4xf32>, vector<288x4xf32> -> vector<288x4xf32>
    %c19_137 = arith.constant 19 : index
    %c0_138 = arith.constant 0 : index
    %128 = vector.load %arg9[%c19_137, %c0_138] : memref<332x4xf32, #tpu.memory_space<vmem>>, vector<288x4xf32>
    %c0_139 = arith.constant 0 : index
    %c0_140 = arith.constant 0 : index
    %129 = vector.load %arg6[%c0_139, %c0_140] : memref<1x4xf32, #tpu.memory_space<vmem>>, vector<1x4xf32>
    %130 = vector.broadcast %129 : vector<1x4xf32> to vector<288x4xf32>
    %131 = arith.mulf %127, %130 : vector<288x4xf32>
    %c0_141 = arith.constant 0 : index
    %c0_142 = arith.constant 0 : index
    %132 = vector.load %arg7[%c0_141, %c0_142] : memref<1x4xf32, #tpu.memory_space<vmem>>, vector<1x4xf32>
    %133 = vector.broadcast %132 : vector<1x4xf32> to vector<288x4xf32>
    %134 = arith.addf %131, %133 : vector<288x4xf32>
    %135 = arith.addf %134, %128 : vector<288x4xf32>
    %cst_143 = arith.constant 0.000000e+00 : f32
    %136 = vector.broadcast %cst_143 : f32 to vector<288x4xf32>
    %137 = arith.maximumf %135, %136 : vector<288x4xf32>
    %c0_144 = arith.constant 0 : index
    %c0_145 = arith.constant 0 : index
    %c0_146 = arith.constant 0 : index
    %138 = vector.load %arg8[%c0_144, %c0_145, %c0_146] : memref<1x288x4xf32, #tpu.memory_space<vmem>>, vector<1x288x4xf32>
    %139 = vector.shape_cast %138 : vector<1x288x4xf32> to vector<288x4xf32>
    %140 = vector.shape_cast %137 : vector<288x4xf32> to vector<1x288x4xf32>
    tpu.vector_store %arg8[%c0_144, %c0_145, %c0_146], %140 {strides = array<i32>} : memref<1x288x4xf32, #tpu.memory_space<vmem>>, vector<1x288x4xf32>,
    return
  }
  func.func @transform_0(%arg0: i32) -> (i32, i32, i32) {
    %c0_i32 = arith.constant 0 : i32
    %c0_i32_0 = arith.constant 0 : i32
    %c0_i32_1 = arith.constant 0 : i32
    return %arg0, %c0_i32, %c0_i32_0 : i32, i32, i32
  }
  func.func @transform_1(%arg0: i32) -> (i32, i32) {
    %c0_i32 = arith.constant 0 : i32
    %c0_i32_0 = arith.constant 0 : i32
    %c0_i32_1 = arith.constant 0 : i32
    return %c0_i32, %c0_i32_0 : i32, i32
  }
  func.func @transform_2(%arg0: i32) -> (i32, i32) {
    %c0_i32 = arith.constant 0 : i32
    %c0_i32_0 = arith.constant 0 : i32
    %c0_i32_1 = arith.constant 0 : i32
    return %c0_i32, %c0_i32_0 : i32, i32
  }
  func.func @transform_3(%arg0: i32) -> (i32, i32) {
    %c0_i32 = arith.constant 0 : i32
    %c0_i32_0 = arith.constant 0 : i32
    %c0_i32_1 = arith.constant 0 : i32
    return %c0_i32, %c0_i32_0 : i32, i32
  }
  func.func @transform_4(%arg0: i32) -> (i32, i32) {
    %c0_i32 = arith.constant 0 : i32
    %c0_i32_0 = arith.constant 0 : i32
    %c0_i32_1 = arith.constant 0 : i32
    return %c0_i32, %c0_i32_0 : i32, i32
  }
  func.func @transform_5(%arg0: i32) -> (i32, i32) {
    %c0_i32 = arith.constant 0 : i32
    %c0_i32_0 = arith.constant 0 : i32
    %c0_i32_1 = arith.constant 0 : i32
    return %c0_i32, %c0_i32_0 : i32, i32
  }
  func.func @transform_6(%arg0: i32) -> (i32, i32) {
    %c0_i32 = arith.constant 0 : i32
    %c0_i32_0 = arith.constant 0 : i32
    %c0_i32_1 = arith.constant 0 : i32
    return %c0_i32, %c0_i32_0 : i32, i32
  }
  func.func @transform_7(%arg0: i32) -> (i32, i32, i32) {
    %c0_i32 = arith.constant 0 : i32
    %c0_i32_0 = arith.constant 0 : i32
    %c0_i32_1 = arith.constant 0 : i32
    return %arg0, %c0_i32, %c0_i32_0 : i32, i32, i32
  }
}

</mosaic_0001>

<llo_original>
// kernel: tpu_custom_call.1
$region0: #{tpu_custom_call.1}
  #allocation0 [shape = 'u32[]', space=smem, size = 0x4, offset = 0x4, fixed_abs, tag = 'smem constant byte address 0x4 - core index']
  #allocation1 [shape = 'u32[144,128]{1,0:T(1,128)}', space=vmem, size = 0x12000, scoped, tag = 'internal scratch']
  #allocation2 [shape = 'f32[332,4]{1,0:T(8,128)}', space=vmem, size = 0x2a000, scoped, tag = 'scratch operand']
  #allocation3 [shape = 'f32[332,4]{1,0:T(8,128)}', space=vmem, size = 0x2a000, scoped, tag = 'scratch operand']
  #allocation4 [shape = 'f32[288,36]{1,0:T(8,128)}', space=vmem, size = 0x24000, scoped, tag = 'scratch operand']
  %s0 = inlined_call_operand.vmem [shape: f32[2,256,4], index: 0, kind: input, shape index: {}]
  %s1 = inlined_call_operand.vmem [shape: f32[36,4], index: 1, kind: input, shape index: {}]
  %s2 = inlined_call_operand.vmem [shape: f32[1,4], index: 2, kind: input, shape index: {}]
  %s3 = inlined_call_operand.vmem [shape: f32[1,4], index: 3, kind: input, shape index: {}]
  %s4 = inlined_call_operand.vmem [shape: f32[36,4], index: 4, kind: input, shape index: {}]
  %s5 = inlined_call_operand.vmem [shape: f32[1,4], index: 5, kind: input, shape index: {}]
  %s6 = inlined_call_operand.vmem [shape: f32[1,4], index: 6, kind: input, shape index: {}]
  %s7 = inlined_call_operand.vmem [shape: f32[2,288,4], index: 7, kind: output, shape index: {}]
  %s8 = sld [smem:[#allocation0]]
  $region61: #{tpu_custom_call.1} parent=0
    _
  %s10 = ssub.s32 1, %s8
  %s11 = scalar_select 0, %s10, %s8
  loop: start=0, step=1, limit=4
  $region2: #{tpu_custom_call.1} parent=0 // loop_pre_header
    _
  $region3: #{tpu_custom_call.1} parent=0 // loop_header
    %s13 = sphi 0, %s17
    %p14 = scmp.ge.s32.totalorder %s13, 4
    %s23 = sphi 0, %s25
    %s26 = sphi 0, %s23
    %s27 = sphi 0, %s26
    %s43 = sphi 0, %s27
    %s47 = sphi 0, %s47
    %s49 = sphi 0, %s47
    %s50 = sphi 0, %s49
    %s64 = sphi 0, %s50
    %s68 = sphi 0, %s68
    %s70 = sphi 0, %s68
    %s71 = sphi 0, %s70
    %s85 = sphi 0, %s71
    %s89 = sphi 0, %s89
    %s91 = sphi 0, %s89
    %s92 = sphi 0, %s91
    %s106 = sphi 0, %s92
    %s110 = sphi 0, %s110
    %s112 = sphi 0, %s110
    %s113 = sphi 0, %s112
    %s127 = sphi 0, %s113
    %s131 = sphi 0, %s131
    %s133 = sphi 0, %s131
    %s134 = sphi 0, %s133
    %s148 = sphi 0, %s134
    %s152 = sphi 0, %s152
    %s154 = sphi 0, %s152
    %s155 = sphi 0, %s154
    %s169 = sphi 0, %s155
    %s175 = sphi 0, %s177
    %s178 = sphi 0, %s175
    %s179 = sphi 0, %s178
    %s195 = sphi 0, %s179
  $region4: #{tpu_custom_call.1} parent=0 // loop_header_branch
    %16 = sbr.rel (%p14) target = $region8
  $region5: #{tpu_custom_call.1} parent=0 // loop_body
    %s18 = ssub.s32 %s13, 1
    %s19 = ssub.s32 %s13, 2
    %s20 = sadd.s32 %s13, 1
    %s21 = ssub.s32 %s13, %s20
    %p22 = scmp.eq.s32.totalorder %s21, 0
    %s24 = sadd.s32 %s23, 1
    %s25 = scalar_select %p22, %s23, %s24
    %p28 = pneg %p22
    %p29 = scmp.eq.s32.totalorder %s13, 1
    %p30 = por %p28, %p29
    %p31 = scmp.ne.s32.totalorder %s23, %s26
    %p32 = scmp.eq.s32.totalorder %s13, 0
    %p33 = por %p31, %p32
    %p34 = scmp.ne.s32.totalorder %s23, %s26
    %p35 = scmp.eq.s32.totalorder %s18, 1
    %p36 = por %p34, %p35
    %p37 = scmp.ne.s32.totalorder %s26, %s27
    %p38 = scmp.eq.s32.totalorder %s18, 0
    %p39 = por %p37, %p38
    %p40 = scmp.ne.s32.totalorder %s26, %s27
    %p41 = scmp.eq.s32.totalorder %s19, 1
    %p42 = por %p40, %p41
    %p44 = scmp.ne.s32.totalorder %s27, %s43
    %p45 = scmp.eq.s32.totalorder %s19, 0
    %p46 = por %p44, %p45
    %s48 = sadd.s32 %s47, 1
    %p51 = scmp.eq.s32.totalorder %s13, 1
    %p52 = scmp.ne.s32.totalorder %s47, %s49
    %p53 = scmp.eq.s32.totalorder %s13, 0
    %p54 = por %p52, %p53
    %p55 = scmp.ne.s32.totalorder %s47, %s49
    %p56 = scmp.eq.s32.totalorder %s18, 1
    %p57 = por %p55, %p56
    %p58 = scmp.ne.s32.totalorder %s49, %s50
    %p59 = scmp.eq.s32.totalorder %s18, 0
    %p60 = por %p58, %p59
    %p61 = scmp.ne.s32.totalorder %s49, %s50
    %p62 = scmp.eq.s32.totalorder %s19, 1
    %p63 = por %p61, %p62
    %p65 = scmp.ne.s32.totalorder %s50, %s64
    %p66 = scmp.eq.s32.totalorder %s19, 0
    %p67 = por %p65, %p66
    %s69 = sadd.s32 %s68, 1
    %p72 = scmp.eq.s32.totalorder %s13, 1
    %p73 = scmp.ne.s32.totalorder %s68, %s70
    %p74 = scmp.eq.s32.totalorder %s13, 0
    %p75 = por %p73, %p74
    %p76 = scmp.ne.s32.totalorder %s68, %s70
    %p77 = scmp.eq.s32.totalorder %s18, 1
    %p78 = por %p76, %p77
    %p79 = scmp.ne.s32.totalorder %s70, %s71
    %p80 = scmp.eq.s32.totalorder %s18, 0
    %p81 = por %p79, %p80
    %p82 = scmp.ne.s32.totalorder %s70, %s71
    %p83 = scmp.eq.s32.totalorder %s19, 1
    %p84 = por %p82, %p83
    %p86 = scmp.ne.s32.totalorder %s71, %s85
    %p87 = scmp.eq.s32.totalorder %s19, 0
    %p88 = por %p86, %p87
    %s90 = sadd.s32 %s89, 1
    %p93 = scmp.eq.s32.totalorder %s13, 1
    %p94 = scmp.ne.s32.totalorder %s89, %s91
    %p95 = scmp.eq.s32.totalorder %s13, 0
    %p96 = por %p94, %p95
    %p97 = scmp.ne.s32.totalorder %s89, %s91
    %p98 = scmp.eq.s32.totalorder %s18, 1
    %p99 = por %p97, %p98
    %p100 = scmp.ne.s32.totalorder %s91, %s92
    %p101 = scmp.eq.s32.totalorder %s18, 0
    %p102 = por %p100, %p101
    %p103 = scmp.ne.s32.totalorder %s91, %s92
    %p104 = scmp.eq.s32.totalorder %s19, 1
    %p105 = por %p103, %p104
    %p107 = scmp.ne.s32.totalorder %s92, %s106
    %p108 = scmp.eq.s32.totalorder %s19, 0
    %p109 = por %p107, %p108
    %s111 = sadd.s32 %s110, 1
    %p114 = scmp.eq.s32.totalorder %s13, 1
    %p115 = scmp.ne.s32.totalorder %s110, %s112
    %p116 = scmp.eq.s32.totalorder %s13, 0
    %p117 = por %p115, %p116
    %p118 = scmp.ne.s32.totalorder %s110, %s112
    %p119 = scmp.eq.s32.totalorder %s18, 1
    %p120 = por %p118, %p119
    %p121 = scmp.ne.s32.totalorder %s112, %s113
    %p122 = scmp.eq.s32.totalorder %s18, 0
    %p123 = por %p121, %p122
    %p124 = scmp.ne.s32.totalorder %s112, %s113
    %p125 = scmp.eq.s32.totalorder %s19, 1
    %p126 = por %p124, %p125
    %p128 = scmp.ne.s32.totalorder %s113, %s127
    %p129 = scmp.eq.s32.totalorder %s19, 0
    %p130 = por %p128, %p129
    %s132 = sadd.s32 %s131, 1
    %p135 = scmp.eq.s32.totalorder %s13, 1
    %p136 = scmp.ne.s32.totalorder %s131, %s133
    %p137 = scmp.eq.s32.totalorder %s13, 0
    %p138 = por %p136, %p137
    %p139 = scmp.ne.s32.totalorder %s131, %s133
    %p140 = scmp.eq.s32.totalorder %s18, 1
    %p141 = por %p139, %p140
    %p142 = scmp.ne.s32.totalorder %s133, %s134
    %p143 = scmp.eq.s32.totalorder %s18, 0
    %p144 = por %p142, %p143
    %p145 = scmp.ne.s32.totalorder %s133, %s134
    %p146 = scmp.eq.s32.totalorder %s19, 1
    %p147 = por %p145, %p146
    %p149 = scmp.ne.s32.totalorder %s134, %s148
    %p150 = scmp.eq.s32.totalorder %s19, 0
    %p151 = por %p149, %p150
    %s153 = sadd.s32 %s152, 1
    %p156 = scmp.eq.s32.totalorder %s13, 1
    %p157 = scmp.ne.s32.totalorder %s152, %s154
    %p158 = scmp.eq.s32.totalorder %s13, 0
    %p159 = por %p157, %p158
    %p160 = scmp.ne.s32.totalorder %s152, %s154
    %p161 = scmp.eq.s32.totalorder %s18, 1
    %p162 = por %p160, %p161
    %p163 = scmp.ne.s32.totalorder %s154, %s155
    %p164 = scmp.eq.s32.totalorder %s18, 0
    %p165 = por %p163, %p164
    %p166 = scmp.ne.s32.totalorder %s154, %s155
    %p167 = scmp.eq.s32.totalorder %s19, 1
    %p168 = por %p166, %p167
    %p170 = scmp.ne.s32.totalorder %s155, %s169
    %p171 = scmp.eq.s32.totalorder %s19, 0
    %p172 = por %p170, %p171
    %s173 = ssub.s32 %s13, %s20
    %p174 = scmp.eq.s32.totalorder %s173, 0
    %s176 = sadd.s32 %s175, 1
    %s177 = scalar_select %p174, %s175, %s176
    %p180 = pneg %p174
    %p181 = scmp.eq.s32.totalorder %s13, 1
    %p182 = por %p180, %p181
    %p183 = scmp.ne.s32.totalorder %s175, %s178
    %p184 = scmp.eq.s32.totalorder %s13, 0
    %p185 = por %p183, %p184
    %p186 = scmp.ne.s32.totalorder %s175, %s178
    %p187 = scmp.eq.s32.totalorder %s18, 1
    %p188 = por %p186, %p187
    %p189 = scmp.ne.s32.totalorder %s178, %s179
    %p190 = scmp.eq.s32.totalorder %s18, 0
    %p191 = por %p189, %p190
    %p192 = scmp.ne.s32.totalorder %s178, %s179
    %p193 = scmp.eq.s32.totalorder %s19, 1
    %p194 = por %p192, %p193
    %p196 = scmp.ne.s32.totalorder %s179, %s195
    %p197 = scmp.eq.s32.totalorder %s19, 0
    %p198 = por %p196, %p197
    %p199 = scmp.le.s32.totalorder 1, %s13
    %p200 = scmp.lt.s32.totalorder %s13, 3
    %p201 = pnand %p199, %p200
    %p202 = pneg %p201
    // Predicated region
    $region9: #{tpu_custom_call.1} parent=5 // pred_check
      _
    $region10: #{tpu_custom_call.1} parent=5 // pred_check_branch
      %204 = sbr.rel (%p201) target = $region12
    $region11: #{tpu_custom_call.1} parent=5 // pred_region
      %s205 = ssub.s32 %s13, 1
      // Predicated region
      $region13: #{tpu_custom_call.1} parent=11 // pred_check
        %p206 = pneg %p60
      $region14: #{tpu_custom_call.1} parent=11 // pred_check_branch
        %208 = sbr.rel (%p206) target = $region16
      $region15: #{tpu_custom_call.1} parent=11 // pred_region
        _
      $region16: #{tpu_custom_call.1} parent=11 // pred_fallthru
        _
      // Predicated region
      $region17: #{tpu_custom_call.1} parent=11 // pred_check
        %p209 = pneg %p81
      $region18: #{tpu_custom_call.1} parent=11 // pred_check_branch
        %211 = sbr.rel (%p209) target = $region20
      $region19: #{tpu_custom_call.1} parent=11 // pred_region
        _
      $region20: #{tpu_custom_call.1} parent=11 // pred_fallthru
        _
      // Predicated region
      $region21: #{tpu_custom_call.1} parent=11 // pred_check
        %p212 = pneg %p102
      $region22: #{tpu_custom_call.1} parent=11 // pred_check_branch
        %214 = sbr.rel (%p212) target = $region24
      $region23: #{tpu_custom_call.1} parent=11 // pred_region
        _
      $region24: #{tpu_custom_call.1} parent=11 // pred_fallthru
        _
      // Predicated region
      $region25: #{tpu_custom_call.1} parent=11 // pred_check
        %p215 = pneg %p123
      $region26: #{tpu_custom_call.1} parent=11 // pred_check_branch
        %217 = sbr.rel (%p215) target = $region28
      $region27: #{tpu_custom_call.1} parent=11 // pred_region
        _
      $region28: #{tpu_custom_call.1} parent=11 // pred_fallthru
        _
      // Predicated region
      $region29: #{tpu_custom_call.1} parent=11 // pred_check
        %p218 = pneg %p144
      $region30: #{tpu_custom_call.1} parent=11 // pred_check_branch
        %220 = sbr.rel (%p218) target = $region32
      $region31: #{tpu_custom_call.1} parent=11 // pred_region
        _
      $region32: #{tpu_custom_call.1} parent=11 // pred_fallthru
        _
      // Predicated region
      $region33: #{tpu_custom_call.1} parent=11 // pred_check
        %p221 = pneg %p165
      $region34: #{tpu_custom_call.1} parent=11 // pred_check_branch
        %223 = sbr.rel (%p221) target = $region36
      $region35: #{tpu_custom_call.1} parent=11 // pred_region
        _
      $region36: #{tpu_custom_call.1} parent=11 // pred_fallthru
        _
    $region12: #{tpu_custom_call.1} parent=5 // pred_fallthru
      _
    %p224 = scmp.lt.s32.totalorder %s13, 2
    // Predicated region
    $region37: #{tpu_custom_call.1} parent=5 // pred_check
      %p225 = pneg %p224
    $region38: #{tpu_custom_call.1} parent=5 // pred_check_branch
      %227 = sbr.rel (%p225) target = $region40
    $region39: #{tpu_custom_call.1} parent=5 // pred_region
      // Predicated region
      $region41: #{tpu_custom_call.1} parent=39 // pred_check
        %p228 = pneg %p33
      $region42: #{tpu_custom_call.1} parent=39 // pred_check_branch
        %230 = sbr.rel (%p228) target = $region44
      $region43: #{tpu_custom_call.1} parent=39 // pred_region
        %p231 = scmp.lt.s32.totalorder %s13, 1
        %s232 = scalar_select %p231, %s13, 1
        %s233 = smul.addr %s232, 32
        %s234 = smul.addr %s233, 8
        %s235 = scalar_lea.vmem %s0, %s234
      $region44: #{tpu_custom_call.1} parent=39 // pred_fallthru
        _
    $region40: #{tpu_custom_call.1} parent=5 // pred_fallthru
      _
    %p236 = scmp.le.s32.totalorder 1, %s13
    %p237 = scmp.lt.s32.totalorder %s13, 3
    %p238 = pnand %p236, %p237
    %p239 = pneg %p238
    // Predicated region
    $region45: #{tpu_custom_call.1} parent=5 // pred_check
      _
    $region46: #{tpu_custom_call.1} parent=5 // pred_check_branch
      %241 = sbr.rel (%p238) target = $region48
    $region47: #{tpu_custom_call.1} parent=5 // pred_region
      %s242 = ssub.s32 %s13, 1
      %p243 = scmp.lt.s32.totalorder %s18, 1
      %s244 = scalar_select %p243, %s18, 1
      %s245 = smul.addr %s244, 32
      %s246 = smul.addr %s245, 8
      %s247 = scalar_lea.vmem %s0, %s246
      %p248 = pneg %p39
      %p249 = pneg %p36
      %p250 = pneg %p60
      %p251 = pneg %p57
      %p252 = pneg %p81
      %p253 = pneg %p78
      %p254 = pneg %p102
      %p255 = pneg %p99
      %p256 = pneg %p123
      %p257 = pneg %p120
      %p258 = pneg %p144
      %p259 = pneg %p141
      %p260 = pneg %p165
      %p261 = pneg %p162
      %p262 = pneg %p191
      %p263 = pneg %p188
      %p264 = scmp.lt.s32.totalorder %s18, 1
      %s265 = scalar_select %p264, %s18, 1
      %s266 = smul.addr %s265, 36
      %s267 = smul.addr %s266, 8
      %s268 = scalar_lea.vmem %s7, %s267
      %p269 = scmp.lt.s32.totalorder %s18, 1
      %s270 = scalar_select %p269, %s18, 1
      %s271 = smul.addr %s270, 32
      %s272 = smul.addr %s271, 8
      %s273 = scalar_lea.vmem %s0, %s272
      %p274 = scmp.lt.s32.totalorder %s18, 1
      %s275 = scalar_select %p274, %s18, 1
      %s276 = smul.addr %s275, 36
      %s277 = smul.addr %s276, 8
      %s278 = scalar_lea.vmem %s7, %s277
      %vm279 = vcmask 31744
      %280 = vst.msk [vmem:[#allocation2] sm:$0xff] %vm279, 0.0
      %281 = vst.msk [vmem:[#allocation2 + $0x8] sm:$0xff] %vm279, 0.0
      %282 = vst.msk [vmem:[#allocation2 + $0x10] sm:$0xff] %vm279, 0.0
      %283 = vst.msk [vmem:[#allocation2 + $0x18] sm:$0xff] %vm279, 0.0
      %284 = vst.msk [vmem:[#allocation2 + $0x20] sm:$0xff] %vm279, 0.0
      %285 = vst.msk [vmem:[#allocation2 + $0x28] sm:$0xff] %vm279, 0.0
      %286 = vst.msk [vmem:[#allocation2 + $0x30] sm:$0xff] %vm279, 0.0
      %287 = vst.msk [vmem:[#allocation2 + $0x38] sm:$0xff] %vm279, 0.0
      %288 = vst.msk [vmem:[#allocation2 + $0x40] sm:$0xff] %vm279, 0.0
      %289 = vst.msk [vmem:[#allocation2 + $0x48] sm:$0xff] %vm279, 0.0
      %290 = vst.msk [vmem:[#allocation2 + $0x50] sm:$0xff] %vm279, 0.0
      %291 = vst.msk [vmem:[#allocation2 + $0x58] sm:$0xff] %vm279, 0.0
      %292 = vst.msk [vmem:[#allocation2 + $0x60] sm:$0xff] %vm279, 0.0
      %293 = vst.msk [vmem:[#allocation2 + $0x68] sm:$0xff] %vm279, 0.0
      %294 = vst.msk [vmem:[#allocation2 + $0x70] sm:$0xff] %vm279, 0.0
      %295 = vst.msk [vmem:[#allocation2 + $0x78] sm:$0xff] %vm279, 0.0
      %296 = vst.msk [vmem:[#allocation2 + $0x80] sm:$0xff] %vm279, 0.0
      %297 = vst.msk [vmem:[#allocation2 + $0x88] sm:$0xff] %vm279, 0.0
      %298 = vst.msk [vmem:[#allocation2 + $0x90] sm:$0xff] %vm279, 0.0
      %299 = vst.msk [vmem:[#allocation2 + $0x98] sm:$0xff] %vm279, 0.0
      %300 = vst.msk [vmem:[#allocation2 + $0xa0] sm:$0xff] %vm279, 0.0
      %301 = vst.msk [vmem:[#allocation2 + $0xa8] sm:$0xff] %vm279, 0.0
      %302 = vst.msk [vmem:[#allocation2 + $0xb0] sm:$0xff] %vm279, 0.0
      %303 = vst.msk [vmem:[#allocation2 + $0xb8] sm:$0xff] %vm279, 0.0
      %304 = vst.msk [vmem:[#allocation2 + $0xc0] sm:$0xff] %vm279, 0.0
      %305 = vst.msk [vmem:[#allocation2 + $0xc8] sm:$0xff] %vm279, 0.0
      %306 = vst.msk [vmem:[#allocation2 + $0xd0] sm:$0xff] %vm279, 0.0
      %307 = vst.msk [vmem:[#allocation2 + $0xd8] sm:$0xff] %vm279, 0.0
      %308 = vst.msk [vmem:[#allocation2 + $0xe0] sm:$0xff] %vm279, 0.0
      %309 = vst.msk [vmem:[#allocation2 + $0xe8] sm:$0xff] %vm279, 0.0
      %310 = vst.msk [vmem:[#allocation2 + $0xf0] sm:$0xff] %vm279, 0.0
      %311 = vst.msk [vmem:[#allocation2 + $0xf8] sm:$0xff] %vm279, 0.0
      %312 = vst.msk [vmem:[#allocation2 + $0x100] sm:$0xff] %vm279, 0.0
      %313 = vst.msk [vmem:[#allocation2 + $0x108] sm:$0xff] %vm279, 0.0
      %314 = vst.msk [vmem:[#allocation2 + $0x110] sm:$0xff] %vm279, 0.0
      %315 = vst.msk [vmem:[#allocation2 + $0x118] sm:$0xff] %vm279, 0.0
      %316 = vst.msk [vmem:[#allocation2 + $0x120] sm:$0xff] %vm279, 0.0
      %317 = vst.msk [vmem:[#allocation2 + $0x128] sm:$0xff] %vm279, 0.0
      %318 = vst.msk [vmem:[#allocation2 + $0x130] sm:$0xff] %vm279, 0.0
      %319 = vst.msk [vmem:[#allocation2 + $0x138] sm:$0xff] %vm279, 0.0
      %320 = vst.msk [vmem:[#allocation2 + $0x140] sm:$0xff] %vm279, 0.0
      %vm321 = vcmask 27648
      %322 = vst.msk [vmem:[#allocation2 + $0x148] sm:$0xf] %vm321, 0.0
      %v323 = vld [vmem:[%s273] sm:$0xff]
      %v324 = vld [vmem:[%s273 + $0x8] sm:$0xff]
      %325 = vst.msk [vmem:[#allocation2 + $0x13] sm:$0xff] %vm279, %v323
      %326 = vst.msk [vmem:[#allocation2 + $0x1b] sm:$0xff] %vm279, %v324
      %v327 = vld [vmem:[%s273 + $0x10] sm:$0xff]
      %v328 = vld [vmem:[%s273 + $0x18] sm:$0xff]
      %329 = vst.msk [vmem:[#allocation2 + $0x25] sm:$0xff] %vm279, %v327
      %330 = vst.msk [vmem:[#allocation2 + $0x2d] sm:$0xff] %vm279, %v328
      %v331 = vld [vmem:[%s273 + $0x20] sm:$0xff]
      %v332 = vld [vmem:[%s273 + $0x28] sm:$0xff]
      %333 = vst.msk [vmem:[#allocation2 + $0x37] sm:$0xff] %vm279, %v331
      %334 = vst.msk [vmem:[#allocation2 + $0x3f] sm:$0xff] %vm279, %v332
      %v335 = vld [vmem:[%s273 + $0x30] sm:$0xff]
      %v336 = vld [vmem:[%s273 + $0x38] sm:$0xff]
      %337 = vst.msk [vmem:[#allocation2 + $0x49] sm:$0xff] %vm279, %v335
      %338 = vst.msk [vmem:[#allocation2 + $0x51] sm:$0xff] %vm279, %v336
      %v339 = vld [vmem:[%s273 + $0x40] sm:$0xff]
      %v340 = vld [vmem:[%s273 + $0x48] sm:$0xff]
      %341 = vst.msk [vmem:[#allocation2 + $0x5b] sm:$0xff] %vm279, %v339
      %342 = vst.msk [vmem:[#allocation2 + $0x63] sm:$0xff] %vm279, %v340
      %v343 = vld [vmem:[%s273 + $0x50] sm:$0xff]
      %v344 = vld [vmem:[%s273 + $0x58] sm:$0xff]
      %345 = vst.msk [vmem:[#allocation2 + $0x6d] sm:$0xff] %vm279, %v343
      %346 = vst.msk [vmem:[#allocation2 + $0x75] sm:$0xff] %vm279, %v344
      %v347 = vld [vmem:[%s273 + $0x60] sm:$0xff]
      %v348 = vld [vmem:[%s273 + $0x68] sm:$0xff]
      %349 = vst.msk [vmem:[#allocation2 + $0x7f] sm:$0xff] %vm279, %v347
      %350 = vst.msk [vmem:[#allocation2 + $0x87] sm:$0xff] %vm279, %v348
      %v351 = vld [vmem:[%s273 + $0x70] sm:$0xff]
      %v352 = vld [vmem:[%s273 + $0x78] sm:$0xff]
      %353 = vst.msk [vmem:[#allocation2 + $0x91] sm:$0xff] %vm279, %v351
      %354 = vst.msk [vmem:[#allocation2 + $0x99] sm:$0xff] %vm279, %v352
      %v355 = vld [vmem:[%s273 + $0x80] sm:$0xff]
      %v356 = vld [vmem:[%s273 + $0x88] sm:$0xff]
      %357 = vst.msk [vmem:[#allocation2 + $0xa3] sm:$0xff] %vm279, %v355
      %358 = vst.msk [vmem:[#allocation2 + $0xab] sm:$0xff] %vm279, %v356
      %v359 = vld [vmem:[%s273 + $0x90] sm:$0xff]
      %v360 = vld [vmem:[%s273 + $0x98] sm:$0xff]
      %361 = vst.msk [vmem:[#allocation2 + $0xb5] sm:$0xff] %vm279, %v359
      %362 = vst.msk [vmem:[#allocation2 + $0xbd] sm:$0xff] %vm279, %v360
      %v363 = vld [vmem:[%s273 + $0xa0] sm:$0xff]
      %v364 = vld [vmem:[%s273 + $0xa8] sm:$0xff]
      %365 = vst.msk [vmem:[#allocation2 + $0xc7] sm:$0xff] %vm279, %v363
      %366 = vst.msk [vmem:[#allocation2 + $0xcf] sm:$0xff] %vm279, %v364
      %v367 = vld [vmem:[%s273 + $0xb0] sm:$0xff]
      %v368 = vld [vmem:[%s273 + $0xb8] sm:$0xff]
      %369 = vst.msk [vmem:[#allocation2 + $0xd9] sm:$0xff] %vm279, %v367
      %370 = vst.msk [vmem:[#allocation2 + $0xe1] sm:$0xff] %vm279, %v368
      %v371 = vld [vmem:[%s273 + $0xc0] sm:$0xff]
      %v372 = vld [vmem:[%s273 + $0xc8] sm:$0xff]
      %373 = vst.msk [vmem:[#allocation2 + $0xeb] sm:$0xff] %vm279, %v371
      %374 = vst.msk [vmem:[#allocation2 + $0xf3] sm:$0xff] %vm279, %v372
      %v375 = vld [vmem:[%s273 + $0xd0] sm:$0xff]
      %v376 = vld [vmem:[%s273 + $0xd8] sm:$0xff]
      %377 = vst.msk [vmem:[#allocation2 + $0xfd] sm:$0xff] %vm279, %v375
      %378 = vst.msk [vmem:[#allocation2 + $0x105] sm:$0xff] %vm279, %v376
      %v379 = vld [vmem:[%s273 + $0xe0] sm:$0xff]
      %v380 = vld [vmem:[%s273 + $0xe8] sm:$0xff]
      %381 = vst.msk [vmem:[#allocation2 + $0x10f] sm:$0xff] %vm279, %v379
      %382 = vst.msk [vmem:[#allocation2 + $0x117] sm:$0xff] %vm279, %v380
      %v383 = vld [vmem:[%s273 + $0xf0] sm:$0xff]
      %v384 = vld [vmem:[%s273 + $0xf8] sm:$0xff]
      %385 = vst.msk [vmem:[#allocation2 + $0x121] sm:$0xff] %vm279, %v383
      %386 = vst.msk [vmem:[#allocation2 + $0x129] sm:$0xff] %vm279, %v384
      %v387 = vlaneseq
      %v388 = vshrl.u32 %v387, 7
      %v389 = vadd.s32 %v388, 8
      %v390 = vadd.s32 %v388, 16
      %v391 = vadd.s32 %v388, 24
      %v392 = vadd.s32 %v388, 32
      %v393 = vadd.s32 %v388, 40
      %v394 = vadd.s32 %v388, 48
      %v395 = vadd.s32 %v388, 56
      %v396 = vadd.s32 %v388, 64
      %v397 = vadd.s32 %v388, 72
      %v398 = vadd.s32 %v388, 80
      %v399 = vadd.s32 %v388, 88
      %v400 = vadd.s32 %v388, 96
      %v401 = vadd.s32 %v388, 104
      %v402 = vadd.s32 %v388, 112
      %v403 = vadd.s32 %v388, 120
      %v404 = vadd.s32 %v388, 128
      %v405 = vadd.s32 %v388, 136
      %v406 = vadd.s32 %v388, 144
      %v407 = vadd.s32 %v388, 152
      %v408 = vadd.s32 %v388, 160
      %v409 = vadd.s32 %v388, 168
      %v410 = vadd.s32 %v388, 176
      %v411 = vadd.s32 %v388, 184
      %v412 = vadd.s32 %v388, 192
      %v413 = vadd.s32 %v388, 200
      %v414 = vadd.s32 %v388, 208
      %v415 = vadd.s32 %v388, 216
      %v416 = vadd.s32 %v388, 224
      %v417 = vadd.s32 %v388, 232
      %v418 = vadd.s32 %v388, 240
      %v419 = vadd.s32 %v388, 248
      %v420 = vadd.s32 %v388, 256
      %v421 = vadd.s32 %v388, 264
      %v422 = vadd.s32 %v388, 272
      %v423 = vadd.s32 %v388, 280
      %vm424 = vcmp.lt.s32.totalorder %v388, 0
      %v425 = vsub.s32 0, %v388
      %v426 = vsel %vm424, %v425, %v388
      %v427 = vmul.u32.u64.compose %v426, 3817748708
      %v428 = vextract.low.u32 %v427
      %v429 = vextract.high.u32 %v427
      %v430 = vshrl.u32 %v429, 4
      %v431 = vmul.u32 %v430, 18
      %v432 = vsub.s32 %v426, %v431
      %v433 = vsub.s32 0, %v432
      %v434 = vsel %vm424, %v433, %v432
      %vm435 = vcmp.lt.s32.totalorder %v389, 0
      %v436 = vsub.s32 0, %v389
      %v437 = vsel %vm435, %v436, %v389
      %v438 = vmul.u32.u64.compose %v437, 3817748708
      %v439 = vextract.low.u32 %v438
      %v440 = vextract.high.u32 %v438
      %v441 = vshrl.u32 %v440, 4
      %v442 = vmul.u32 %v441, 18
      %v443 = vsub.s32 %v437, %v442
      %v444 = vsub.s32 0, %v443
      %v445 = vsel %vm435, %v444, %v443
      %vm446 = vcmp.lt.s32.totalorder %v390, 0
      %v447 = vsub.s32 0, %v390
      %v448 = vsel %vm446, %v447, %v390
      %v449 = vmul.u32.u64.compose %v448, 3817748708
      %v450 = vextract.low.u32 %v449
      %v451 = vextract.high.u32 %v449
      %v452 = vshrl.u32 %v451, 4
      %v453 = vmul.u32 %v452, 18
      %v454 = vsub.s32 %v448, %v453
      %v455 = vsub.s32 0, %v454
      %v456 = vsel %vm446, %v455, %v454
      %vm457 = vcmp.lt.s32.totalorder %v391, 0
      %v458 = vsub.s32 0, %v391
      %v459 = vsel %vm457, %v458, %v391
      %v460 = vmul.u32.u64.compose %v459, 3817748708
      %v461 = vextract.low.u32 %v460
      %v462 = vextract.high.u32 %v460
      %v463 = vshrl.u32 %v462, 4
      %v464 = vmul.u32 %v463, 18
      %v465 = vsub.s32 %v459, %v464
      %v466 = vsub.s32 0, %v465
      %v467 = vsel %vm457, %v466, %v465
      %vm468 = vcmp.lt.s32.totalorder %v392, 0
      %v469 = vsub.s32 0, %v392
      %v470 = vsel %vm468, %v469, %v392
      %v471 = vmul.u32.u64.compose %v470, 3817748708
      %v472 = vextract.low.u32 %v471
      %v473 = vextract.high.u32 %v471
      %v474 = vshrl.u32 %v473, 4
      %v475 = vmul.u32 %v474, 18
      %v476 = vsub.s32 %v470, %v475
      %v477 = vsub.s32 0, %v476
      %v478 = vsel %vm468, %v477, %v476
      %vm479 = vcmp.lt.s32.totalorder %v393, 0
      %v480 = vsub.s32 0, %v393
      %v481 = vsel %vm479, %v480, %v393
      %v482 = vmul.u32.u64.compose %v481, 3817748708
      %v483 = vextract.low.u32 %v482
      %v484 = vextract.high.u32 %v482
      %v485 = vshrl.u32 %v484, 4
      %v486 = vmul.u32 %v485, 18
      %v487 = vsub.s32 %v481, %v486
      %v488 = vsub.s32 0, %v487
      %v489 = vsel %vm479, %v488, %v487
      %vm490 = vcmp.lt.s32.totalorder %v394, 0
      %v491 = vsub.s32 0, %v394
      %v492 = vsel %vm490, %v491, %v394
      %v493 = vmul.u32.u64.compose %v492, 3817748708
      %v494 = vextract.low.u32 %v493
      %v495 = vextract.high.u32 %v493
      %v496 = vshrl.u32 %v495, 4
      %v497 = vmul.u32 %v496, 18
      %v498 = vsub.s32 %v492, %v497
      %v499 = vsub.s32 0, %v498
      %v500 = vsel %vm490, %v499, %v498
      %vm501 = vcmp.lt.s32.totalorder %v395, 0
      %v502 = vsub.s32 0, %v395
      %v503 = vsel %vm501, %v502, %v395
      %v504 = vmul.u32.u64.compose %v503, 3817748708
      %v505 = vextract.low.u32 %v504
      %v506 = vextract.high.u32 %v504
      %v507 = vshrl.u32 %v506, 4
      %v508 = vmul.u32 %v507, 18
      %v509 = vsub.s32 %v503, %v508
      %v510 = vsub.s32 0, %v509
      %v511 = vsel %vm501, %v510, %v509
      %vm512 = vcmp.lt.s32.totalorder %v396, 0
      %v513 = vsub.s32 0, %v396
      %v514 = vsel %vm512, %v513, %v396
      %v515 = vmul.u32.u64.compose %v514, 3817748708
      %v516 = vextract.low.u32 %v515
      %v517 = vextract.high.u32 %v515
      %v518 = vshrl.u32 %v517, 4
      %v519 = vmul.u32 %v518, 18
      %v520 = vsub.s32 %v514, %v519
      %v521 = vsub.s32 0, %v520
      %v522 = vsel %vm512, %v521, %v520
      %vm523 = vcmp.lt.s32.totalorder %v397, 0
      %v524 = vsub.s32 0, %v397
      %v525 = vsel %vm523, %v524, %v397
      %v526 = vmul.u32.u64.compose %v525, 3817748708
      %v527 = vextract.low.u32 %v526
      %v528 = vextract.high.u32 %v526
      %v529 = vshrl.u32 %v528, 4
      %v530 = vmul.u32 %v529, 18
      %v531 = vsub.s32 %v525, %v530
      %v532 = vsub.s32 0, %v531
      %v533 = vsel %vm523, %v532, %v531
      %vm534 = vcmp.lt.s32.totalorder %v398, 0
      %v535 = vsub.s32 0, %v398
      %v536 = vsel %vm534, %v535, %v398
      %v537 = vmul.u32.u64.compose %v536, 3817748708
      %v538 = vextract.low.u32 %v537
      %v539 = vextract.high.u32 %v537
      %v540 = vshrl.u32 %v539, 4
      %v541 = vmul.u32 %v540, 18
      %v542 = vsub.s32 %v536, %v541
      %v543 = vsub.s32 0, %v542
      %v544 = vsel %vm534, %v543, %v542
      %vm545 = vcmp.lt.s32.totalorder %v399, 0
      %v546 = vsub.s32 0, %v399
      %v547 = vsel %vm545, %v546, %v399
      %v548 = vmul.u32.u64.compose %v547, 3817748708
      %v549 = vextract.low.u32 %v548
      %v550 = vextract.high.u32 %v548
      %v551 = vshrl.u32 %v550, 4
      %v552 = vmul.u32 %v551, 18
      %v553 = vsub.s32 %v547, %v552
      %v554 = vsub.s32 0, %v553
      %v555 = vsel %vm545, %v554, %v553
      %vm556 = vcmp.lt.s32.totalorder %v400, 0
      %v557 = vsub.s32 0, %v400
      %v558 = vsel %vm556, %v557, %v400
      %v559 = vmul.u32.u64.compose %v558, 3817748708
      %v560 = vextract.low.u32 %v559
      %v561 = vextract.high.u32 %v559
      %v562 = vshrl.u32 %v561, 4
      %v563 = vmul.u32 %v562, 18
      %v564 = vsub.s32 %v558, %v563
      %v565 = vsub.s32 0, %v564
      %v566 = vsel %vm556, %v565, %v564
      %vm567 = vcmp.lt.s32.totalorder %v401, 0
      %v568 = vsub.s32 0, %v401
      %v569 = vsel %vm567, %v568, %v401
      %v570 = vmul.u32.u64.compose %v569, 3817748708
      %v571 = vextract.low.u32 %v570
      %v572 = vextract.high.u32 %v570
      %v573 = vshrl.u32 %v572, 4
      %v574 = vmul.u32 %v573, 18
      %v575 = vsub.s32 %v569, %v574
      %v576 = vsub.s32 0, %v575
      %v577 = vsel %vm567, %v576, %v575
      %vm578 = vcmp.lt.s32.totalorder %v402, 0
      %v579 = vsub.s32 0, %v402
      %v580 = vsel %vm578, %v579, %v402
      %v581 = vmul.u32.u64.compose %v580, 3817748708
      %v582 = vextract.low.u32 %v581
      %v583 = vextract.high.u32 %v581
      %v584 = vshrl.u32 %v583, 4
      %v585 = vmul.u32 %v584, 18
      %v586 = vsub.s32 %v580, %v585
      %v587 = vsub.s32 0, %v586
      %v588 = vsel %vm578, %v587, %v586
      %vm589 = vcmp.lt.s32.totalorder %v403, 0
      %v590 = vsub.s32 0, %v403
      %v591 = vsel %vm589, %v590, %v403
      %v592 = vmul.u32.u64.compose %v591, 3817748708
      %v593 = vextract.low.u32 %v592
      %v594 = vextract.high.u32 %v592
      %v595 = vshrl.u32 %v594, 4
      %v596 = vmul.u32 %v595, 18
      %v597 = vsub.s32 %v591, %v596
      %v598 = vsub.s32 0, %v597
      %v599 = vsel %vm589, %v598, %v597
      %vm600 = vcmp.lt.s32.totalorder %v404, 0
      %v601 = vsub.s32 0, %v404
      %v602 = vsel %vm600, %v601, %v404
      %v603 = vmul.u32.u64.compose %v602, 3817748708
      %v604 = vextract.low.u32 %v603
      %v605 = vextract.high.u32 %v603
      %v606 = vshrl.u32 %v605, 4
      %v607 = vmul.u32 %v606, 18
      %v608 = vsub.s32 %v602, %v607
      %v609 = vsub.s32 0, %v608
      %v610 = vsel %vm600, %v609, %v608
      %vm611 = vcmp.lt.s32.totalorder %v405, 0
      %v612 = vsub.s32 0, %v405
      %v613 = vsel %vm611, %v612, %v405
      %v614 = vmul.u32.u64.compose %v613, 3817748708
      %v615 = vextract.low.u32 %v614
      %v616 = vextract.high.u32 %v614
      %v617 = vshrl.u32 %v616, 4
      %v618 = vmul.u32 %v617, 18
      %v619 = vsub.s32 %v613, %v618
      %v620 = vsub.s32 0, %v619
      %v621 = vsel %vm611, %v620, %v619
      %vm622 = vcmp.lt.s32.totalorder %v406, 0
      %v623 = vsub.s32 0, %v406
      %v624 = vsel %vm622, %v623, %v406
      %v625 = vmul.u32.u64.compose %v624, 3817748708
      %v626 = vextract.low.u32 %v625
      %v627 = vextract.high.u32 %v625
      %v628 = vshrl.u32 %v627, 4
      %v629 = vmul.u32 %v628, 18
      %v630 = vsub.s32 %v624, %v629
      %v631 = vsub.s32 0, %v630
      %v632 = vsel %vm622, %v631, %v630
      %vm633 = vcmp.lt.s32.totalorder %v407, 0
      %v634 = vsub.s32 0, %v407
      %v635 = vsel %vm633, %v634, %v407
      %v636 = vmul.u32.u64.compose %v635, 3817748708
      %v637 = vextract.low.u32 %v636
      %v638 = vextract.high.u32 %v636
      %v639 = vshrl.u32 %v638, 4
      %v640 = vmul.u32 %v639, 18
      %v641 = vsub.s32 %v635, %v640
      %v642 = vsub.s32 0, %v641
      %v643 = vsel %vm633, %v642, %v641
      %vm644 = vcmp.lt.s32.totalorder %v408, 0
      %v645 = vsub.s32 0, %v408
      %v646 = vsel %vm644, %v645, %v408
      %v647 = vmul.u32.u64.compose %v646, 3817748708
      %v648 = vextract.low.u32 %v647
      %v649 = vextract.high.u32 %v647
      %v650 = vshrl.u32 %v649, 4
      %v651 = vmul.u32 %v650, 18
      %v652 = vsub.s32 %v646, %v651
      %v653 = vsub.s32 0, %v652
      %v654 = vsel %vm644, %v653, %v652
      %vm655 = vcmp.lt.s32.totalorder %v409, 0
      %v656 = vsub.s32 0, %v409
      %v657 = vsel %vm655, %v656, %v409
      %v658 = vmul.u32.u64.compose %v657, 3817748708
      %v659 = vextract.low.u32 %v658
      %v660 = vextract.high.u32 %v658
      %v661 = vshrl.u32 %v660, 4
      %v662 = vmul.u32 %v661, 18
      %v663 = vsub.s32 %v657, %v662
      %v664 = vsub.s32 0, %v663
      %v665 = vsel %vm655, %v664, %v663
      %vm666 = vcmp.lt.s32.totalorder %v410, 0
      %v667 = vsub.s32 0, %v410
      %v668 = vsel %vm666, %v667, %v410
      %v669 = vmul.u32.u64.compose %v668, 3817748708
      %v670 = vextract.low.u32 %v669
      %v671 = vextract.high.u32 %v669
      %v672 = vshrl.u32 %v671, 4
      %v673 = vmul.u32 %v672, 18
      %v674 = vsub.s32 %v668, %v673
      %v675 = vsub.s32 0, %v674
      %v676 = vsel %vm666, %v675, %v674
      %vm677 = vcmp.lt.s32.totalorder %v411, 0
      %v678 = vsub.s32 0, %v411
      %v679 = vsel %vm677, %v678, %v411
      %v680 = vmul.u32.u64.compose %v679, 3817748708
      %v681 = vextract.low.u32 %v680
      %v682 = vextract.high.u32 %v680
      %v683 = vshrl.u32 %v682, 4
      %v684 = vmul.u32 %v683, 18
      %v685 = vsub.s32 %v679, %v684
      %v686 = vsub.s32 0, %v685
      %v687 = vsel %vm677, %v686, %v685
      %vm688 = vcmp.lt.s32.totalorder %v412, 0
      %v689 = vsub.s32 0, %v412
      %v690 = vsel %vm688, %v689, %v412
      %v691 = vmul.u32.u64.compose %v690, 3817748708
      %v692 = vextract.low.u32 %v691
      %v693 = vextract.high.u32 %v691
      %v694 = vshrl.u32 %v693, 4
      %v695 = vmul.u32 %v694, 18
      %v696 = vsub.s32 %v690, %v695
      %v697 = vsub.s32 0, %v696
      %v698 = vsel %vm688, %v697, %v696
      %vm699 = vcmp.lt.s32.totalorder %v413, 0
      %v700 = vsub.s32 0, %v413
      %v701 = vsel %vm699, %v700, %v413
      %v702 = vmul.u32.u64.compose %v701, 3817748708
      %v703 = vextract.low.u32 %v702
      %v704 = vextract.high.u32 %v702
      %v705 = vshrl.u32 %v704, 4
      %v706 = vmul.u32 %v705, 18
      %v707 = vsub.s32 %v701, %v706
      %v708 = vsub.s32 0, %v707
      %v709 = vsel %vm699, %v708, %v707
      %vm710 = vcmp.lt.s32.totalorder %v414, 0
      %v711 = vsub.s32 0, %v414
      %v712 = vsel %vm710, %v711, %v414
      %v713 = vmul.u32.u64.compose %v712, 3817748708
      %v714 = vextract.low.u32 %v713
      %v715 = vextract.high.u32 %v713
      %v716 = vshrl.u32 %v715, 4
      %v717 = vmul.u32 %v716, 18
      %v718 = vsub.s32 %v712, %v717
      %v719 = vsub.s32 0, %v718
      %v720 = vsel %vm710, %v719, %v718
      %vm721 = vcmp.lt.s32.totalorder %v415, 0
      %v722 = vsub.s32 0, %v415
      %v723 = vsel %vm721, %v722, %v415
      %v724 = vmul.u32.u64.compose %v723, 3817748708
      %v725 = vextract.low.u32 %v724
      %v726 = vextract.high.u32 %v724
      %v727 = vshrl.u32 %v726, 4
      %v728 = vmul.u32 %v727, 18
      %v729 = vsub.s32 %v723, %v728
      %v730 = vsub.s32 0, %v729
      %v731 = vsel %vm721, %v730, %v729
      %vm732 = vcmp.lt.s32.totalorder %v416, 0
      %v733 = vsub.s32 0, %v416
      %v734 = vsel %vm732, %v733, %v416
      %v735 = vmul.u32.u64.compose %v734, 3817748708
      %v736 = vextract.low.u32 %v735
      %v737 = vextract.high.u32 %v735
      %v738 = vshrl.u32 %v737, 4
      %v739 = vmul.u32 %v738, 18
      %v740 = vsub.s32 %v734, %v739
      %v741 = vsub.s32 0, %v740
      %v742 = vsel %vm732, %v741, %v740
      %vm743 = vcmp.lt.s32.totalorder %v417, 0
      %v744 = vsub.s32 0, %v417
      %v745 = vsel %vm743, %v744, %v417
      %v746 = vmul.u32.u64.compose %v745, 3817748708
      %v747 = vextract.low.u32 %v746
      %v748 = vextract.high.u32 %v746
      %v749 = vshrl.u32 %v748, 4
      %v750 = vmul.u32 %v749, 18
      %v751 = vsub.s32 %v745, %v750
      %v752 = vsub.s32 0, %v751
      %v753 = vsel %vm743, %v752, %v751
      %vm754 = vcmp.lt.s32.totalorder %v418, 0
      %v755 = vsub.s32 0, %v418
      %v756 = vsel %vm754, %v755, %v418
      %v757 = vmul.u32.u64.compose %v756, 3817748708
      %v758 = vextract.low.u32 %v757
      %v759 = vextract.high.u32 %v757
      %v760 = vshrl.u32 %v759, 4
      %v761 = vmul.u32 %v760, 18
      %v762 = vsub.s32 %v756, %v761
      %v763 = vsub.s32 0, %v762
      %v764 = vsel %vm754, %v763, %v762
      %vm765 = vcmp.lt.s32.totalorder %v419, 0
      %v766 = vsub.s32 0, %v419
      %v767 = vsel %vm765, %v766, %v419
      %v768 = vmul.u32.u64.compose %v767, 3817748708
      %v769 = vextract.low.u32 %v768
      %v770 = vextract.high.u32 %v768
      %v771 = vshrl.u32 %v770, 4
      %v772 = vmul.u32 %v771, 18
      %v773 = vsub.s32 %v767, %v772
      %v774 = vsub.s32 0, %v773
      %v775 = vsel %vm765, %v774, %v773
      %vm776 = vcmp.lt.s32.totalorder %v420, 0
      %v777 = vsub.s32 0, %v420
      %v778 = vsel %vm776, %v777, %v420
      %v779 = vmul.u32.u64.compose %v778, 3817748708
      %v780 = vextract.low.u32 %v779
      %v781 = vextract.high.u32 %v779
      %v782 = vshrl.u32 %v781, 4
      %v783 = vmul.u32 %v782, 18
      %v784 = vsub.s32 %v778, %v783
      %v785 = vsub.s32 0, %v784
      %v786 = vsel %vm776, %v785, %v784
      %vm787 = vcmp.lt.s32.totalorder %v421, 0
      %v788 = vsub.s32 0, %v421
      %v789 = vsel %vm787, %v788, %v421
      %v790 = vmul.u32.u64.compose %v789, 3817748708
      %v791 = vextract.low.u32 %v790
      %v792 = vextract.high.u32 %v790
      %v793 = vshrl.u32 %v792, 4
      %v794 = vmul.u32 %v793, 18
      %v795 = vsub.s32 %v789, %v794
      %v796 = vsub.s32 0, %v795
      %v797 = vsel %vm787, %v796, %v795
      %vm798 = vcmp.lt.s32.totalorder %v422, 0
      %v799 = vsub.s32 0, %v422
      %v800 = vsel %vm798, %v799, %v422
      %v801 = vmul.u32.u64.compose %v800, 3817748708
      %v802 = vextract.low.u32 %v801
      %v803 = vextract.high.u32 %v801
      %v804 = vshrl.u32 %v803, 4
      %v805 = vmul.u32 %v804, 18
      %v806 = vsub.s32 %v800, %v805
      %v807 = vsub.s32 0, %v806
      %v808 = vsel %vm798, %v807, %v806
      %vm809 = vcmp.lt.s32.totalorder %v423, 0
      %v810 = vsub.s32 0, %v423
      %v811 = vsel %vm809, %v810, %v423
      %v812 = vmul.u32.u64.compose %v811, 3817748708
      %v813 = vextract.low.u32 %v812
      %v814 = vextract.high.u32 %v812
      %v815 = vshrl.u32 %v814, 4
      %v816 = vmul.u32 %v815, 18
      %v817 = vsub.s32 %v811, %v816
      %v818 = vsub.s32 0, %v817
      %v819 = vsel %vm809, %v818, %v817
      %vm820 = vcmp.ne.s32.totalorder %v434, 0
      %vm821 = vcmp.ne.s32.totalorder %v445, 0
      %vm822 = vcmp.ne.s32.totalorder %v456, 0
      %vm823 = vcmp.ne.s32.totalorder %v467, 0
      %vm824 = vcmp.ne.s32.totalorder %v478, 0
      %vm825 = vcmp.ne.s32.totalorder %v489, 0
      %vm826 = vcmp.ne.s32.totalorder %v500, 0
      %vm827 = vcmp.ne.s32.totalorder %v511, 0
      %vm828 = vcmp.ne.s32.totalorder %v522, 0
      %vm829 = vcmp.ne.s32.totalorder %v533, 0
      %vm830 = vcmp.ne.s32.totalorder %v544, 0
      %vm831 = vcmp.ne.s32.totalorder %v555, 0
      %vm832 = vcmp.ne.s32.totalorder %v566, 0
      %vm833 = vcmp.ne.s32.totalorder %v577, 0
      %vm834 = vcmp.ne.s32.totalorder %v588, 0
      %vm835 = vcmp.ne.s32.totalorder %v599, 0
      %vm836 = vcmp.ne.s32.totalorder %v610, 0
      %vm837 = vcmp.ne.s32.totalorder %v621, 0
      %vm838 = vcmp.ne.s32.totalorder %v632, 0
      %vm839 = vcmp.ne.s32.totalorder %v643, 0
      %vm840 = vcmp.ne.s32.totalorder %v654, 0
      %vm841 = vcmp.ne.s32.totalorder %v665, 0
      %vm842 = vcmp.ne.s32.totalorder %v676, 0
      %vm843 = vcmp.ne.s32.totalorder %v687, 0
      %vm844 = vcmp.ne.s32.totalorder %v698, 0
      %vm845 = vcmp.ne.s32.totalorder %v709, 0
      %vm846 = vcmp.ne.s32.totalorder %v720, 0
      %vm847 = vcmp.ne.s32.totalorder %v731, 0
      %vm848 = vcmp.ne.s32.totalorder %v742, 0
      %vm849 = vcmp.ne.s32.totalorder %v753, 0
      %vm850 = vcmp.ne.s32.totalorder %v764, 0
      %vm851 = vcmp.ne.s32.totalorder %v775, 0
      %vm852 = vcmp.ne.s32.totalorder %v786, 0
      %vm853 = vcmp.ne.s32.totalorder %v797, 0
      %vm854 = vcmp.ne.s32.totalorder %v808, 0
      %vm855 = vcmp.ne.s32.totalorder %v819, 0
      %vm856 = vcmp.lt.s32.totalorder %v434, 0
      %vm857 = vcmp.lt.s32.totalorder %v445, 0
      %vm858 = vcmp.lt.s32.totalorder %v456, 0
      %vm859 = vcmp.lt.s32.totalorder %v467, 0
      %vm860 = vcmp.lt.s32.totalorder %v478, 0
      %vm861 = vcmp.lt.s32.totalorder %v489, 0
      %vm862 = vcmp.lt.s32.totalorder %v500, 0
      %vm863 = vcmp.lt.s32.totalorder %v511, 0
      %vm864 = vcmp.lt.s32.totalorder %v522, 0
      %vm865 = vcmp.lt.s32.totalorder %v533, 0
      %vm866 = vcmp.lt.s32.totalorder %v544, 0
      %vm867 = vcmp.lt.s32.totalorder %v555, 0
      %vm868 = vcmp.lt.s32.totalorder %v566, 0
      %vm869 = vcmp.lt.s32.totalorder %v577, 0
      %vm870 = vcmp.lt.s32.totalorder %v588, 0
      %vm871 = vcmp.lt.s32.totalorder %v599, 0
      %vm872 = vcmp.lt.s32.totalorder %v610, 0
      %vm873 = vcmp.lt.s32.totalorder %v621, 0
      %vm874 = vcmp.lt.s32.totalorder %v632, 0
      %vm875 = vcmp.lt.s32.totalorder %v643, 0
      %vm876 = vcmp.lt.s32.totalorder %v654, 0
      %vm877 = vcmp.lt.s32.totalorder %v665, 0
      %vm878 = vcmp.lt.s32.totalorder %v676, 0
      %vm879 = vcmp.lt.s32.totalorder %v687, 0
      %vm880 = vcmp.lt.s32.totalorder %v698, 0
      %vm881 = vcmp.lt.s32.totalorder %v709, 0
      %vm882 = vcmp.lt.s32.totalorder %v720, 0
      %vm883 = vcmp.lt.s32.totalorder %v731, 0
      %vm884 = vcmp.lt.s32.totalorder %v742, 0
      %vm885 = vcmp.lt.s32.totalorder %v753, 0
      %vm886 = vcmp.lt.s32.totalorder %v764, 0
      %vm887 = vcmp.lt.s32.totalorder %v775, 0
      %vm888 = vcmp.lt.s32.totalorder %v786, 0
      %vm889 = vcmp.lt.s32.totalorder %v797, 0
      %vm890 = vcmp.lt.s32.totalorder %v808, 0
      %vm891 = vcmp.lt.s32.totalorder %v819, 0
      %vm892 = vmand %vm856, %vm820
      %vm893 = vmand %vm857, %vm821
      %vm894 = vmand %vm858, %vm822
      %vm895 = vmand %vm859, %vm823
      %vm896 = vmand %vm860, %vm824
      %vm897 = vmand %vm861, %vm825
      %vm898 = vmand %vm862, %vm826
      %vm899 = vmand %vm863, %vm827
      %vm900 = vmand %vm864, %vm828
      %vm901 = vmand %vm865, %vm829
      %vm902 = vmand %vm866, %vm830
      %vm903 = vmand %vm867, %vm831
      %vm904 = vmand %vm868, %vm832
      %vm905 = vmand %vm869, %vm833
      %vm906 = vmand %vm870, %vm834
      %vm907 = vmand %vm871, %vm835
      %vm908 = vmand %vm872, %vm836
      %vm909 = vmand %vm873, %vm837
      %vm910 = vmand %vm874, %vm838
      %vm911 = vmand %vm875, %vm839
      %vm912 = vmand %vm876, %vm840
      %vm913 = vmand %vm877, %vm841
      %vm914 = vmand %vm878, %vm842
      %vm915 = vmand %vm879, %vm843
      %vm916 = vmand %vm880, %vm844
      %vm917 = vmand %vm881, %vm845
      %vm918 = vmand %vm882, %vm846
      %vm919 = vmand %vm883, %vm847
      %vm920 = vmand %vm884, %vm848
      %vm921 = vmand %vm885, %vm849
      %vm922 = vmand %vm886, %vm850
      %vm923 = vmand %vm887, %vm851
      %vm924 = vmand %vm888, %vm852
      %vm925 = vmand %vm889, %vm853
      %vm926 = vmand %vm890, %vm854
      %vm927 = vmand %vm891, %vm855
      %v928 = vadd.s32 %v434, 18
      %v929 = vadd.s32 %v445, 18
      %v930 = vadd.s32 %v456, 18
      %v931 = vadd.s32 %v467, 18
      %v932 = vadd.s32 %v478, 18
      %v933 = vadd.s32 %v489, 18
      %v934 = vadd.s32 %v500, 18
      %v935 = vadd.s32 %v511, 18
      %v936 = vadd.s32 %v522, 18
      %v937 = vadd.s32 %v533, 18
      %v938 = vadd.s32 %v544, 18
      %v939 = vadd.s32 %v555, 18
      %v940 = vadd.s32 %v566, 18
      %v941 = vadd.s32 %v577, 18
      %v942 = vadd.s32 %v588, 18
      %v943 = vadd.s32 %v599, 18
      %v944 = vadd.s32 %v610, 18
      %v945 = vadd.s32 %v621, 18
      %v946 = vadd.s32 %v632, 18
      %v947 = vadd.s32 %v643, 18
      %v948 = vadd.s32 %v654, 18
      %v949 = vadd.s32 %v665, 18
      %v950 = vadd.s32 %v676, 18
      %v951 = vadd.s32 %v687, 18
      %v952 = vadd.s32 %v698, 18
      %v953 = vadd.s32 %v709, 18
      %v954 = vadd.s32 %v720, 18
      %v955 = vadd.s32 %v731, 18
      %v956 = vadd.s32 %v742, 18
      %v957 = vadd.s32 %v753, 18
      %v958 = vadd.s32 %v764, 18
      %v959 = vadd.s32 %v775, 18
      %v960 = vadd.s32 %v786, 18
      %v961 = vadd.s32 %v797, 18
      %v962 = vadd.s32 %v808, 18
      %v963 = vadd.s32 %v819, 18
      %v964 = vsel %vm892, %v928, %v434
      %v965 = vsel %vm893, %v929, %v445
      %v966 = vsel %vm894, %v930, %v456
      %v967 = vsel %vm895, %v931, %v467
      %v968 = vsel %vm896, %v932, %v478
      %v969 = vsel %vm897, %v933, %v489
      %v970 = vsel %vm898, %v934, %v500
      %v971 = vsel %vm899, %v935, %v511
      %v972 = vsel %vm900, %v936, %v522
      %v973 = vsel %vm901, %v937, %v533
      %v974 = vsel %vm902, %v938, %v544
      %v975 = vsel %vm903, %v939, %v555
      %v976 = vsel %vm904, %v940, %v566
      %v977 = vsel %vm905, %v941, %v577
      %v978 = vsel %vm906, %v942, %v588
      %v979 = vsel %vm907, %v943, %v599
      %v980 = vsel %vm908, %v944, %v610
      %v981 = vsel %vm909, %v945, %v621
      %v982 = vsel %vm910, %v946, %v632
      %v983 = vsel %vm911, %v947, %v643
      %v984 = vsel %vm912, %v948, %v654
      %v985 = vsel %vm913, %v949, %v665
      %v986 = vsel %vm914, %v950, %v676
      %v987 = vsel %vm915, %v951, %v687
      %v988 = vsel %vm916, %v952, %v698
      %v989 = vsel %vm917, %v953, %v709
      %v990 = vsel %vm918, %v954, %v720
      %v991 = vsel %vm919, %v955, %v731
      %v992 = vsel %vm920, %v956, %v742
      %v993 = vsel %vm921, %v957, %v753
      %v994 = vsel %vm922, %v958, %v764
      %v995 = vsel %vm923, %v959, %v775
      %v996 = vsel %vm924, %v960, %v786
      %v997 = vsel %vm925, %v961, %v797
      %v998 = vsel %vm926, %v962, %v808
      %v999 = vsel %vm927, %v963, %v819
      %vm1000 = vcmp.lt.s32.totalorder %v964, 16
      %vm1001 = vcmp.lt.s32.totalorder %v965, 16
      %vm1002 = vcmp.lt.s32.totalorder %v966, 16
      %vm1003 = vcmp.lt.s32.totalorder %v967, 16
      %vm1004 = vcmp.lt.s32.totalorder %v968, 16
      %vm1005 = vcmp.lt.s32.totalorder %v969, 16
      %vm1006 = vcmp.lt.s32.totalorder %v970, 16
      %vm1007 = vcmp.lt.s32.totalorder %v971, 16
      %vm1008 = vcmp.lt.s32.totalorder %v972, 16
      %vm1009 = vcmp.lt.s32.totalorder %v973, 16
      %vm1010 = vcmp.lt.s32.totalorder %v974, 16
      %vm1011 = vcmp.lt.s32.totalorder %v975, 16
      %vm1012 = vcmp.lt.s32.totalorder %v976, 16
      %vm1013 = vcmp.lt.s32.totalorder %v977, 16
      %vm1014 = vcmp.lt.s32.totalorder %v978, 16
      %vm1015 = vcmp.lt.s32.totalorder %v979, 16
      %vm1016 = vcmp.lt.s32.totalorder %v980, 16
      %vm1017 = vcmp.lt.s32.totalorder %v981, 16
      %vm1018 = vcmp.lt.s32.totalorder %v982, 16
      %vm1019 = vcmp.lt.s32.totalorder %v983, 16
      %vm1020 = vcmp.lt.s32.totalorder %v984, 16
      %vm1021 = vcmp.lt.s32.totalorder %v985, 16
      %vm1022 = vcmp.lt.s32.totalorder %v986, 16
      %vm1023 = vcmp.lt.s32.totalorder %v987, 16
      %vm1024 = vcmp.lt.s32.totalorder %v988, 16
      %vm1025 = vcmp.lt.s32.totalorder %v989, 16
      %vm1026 = vcmp.lt.s32.totalorder %v990, 16
      %vm1027 = vcmp.lt.s32.totalorder %v991, 16
      %vm1028 = vcmp.lt.s32.totalorder %v992, 16
      %vm1029 = vcmp.lt.s32.totalorder %v993, 16
      %vm1030 = vcmp.lt.s32.totalorder %v994, 16
      %vm1031 = vcmp.lt.s32.totalorder %v995, 16
      %vm1032 = vcmp.lt.s32.totalorder %v996, 16
      %vm1033 = vcmp.lt.s32.totalorder %v997, 16
      %vm1034 = vcmp.lt.s32.totalorder %v998, 16
      %vm1035 = vcmp.lt.s32.totalorder %v999, 16
      %v1036 = vld [vmem:[#allocation2] sm:$0xff]
      %v1037 = vld [vmem:[#allocation2 + $0x8] sm:$0xff]
      %v1038 = vld [vmem:[#allocation2 + $0x10] sm:$0xff]
      %v1039 = vld [vmem:[#allocation2 + $0x18] sm:$0xff]
      %v1040 = vld [vmem:[#allocation2 + $0x20] sm:$0xff]
      %v1041 = vld [vmem:[#allocation2 + $0x28] sm:$0xff]
      %v1042 = vld [vmem:[#allocation2 + $0x30] sm:$0xff]
      %v1043 = vld [vmem:[#allocation2 + $0x38] sm:$0xff]
      %v1044 = vld [vmem:[#allocation2 + $0x40] sm:$0xff]
      %v1045 = vld [vmem:[#allocation2 + $0x48] sm:$0xff]
      %v1046 = vld [vmem:[#allocation2 + $0x50] sm:$0xff]
      %v1047 = vld [vmem:[#allocation2 + $0x58] sm:$0xff]
      %v1048 = vld [vmem:[#allocation2 + $0x60] sm:$0xff]
      %v1049 = vld [vmem:[#allocation2 + $0x68] sm:$0xff]
      %v1050 = vld [vmem:[#allocation2 + $0x70] sm:$0xff]
      %v1051 = vld [vmem:[#allocation2 + $0x78] sm:$0xff]
      %v1052 = vld [vmem:[#allocation2 + $0x80] sm:$0xff]
      %v1053 = vld [vmem:[#allocation2 + $0x88] sm:$0xff]
      %v1054 = vld [vmem:[#allocation2 + $0x90] sm:$0xff]
      %v1055 = vld [vmem:[#allocation2 + $0x98] sm:$0xff]
      %v1056 = vld [vmem:[#allocation2 + $0xa0] sm:$0xff]
      %v1057 = vld [vmem:[#allocation2 + $0xa8] sm:$0xff]
      %v1058 = vld [vmem:[#allocation2 + $0xb0] sm:$0xff]
      %v1059 = vld [vmem:[#allocation2 + $0xb8] sm:$0xff]
      %v1060 = vld [vmem:[#allocation2 + $0xc0] sm:$0xff]
      %v1061 = vld [vmem:[#allocation2 + $0xc8] sm:$0xff]
      %v1062 = vld [vmem:[#allocation2 + $0xd0] sm:$0xff]
      %v1063 = vld [vmem:[#allocation2 + $0xd8] sm:$0xff]
      %v1064 = vld [vmem:[#allocation2 + $0xe0] sm:$0xff]
      %v1065 = vld [vmem:[#allocation2 + $0xe8] sm:$0xff]
      %v1066 = vld [vmem:[#allocation2 + $0xf0] sm:$0xff]
      %v1067 = vld [vmem:[#allocation2 + $0xf8] sm:$0xff]
      %v1068 = vld [vmem:[#allocation2 + $0x100] sm:$0xff]
      %v1069 = vld [vmem:[#allocation2 + $0x108] sm:$0xff]
      %v1070 = vld [vmem:[#allocation2 + $0x110] sm:$0xff]
      %v1071 = vld [vmem:[#allocation2 + $0x118] sm:$0xff]
      %1072 = vst.msk [vmem:[#allocation4] sm:$0xff] %vm279, %v1036
      %1073 = vst.msk [vmem:[#allocation4 + $0x8] sm:$0xff] %vm279, %v1037
      %1074 = vst.msk [vmem:[#allocation4 + $0x10] sm:$0xff] %vm279, %v1038
      %1075 = vst.msk [vmem:[#allocation4 + $0x18] sm:$0xff] %vm279, %v1039
      %1076 = vst.msk [vmem:[#allocation4 + $0x20] sm:$0xff] %vm279, %v1040
      %1077 = vst.msk [vmem:[#allocation4 + $0x28] sm:$0xff] %vm279, %v1041
      %1078 = vst.msk [vmem:[#allocation4 + $0x30] sm:$0xff] %vm279, %v1042
      %1079 = vst.msk [vmem:[#allocation4 + $0x38] sm:$0xff] %vm279, %v1043
      %1080 = vst.msk [vmem:[#allocation4 + $0x40] sm:$0xff] %vm279, %v1044
      %1081 = vst.msk [vmem:[#allocation4 + $0x48] sm:$0xff] %vm279, %v1045
      %1082 = vst.msk [vmem:[#allocation4 + $0x50] sm:$0xff] %vm279, %v1046
      %1083 = vst.msk [vmem:[#allocation4 + $0x58] sm:$0xff] %vm279, %v1047
      %1084 = vst.msk [vmem:[#allocation4 + $0x60] sm:$0xff] %vm279, %v1048
      %1085 = vst.msk [vmem:[#allocation4 + $0x68] sm:$0xff] %vm279, %v1049
      %1086 = vst.msk [vmem:[#allocation4 + $0x70] sm:$0xff] %vm279, %v1050
      %1087 = vst.msk [vmem:[#allocation4 + $0x78] sm:$0xff] %vm279, %v1051
      %1088 = vst.msk [vmem:[#allocation4 + $0x80] sm:$0xff] %vm279, %v1052
      %1089 = vst.msk [vmem:[#allocation4 + $0x88] sm:$0xff] %vm279, %v1053
      %1090 = vst.msk [vmem:[#allocation4 + $0x90] sm:$0xff] %vm279, %v1054
      %1091 = vst.msk [vmem:[#allocation4 + $0x98] sm:$0xff] %vm279, %v1055
      %1092 = vst.msk [vmem:[#allocation4 + $0xa0] sm:$0xff] %vm279, %v1056
      %1093 = vst.msk [vmem:[#allocation4 + $0xa8] sm:$0xff] %vm279, %v1057
      %1094 = vst.msk [vmem:[#allocation4 + $0xb0] sm:$0xff] %vm279, %v1058
      %1095 = vst.msk [vmem:[#allocation4 + $0xb8] sm:$0xff] %vm279, %v1059
      %1096 = vst.msk [vmem:[#allocation4 + $0xc0] sm:$0xff] %vm279, %v1060
      %1097 = vst.msk [vmem:[#allocation4 + $0xc8] sm:$0xff] %vm279, %v1061
      %1098 = vst.msk [vmem:[#allocation4 + $0xd0] sm:$0xff] %vm279, %v1062
      %1099 = vst.msk [vmem:[#allocation4 + $0xd8] sm:$0xff] %vm279, %v1063
      %1100 = vst.msk [vmem:[#allocation4 + $0xe0] sm:$0xff] %vm279, %v1064
      %1101 = vst.msk [vmem:[#allocation4 + $0xe8] sm:$0xff] %vm279, %v1065
      %1102 = vst.msk [vmem:[#allocation4 + $0xf0] sm:$0xff] %vm279, %v1066
      %1103 = vst.msk [vmem:[#allocation4 + $0xf8] sm:$0xff] %vm279, %v1067
      %1104 = vst.msk [vmem:[#allocation4 + $0x100] sm:$0xff] %vm279, %v1068
      %1105 = vst.msk [vmem:[#allocation4 + $0x108] sm:$0xff] %vm279, %v1069
      %1106 = vst.msk [vmem:[#allocation4 + $0x110] sm:$0xff] %vm279, %v1070
      %1107 = vst.msk [vmem:[#allocation4 + $0x118] sm:$0xff] %vm279, %v1071
      %v1108 = vld [vmem:[#allocation2 + $0x1] sm:$0xff]
      %v1109 = vld [vmem:[#allocation2 + $0x9] sm:$0xff]
      %v1110 = vld [vmem:[#allocation2 + $0x11] sm:$0xff]
      %v1111 = vld [vmem:[#allocation2 + $0x19] sm:$0xff]
      %v1112 = vld [vmem:[#allocation2 + $0x21] sm:$0xff]
      %v1113 = vld [vmem:[#allocation2 + $0x29] sm:$0xff]
      %v1114 = vld [vmem:[#allocation2 + $0x31] sm:$0xff]
      %v1115 = vld [vmem:[#allocation2 + $0x39] sm:$0xff]
      %v1116 = vld [vmem:[#allocation2 + $0x41] sm:$0xff]
      %v1117 = vld [vmem:[#allocation2 + $0x49] sm:$0xff]
      %v1118 = vld [vmem:[#allocation2 + $0x51] sm:$0xff]
      %v1119 = vld [vmem:[#allocation2 + $0x59] sm:$0xff]
      %v1120 = vld [vmem:[#allocation2 + $0x61] sm:$0xff]
      %v1121 = vld [vmem:[#allocation2 + $0x69] sm:$0xff]
      %v1122 = vld [vmem:[#allocation2 + $0x71] sm:$0xff]
      %v1123 = vld [vmem:[#allocation2 + $0x79] sm:$0xff]
      %v1124 = vld [vmem:[#allocation2 + $0x81] sm:$0xff]
      %v1125 = vld [vmem:[#allocation2 + $0x89] sm:$0xff]
      %v1126 = vld [vmem:[#allocation2 + $0x91] sm:$0xff]
      %v1127 = vld [vmem:[#allocation2 + $0x99] sm:$0xff]
      %v1128 = vld [vmem:[#allocation2 + $0xa1] sm:$0xff]
      %v1129 = vld [vmem:[#allocation2 + $0xa9] sm:$0xff]
      %v1130 = vld [vmem:[#allocation2 + $0xb1] sm:$0xff]
      %v1131 = vld [vmem:[#allocation2 + $0xb9] sm:$0xff]
      %v1132 = vld [vmem:[#allocation2 + $0xc1] sm:$0xff]
      %v1133 = vld [vmem:[#allocation2 + $0xc9] sm:$0xff]
      %v1134 = vld [vmem:[#allocation2 + $0xd1] sm:$0xff]
      %v1135 = vld [vmem:[#allocation2 + $0xd9] sm:$0xff]
      %v1136 = vld [vmem:[#allocation2 + $0xe1] sm:$0xff]
      %v1137 = vld [vmem:[#allocation2 + $0xe9] sm:$0xff]
      %v1138 = vld [vmem:[#allocation2 + $0xf1] sm:$0xff]
      %v1139 = vld [vmem:[#allocation2 + $0xf9] sm:$0xff]
      %v1140 = vld [vmem:[#allocation2 + $0x101] sm:$0xff]
      %v1141 = vld [vmem:[#allocation2 + $0x109] sm:$0xff]
      %v1142 = vld [vmem:[#allocation2 + $0x111] sm:$0xff]
      %v1143 = vld [vmem:[#allocation2 + $0x119] sm:$0xff]
      %1180 = vrot.lane.b32.xlu0 %v1108, 4
      %v1181 = vpop.permute.xlu0 %1180
      %1182 = vrot.lane.b32.xlu0 %v1109, 4
      %v1183 = vpop.permute.xlu0 %1182
      %1184 = vrot.lane.b32.xlu0 %v1110, 4
      %v1185 = vpop.permute.xlu0 %1184
      %1186 = vrot.lane.b32.xlu0 %v1111, 4
      %v1187 = vpop.permute.xlu0 %1186
      %1188 = vrot.lane.b32.xlu0 %v1112, 4
      %v1189 = vpop.permute.xlu0 %1188
      %1190 = vrot.lane.b32.xlu0 %v1113, 4
      %v1191 = vpop.permute.xlu0 %1190
      %1192 = vrot.lane.b32.xlu0 %v1114, 4
      %v1193 = vpop.permute.xlu0 %1192
      %1194 = vrot.lane.b32.xlu0 %v1115, 4
      %v1195 = vpop.permute.xlu0 %1194
      %1196 = vrot.lane.b32.xlu0 %v1116, 4
      %v1197 = vpop.permute.xlu0 %1196
      %1198 = vrot.lane.b32.xlu0 %v1117, 4
      %v1199 = vpop.permute.xlu0 %1198
      %1200 = vrot.lane.b32.xlu0 %v1118, 4
      %v1201 = vpop.permute.xlu0 %1200
      %1202 = vrot.lane.b32.xlu0 %v1119, 4
      %v1203 = vpop.permute.xlu0 %1202
      %1204 = vrot.lane.b32.xlu0 %v1120, 4
      %v1205 = vpop.permute.xlu0 %1204
      %1206 = vrot.lane.b32.xlu0 %v1121, 4
      %v1207 = vpop.permute.xlu0 %1206
      %1208 = vrot.lane.b32.xlu0 %v1122, 4
      %v1209 = vpop.permute.xlu0 %1208
      %1210 = vrot.lane.b32.xlu0 %v1123, 4
      %v1211 = vpop.permute.xlu0 %1210
      %1212 = vrot.lane.b32.xlu0 %v1124, 4
      %v1213 = vpop.permute.xlu0 %1212
      %1214 = vrot.lane.b32.xlu0 %v1125, 4
      %v1215 = vpop.permute.xlu0 %1214
      %1216 = vrot.lane.b32.xlu0 %v1126, 4
      %v1217 = vpop.permute.xlu0 %1216
      %1218 = vrot.lane.b32.xlu0 %v1127, 4
      %v1219 = vpop.permute.xlu0 %1218
      %1220 = vrot.lane.b32.xlu0 %v1128, 4
      %v1221 = vpop.permute.xlu0 %1220
      %1222 = vrot.lane.b32.xlu0 %v1129, 4
      %v1223 = vpop.permute.xlu0 %1222
      %1224 = vrot.lane.b32.xlu0 %v1130, 4
      %v1225 = vpop.permute.xlu0 %1224
      %1226 = vrot.lane.b32.xlu0 %v1131, 4
      %v1227 = vpop.permute.xlu0 %1226
      %1228 = vrot.lane.b32.xlu0 %v1132, 4
      %v1229 = vpop.permute.xlu0 %1228
      %1230 = vrot.lane.b32.xlu0 %v1133, 4
      %v1231 = vpop.permute.xlu0 %1230
      %1232 = vrot.lane.b32.xlu0 %v1134, 4
      %v1233 = vpop.permute.xlu0 %1232
      %1234 = vrot.lane.b32.xlu0 %v1135, 4
      %v1235 = vpop.permute.xlu0 %1234
      %1236 = vrot.lane.b32.xlu0 %v1136, 4
      %v1237 = vpop.permute.xlu0 %1236
      %1238 = vrot.lane.b32.xlu0 %v1137, 4
      %v1239 = vpop.permute.xlu0 %1238
      %1240 = vrot.lane.b32.xlu0 %v1138, 4
      %v1241 = vpop.permute.xlu0 %1240
      %1242 = vrot.lane.b32.xlu0 %v1139, 4
      %v1243 = vpop.permute.xlu0 %1242
      %1244 = vrot.lane.b32.xlu0 %v1140, 4
      %v1245 = vpop.permute.xlu0 %1244
      %1246 = vrot.lane.b32.xlu0 %v1141, 4
      %v1247 = vpop.permute.xlu0 %1246
      %1248 = vrot.lane.b32.xlu0 %v1142, 4
      %v1249 = vpop.permute.xlu0 %1248
      %1250 = vrot.lane.b32.xlu0 %v1143, 4
      %v1251 = vpop.permute.xlu0 %1250
      %vm1288 = vcmask 64544
      %1289 = vst.msk [vmem:[#allocation4] sm:$0xff] %vm1288, %v1181
      %1290 = vst.msk [vmem:[#allocation4 + $0x8] sm:$0xff] %vm1288, %v1183
      %1291 = vst.msk [vmem:[#allocation4 + $0x10] sm:$0xff] %vm1288, %v1185
      %1292 = vst.msk [vmem:[#allocation4 + $0x18] sm:$0xff] %vm1288, %v1187
      %1293 = vst.msk [vmem:[#allocation4 + $0x20] sm:$0xff] %vm1288, %v1189
      %1294 = vst.msk [vmem:[#allocation4 + $0x28] sm:$0xff] %vm1288, %v1191
      %1295 = vst.msk [vmem:[#allocation4 + $0x30] sm:$0xff] %vm1288, %v1193
      %1296 = vst.msk [vmem:[#allocation4 + $0x38] sm:$0xff] %vm1288, %v1195
      %1297 = vst.msk [vmem:[#allocation4 + $0x40] sm:$0xff] %vm1288, %v1197
      %1298 = vst.msk [vmem:[#allocation4 + $0x48] sm:$0xff] %vm1288, %v1199
      %1299 = vst.msk [vmem:[#allocation4 + $0x50] sm:$0xff] %vm1288, %v1201
      %1300 = vst.msk [vmem:[#allocation4 + $0x58] sm:$0xff] %vm1288, %v1203
      %1301 = vst.msk [vmem:[#allocation4 + $0x60] sm:$0xff] %vm1288, %v1205
      %1302 = vst.msk [vmem:[#allocation4 + $0x68] sm:$0xff] %vm1288, %v1207
      %1303 = vst.msk [vmem:[#allocation4 + $0x70] sm:$0xff] %vm1288, %v1209
      %1304 = vst.msk [vmem:[#allocation4 + $0x78] sm:$0xff] %vm1288, %v1211
      %1305 = vst.msk [vmem:[#allocation4 + $0x80] sm:$0xff] %vm1288, %v1213
      %1306 = vst.msk [vmem:[#allocation4 + $0x88] sm:$0xff] %vm1288, %v1215
      %1307 = vst.msk [vmem:[#allocation4 + $0x90] sm:$0xff] %vm1288, %v1217
      %1308 = vst.msk [vmem:[#allocation4 + $0x98] sm:$0xff] %vm1288, %v1219
      %1309 = vst.msk [vmem:[#allocation4 + $0xa0] sm:$0xff] %vm1288, %v1221
      %1310 = vst.msk [vmem:[#allocation4 + $0xa8] sm:$0xff] %vm1288, %v1223
      %1311 = vst.msk [vmem:[#allocation4 + $0xb0] sm:$0xff] %vm1288, %v1225
      %1312 = vst.msk [vmem:[#allocation4 + $0xb8] sm:$0xff] %vm1288, %v1227
      %1313 = vst.msk [vmem:[#allocation4 + $0xc0] sm:$0xff] %vm1288, %v1229
      %1314 = vst.msk [vmem:[#allocation4 + $0xc8] sm:$0xff] %vm1288, %v1231
      %1315 = vst.msk [vmem:[#allocation4 + $0xd0] sm:$0xff] %vm1288, %v1233
      %1316 = vst.msk [vmem:[#allocation4 + $0xd8] sm:$0xff] %vm1288, %v1235
      %1317 = vst.msk [vmem:[#allocation4 + $0xe0] sm:$0xff] %vm1288, %v1237
      %1318 = vst.msk [vmem:[#allocation4 + $0xe8] sm:$0xff] %vm1288, %v1239
      %1319 = vst.msk [vmem:[#allocation4 + $0xf0] sm:$0xff] %vm1288, %v1241
      %1320 = vst.msk [vmem:[#allocation4 + $0xf8] sm:$0xff] %vm1288, %v1243
      %1321 = vst.msk [vmem:[#allocation4 + $0x100] sm:$0xff] %vm1288, %v1245
      %1322 = vst.msk [vmem:[#allocation4 + $0x108] sm:$0xff] %vm1288, %v1247
      %1323 = vst.msk [vmem:[#allocation4 + $0x110] sm:$0xff] %vm1288, %v1249
      %1324 = vst.msk [vmem:[#allocation4 + $0x118] sm:$0xff] %vm1288, %v1251
      %v1325 = vld [vmem:[#allocation2 + $0x2] sm:$0xff]
      %v1326 = vld [vmem:[#allocation2 + $0xa] sm:$0xff]
      %v1327 = vld [vmem:[#allocation2 + $0x12] sm:$0xff]
      %v1328 = vld [vmem:[#allocation2 + $0x1a] sm:$0xff]
      %v1329 = vld [vmem:[#allocation2 + $0x22] sm:$0xff]
      %v1330 = vld [vmem:[#allocation2 + $0x2a] sm:$0xff]
      %v1331 = vld [vmem:[#allocation2 + $0x32] sm:$0xff]
      %v1332 = vld [vmem:[#allocation2 + $0x3a] sm:$0xff]
      %v1333 = vld [vmem:[#allocation2 + $0x42] sm:$0xff]
      %v1334 = vld [vmem:[#allocation2 + $0x4a] sm:$0xff]
      %v1335 = vld [vmem:[#allocation2 + $0x52] sm:$0xff]
      %v1336 = vld [vmem:[#allocation2 + $0x5a] sm:$0xff]
      %v1337 = vld [vmem:[#allocation2 + $0x62] sm:$0xff]
      %v1338 = vld [vmem:[#allocation2 + $0x6a] sm:$0xff]
      %v1339 = vld [vmem:[#allocation2 + $0x72] sm:$0xff]
      %v1340 = vld [vmem:[#allocation2 + $0x7a] sm:$0xff]
      %v1341 = vld [vmem:[#allocation2 + $0x82] sm:$0xff]
      %v1342 = vld [vmem:[#allocation2 + $0x8a] sm:$0xff]
      %v1343 = vld [vmem:[#allocation2 + $0x92] sm:$0xff]
      %v1344 = vld [vmem:[#allocation2 + $0x9a] sm:$0xff]
      %v1345 = vld [vmem:[#allocation2 + $0xa2] sm:$0xff]
      %v1346 = vld [vmem:[#allocation2 + $0xaa] sm:$0xff]
      %v1347 = vld [vmem:[#allocation2 + $0xb2] sm:$0xff]
      %v1348 = vld [vmem:[#allocation2 + $0xba] sm:$0xff]
      %v1349 = vld [vmem:[#allocation2 + $0xc2] sm:$0xff]
      %v1350 = vld [vmem:[#allocation2 + $0xca] sm:$0xff]
      %v1351 = vld [vmem:[#allocation2 + $0xd2] sm:$0xff]
      %v1352 = vld [vmem:[#allocation2 + $0xda] sm:$0xff]
      %v1353 = vld [vmem:[#allocation2 + $0xe2] sm:$0xff]
      %v1354 = vld [vmem:[#allocation2 + $0xea] sm:$0xff]
      %v1355 = vld [vmem:[#allocation2 + $0xf2] sm:$0xff]
      %v1356 = vld [vmem:[#allocation2 + $0xfa] sm:$0xff]
      %v1357 = vld [vmem:[#allocation2 + $0x102] sm:$0xff]
      %v1358 = vld [vmem:[#allocation2 + $0x10a] sm:$0xff]
      %v1359 = vld [vmem:[#allocation2 + $0x112] sm:$0xff]
      %v1360 = vld [vmem:[#allocation2 + $0x11a] sm:$0xff]
      %1397 = vrot.lane.b32.xlu0 %v1325, 8
      %v1398 = vpop.permute.xlu0 %1397
      %1399 = vrot.lane.b32.xlu0 %v1326, 8
      %v1400 = vpop.permute.xlu0 %1399
      %1401 = vrot.lane.b32.xlu0 %v1327, 8
      %v1402 = vpop.permute.xlu0 %1401
      %1403 = vrot.lane.b32.xlu0 %v1328, 8
      %v1404 = vpop.permute.xlu0 %1403
      %1405 = vrot.lane.b32.xlu0 %v1329, 8
      %v1406 = vpop.permute.xlu0 %1405
      %1407 = vrot.lane.b32.xlu0 %v1330, 8
      %v1408 = vpop.permute.xlu0 %1407
      %1409 = vrot.lane.b32.xlu0 %v1331, 8
      %v1410 = vpop.permute.xlu0 %1409
      %1411 = vrot.lane.b32.xlu0 %v1332, 8
      %v1412 = vpop.permute.xlu0 %1411
      %1413 = vrot.lane.b32.xlu0 %v1333, 8
      %v1414 = vpop.permute.xlu0 %1413
      %1415 = vrot.lane.b32.xlu0 %v1334, 8
      %v1416 = vpop.permute.xlu0 %1415
      %1417 = vrot.lane.b32.xlu0 %v1335, 8
      %v1418 = vpop.permute.xlu0 %1417
      %1419 = vrot.lane.b32.xlu0 %v1336, 8
      %v1420 = vpop.permute.xlu0 %1419
      %1421 = vrot.lane.b32.xlu0 %v1337, 8
      %v1422 = vpop.permute.xlu0 %1421
      %1423 = vrot.lane.b32.xlu0 %v1338, 8
      %v1424 = vpop.permute.xlu0 %1423
      %1425 = vrot.lane.b32.xlu0 %v1339, 8
      %v1426 = vpop.permute.xlu0 %1425
      %1427 = vrot.lane.b32.xlu0 %v1340, 8
      %v1428 = vpop.permute.xlu0 %1427
      %1429 = vrot.lane.b32.xlu0 %v1341, 8
      %v1430 = vpop.permute.xlu0 %1429
      %1431 = vrot.lane.b32.xlu0 %v1342, 8
      %v1432 = vpop.permute.xlu0 %1431
      %1433 = vrot.lane.b32.xlu0 %v1343, 8
      %v1434 = vpop.permute.xlu0 %1433
      %1435 = vrot.lane.b32.xlu0 %v1344, 8
      %v1436 = vpop.permute.xlu0 %1435
      %1437 = vrot.lane.b32.xlu0 %v1345, 8
      %v1438 = vpop.permute.xlu0 %1437
      %1439 = vrot.lane.b32.xlu0 %v1346, 8
      %v1440 = vpop.permute.xlu0 %1439
      %1441 = vrot.lane.b32.xlu0 %v1347, 8
      %v1442 = vpop.permute.xlu0 %1441
      %1443 = vrot.lane.b32.xlu0 %v1348, 8
      %v1444 = vpop.permute.xlu0 %1443
      %1445 = vrot.lane.b32.xlu0 %v1349, 8
      %v1446 = vpop.permute.xlu0 %1445
      %1447 = vrot.lane.b32.xlu0 %v1350, 8
      %v1448 = vpop.permute.xlu0 %1447
      %1449 = vrot.lane.b32.xlu0 %v1351, 8
      %v1450 = vpop.permute.xlu0 %1449
      %1451 = vrot.lane.b32.xlu0 %v1352, 8
      %v1452 = vpop.permute.xlu0 %1451
      %1453 = vrot.lane.b32.xlu0 %v1353, 8
      %v1454 = vpop.permute.xlu0 %1453
      %1455 = vrot.lane.b32.xlu0 %v1354, 8
      %v1456 = vpop.permute.xlu0 %1455
      %1457 = vrot.lane.b32.xlu0 %v1355, 8
      %v1458 = vpop.permute.xlu0 %1457
      %1459 = vrot.lane.b32.xlu0 %v1356, 8
      %v1460 = vpop.permute.xlu0 %1459
      %1461 = vrot.lane.b32.xlu0 %v1357, 8
      %v1462 = vpop.permute.xlu0 %1461
      %1463 = vrot.lane.b32.xlu0 %v1358, 8
      %v1464 = vpop.permute.xlu0 %1463
      %1465 = vrot.lane.b32.xlu0 %v1359, 8
      %v1466 = vpop.permute.xlu0 %1465
      %1467 = vrot.lane.b32.xlu0 %v1360, 8
      %v1468 = vpop.permute.xlu0 %1467
      %vm1505 = vcmask 97344
      %1506 = vst.msk [vmem:[#allocation4] sm:$0xff] %vm1505, %v1398
      %1507 = vst.msk [vmem:[#allocation4 + $0x8] sm:$0xff] %vm1505, %v1400
      %1508 = vst.msk [vmem:[#allocation4 + $0x10] sm:$0xff] %vm1505, %v1402
      %1509 = vst.msk [vmem:[#allocation4 + $0x18] sm:$0xff] %vm1505, %v1404
      %1510 = vst.msk [vmem:[#allocation4 + $0x20] sm:$0xff] %vm1505, %v1406
      %1511 = vst.msk [vmem:[#allocation4 + $0x28] sm:$0xff] %vm1505, %v1408
      %1512 = vst.msk [vmem:[#allocation4 + $0x30] sm:$0xff] %vm1505, %v1410
      %1513 = vst.msk [vmem:[#allocation4 + $0x38] sm:$0xff] %vm1505, %v1412
      %1514 = vst.msk [vmem:[#allocation4 + $0x40] sm:$0xff] %vm1505, %v1414
      %1515 = vst.msk [vmem:[#allocation4 + $0x48] sm:$0xff] %vm1505, %v1416
      %1516 = vst.msk [vmem:[#allocation4 + $0x50] sm:$0xff] %vm1505, %v1418
      %1517 = vst.msk [vmem:[#allocation4 + $0x58] sm:$0xff] %vm1505, %v1420
      %1518 = vst.msk [vmem:[#allocation4 + $0x60] sm:$0xff] %vm1505, %v1422
      %1519 = vst.msk [vmem:[#allocation4 + $0x68] sm:$0xff] %vm1505, %v1424
      %1520 = vst.msk [vmem:[#allocation4 + $0x70] sm:$0xff] %vm1505, %v1426
      %1521 = vst.msk [vmem:[#allocation4 + $0x78] sm:$0xff] %vm1505, %v1428
      %1522 = vst.msk [vmem:[#allocation4 + $0x80] sm:$0xff] %vm1505, %v1430
      %1523 = vst.msk [vmem:[#allocation4 + $0x88] sm:$0xff] %vm1505, %v1432
      %1524 = vst.msk [vmem:[#allocation4 + $0x90] sm:$0xff] %vm1505, %v1434
      %1525 = vst.msk [vmem:[#allocation4 + $0x98] sm:$0xff] %vm1505, %v1436
      %1526 = vst.msk [vmem:[#allocation4 + $0xa0] sm:$0xff] %vm1505, %v1438
      %1527 = vst.msk [vmem:[#allocation4 + $0xa8] sm:$0xff] %vm1505, %v1440
      %1528 = vst.msk [vmem:[#allocation4 + $0xb0] sm:$0xff] %vm1505, %v1442
      %1529 = vst.msk [vmem:[#allocation4 + $0xb8] sm:$0xff] %vm1505, %v1444
      %1530 = vst.msk [vmem:[#allocation4 + $0xc0] sm:$0xff] %vm1505, %v1446
      %1531 = vst.msk [vmem:[#allocation4 + $0xc8] sm:$0xff] %vm1505, %v1448
      %1532 = vst.msk [vmem:[#allocation4 + $0xd0] sm:$0xff] %vm1505, %v1450
      %1533 = vst.msk [vmem:[#allocation4 + $0xd8] sm:$0xff] %vm1505, %v1452
      %1534 = vst.msk [vmem:[#allocation4 + $0xe0] sm:$0xff] %vm1505, %v1454
      %1535 = vst.msk [vmem:[#allocation4 + $0xe8] sm:$0xff] %vm1505, %v1456
      %1536 = vst.msk [vmem:[#allocation4 + $0xf0] sm:$0xff] %vm1505, %v1458
      %1537 = vst.msk [vmem:[#allocation4 + $0xf8] sm:$0xff] %vm1505, %v1460
      %1538 = vst.msk [vmem:[#allocation4 + $0x100] sm:$0xff] %vm1505, %v1462
      %1539 = vst.msk [vmem:[#allocation4 + $0x108] sm:$0xff] %vm1505, %v1464
      %1540 = vst.msk [vmem:[#allocation4 + $0x110] sm:$0xff] %vm1505, %v1466
      %1541 = vst.msk [vmem:[#allocation4 + $0x118] sm:$0xff] %vm1505, %v1468
      %v1542 = vld [vmem:[#allocation2 + $0x12] sm:$0xff]
      %v1543 = vld [vmem:[#allocation2 + $0x1a] sm:$0xff]
      %v1544 = vld [vmem:[#allocation2 + $0x22] sm:$0xff]
      %v1545 = vld [vmem:[#allocation2 + $0x2a] sm:$0xff]
      %v1546 = vld [vmem:[#allocation2 + $0x32] sm:$0xff]
      %v1547 = vld [vmem:[#allocation2 + $0x3a] sm:$0xff]
      %v1548 = vld [vmem:[#allocation2 + $0x42] sm:$0xff]
      %v1549 = vld [vmem:[#allocation2 + $0x4a] sm:$0xff]
      %v1550 = vld [vmem:[#allocation2 + $0x52] sm:$0xff]
      %v1551 = vld [vmem:[#allocation2 + $0x5a] sm:$0xff]
      %v1552 = vld [vmem:[#allocation2 + $0x62] sm:$0xff]
      %v1553 = vld [vmem:[#allocation2 + $0x6a] sm:$0xff]
      %v1554 = vld [vmem:[#allocation2 + $0x72] sm:$0xff]
      %v1555 = vld [vmem:[#allocation2 + $0x7a] sm:$0xff]
      %v1556 = vld [vmem:[#allocation2 + $0x82] sm:$0xff]
      %v1557 = vld [vmem:[#allocation2 + $0x8a] sm:$0xff]
      %v1558 = vld [vmem:[#allocation2 + $0x92] sm:$0xff]
      %v1559 = vld [vmem:[#allocation2 + $0x9a] sm:$0xff]
      %v1560 = vld [vmem:[#allocation2 + $0xa2] sm:$0xff]
      %v1561 = vld [vmem:[#allocation2 + $0xaa] sm:$0xff]
      %v1562 = vld [vmem:[#allocation2 + $0xb2] sm:$0xff]
      %v1563 = vld [vmem:[#allocation2 + $0xba] sm:$0xff]
      %v1564 = vld [vmem:[#allocation2 + $0xc2] sm:$0xff]
      %v1565 = vld [vmem:[#allocation2 + $0xca] sm:$0xff]
      %v1566 = vld [vmem:[#allocation2 + $0xd2] sm:$0xff]
      %v1567 = vld [vmem:[#allocation2 + $0xda] sm:$0xff]
      %v1568 = vld [vmem:[#allocation2 + $0xe2] sm:$0xff]
      %v1569 = vld [vmem:[#allocation2 + $0xea] sm:$0xff]
      %v1570 = vld [vmem:[#allocation2 + $0xf2] sm:$0xff]
      %v1571 = vld [vmem:[#allocation2 + $0xfa] sm:$0xff]
      %v1572 = vld [vmem:[#allocation2 + $0x102] sm:$0xff]
      %v1573 = vld [vmem:[#allocation2 + $0x10a] sm:$0xff]
      %v1574 = vld [vmem:[#allocation2 + $0x112] sm:$0xff]
      %v1575 = vld [vmem:[#allocation2 + $0x11a] sm:$0xff]
      %v1576 = vld [vmem:[#allocation2 + $0x122] sm:$0xff]
      %v1577 = vld [vmem:[#allocation2 + $0x12a] sm:$0xff]
      %1614 = vrot.lane.b32.xlu0 %v1542, 12
      %v1615 = vpop.permute.xlu0 %1614
      %1616 = vrot.lane.b32.xlu0 %v1543, 12
      %v1617 = vpop.permute.xlu0 %1616
      %1618 = vrot.lane.b32.xlu0 %v1544, 12
      %v1619 = vpop.permute.xlu0 %1618
      %1620 = vrot.lane.b32.xlu0 %v1545, 12
      %v1621 = vpop.permute.xlu0 %1620
      %1622 = vrot.lane.b32.xlu0 %v1546, 12
      %v1623 = vpop.permute.xlu0 %1622
      %1624 = vrot.lane.b32.xlu0 %v1547, 12
      %v1625 = vpop.permute.xlu0 %1624
      %1626 = vrot.lane.b32.xlu0 %v1548, 12
      %v1627 = vpop.permute.xlu0 %1626
      %1628 = vrot.lane.b32.xlu0 %v1549, 12
      %v1629 = vpop.permute.xlu0 %1628
      %1630 = vrot.lane.b32.xlu0 %v1550, 12
      %v1631 = vpop.permute.xlu0 %1630
      %1632 = vrot.lane.b32.xlu0 %v1551, 12
      %v1633 = vpop.permute.xlu0 %1632
      %1634 = vrot.lane.b32.xlu0 %v1552, 12
      %v1635 = vpop.permute.xlu0 %1634
      %1636 = vrot.lane.b32.xlu0 %v1553, 12
      %v1637 = vpop.permute.xlu0 %1636
      %1638 = vrot.lane.b32.xlu0 %v1554, 12
      %v1639 = vpop.permute.xlu0 %1638
      %1640 = vrot.lane.b32.xlu0 %v1555, 12
      %v1641 = vpop.permute.xlu0 %1640
      %1642 = vrot.lane.b32.xlu0 %v1556, 12
      %v1643 = vpop.permute.xlu0 %1642
      %1644 = vrot.lane.b32.xlu0 %v1557, 12
      %v1645 = vpop.permute.xlu0 %1644
      %1646 = vrot.lane.b32.xlu0 %v1558, 12
      %v1647 = vpop.permute.xlu0 %1646
      %1648 = vrot.lane.b32.xlu0 %v1559, 12
      %v1649 = vpop.permute.xlu0 %1648
      %1650 = vrot.lane.b32.xlu0 %v1560, 12
      %v1651 = vpop.permute.xlu0 %1650
      %1652 = vrot.lane.b32.xlu0 %v1561, 12
      %v1653 = vpop.permute.xlu0 %1652
      %1654 = vrot.lane.b32.xlu0 %v1562, 12
      %v1655 = vpop.permute.xlu0 %1654
      %1656 = vrot.lane.b32.xlu0 %v1563, 12
      %v1657 = vpop.permute.xlu0 %1656
      %1658 = vrot.lane.b32.xlu0 %v1564, 12
      %v1659 = vpop.permute.xlu0 %1658
      %1660 = vrot.lane.b32.xlu0 %v1565, 12
      %v1661 = vpop.permute.xlu0 %1660
      %1662 = vrot.lane.b32.xlu0 %v1566, 12
      %v1663 = vpop.permute.xlu0 %1662
      %1664 = vrot.lane.b32.xlu0 %v1567, 12
      %v1665 = vpop.permute.xlu0 %1664
      %1666 = vrot.lane.b32.xlu0 %v1568, 12
      %v1667 = vpop.permute.xlu0 %1666
      %1668 = vrot.lane.b32.xlu0 %v1569, 12
      %v1669 = vpop.permute.xlu0 %1668
      %1670 = vrot.lane.b32.xlu0 %v1570, 12
      %v1671 = vpop.permute.xlu0 %1670
      %1672 = vrot.lane.b32.xlu0 %v1571, 12
      %v1673 = vpop.permute.xlu0 %1672
      %1674 = vrot.lane.b32.xlu0 %v1572, 12
      %v1675 = vpop.permute.xlu0 %1674
      %1676 = vrot.lane.b32.xlu0 %v1573, 12
      %v1677 = vpop.permute.xlu0 %1676
      %1678 = vrot.lane.b32.xlu0 %v1574, 12
      %v1679 = vpop.permute.xlu0 %1678
      %1680 = vrot.lane.b32.xlu0 %v1575, 12
      %v1681 = vpop.permute.xlu0 %1680
      %1682 = vrot.lane.b32.xlu0 %v1576, 12
      %v1683 = vpop.permute.xlu0 %1682
      %1684 = vrot.lane.b32.xlu0 %v1577, 12
      %v1685 = vpop.permute.xlu0 %1684
      %vm1722 = vcmask 130144
      %1723 = vst.msk [vmem:[#allocation4] sm:$0xff] %vm1722, %v1615
      %1724 = vst.msk [vmem:[#allocation4 + $0x8] sm:$0xff] %vm1722, %v1617
      %1725 = vst.msk [vmem:[#allocation4 + $0x10] sm:$0xff] %vm1722, %v1619
      %1726 = vst.msk [vmem:[#allocation4 + $0x18] sm:$0xff] %vm1722, %v1621
      %1727 = vst.msk [vmem:[#allocation4 + $0x20] sm:$0xff] %vm1722, %v1623
      %1728 = vst.msk [vmem:[#allocation4 + $0x28] sm:$0xff] %vm1722, %v1625
      %1729 = vst.msk [vmem:[#allocation4 + $0x30] sm:$0xff] %vm1722, %v1627
      %1730 = vst.msk [vmem:[#allocation4 + $0x38] sm:$0xff] %vm1722, %v1629
      %1731 = vst.msk [vmem:[#allocation4 + $0x40] sm:$0xff] %vm1722, %v1631
      %1732 = vst.msk [vmem:[#allocation4 + $0x48] sm:$0xff] %vm1722, %v1633
      %1733 = vst.msk [vmem:[#allocation4 + $0x50] sm:$0xff] %vm1722, %v1635
      %1734 = vst.msk [vmem:[#allocation4 + $0x58] sm:$0xff] %vm1722, %v1637
      %1735 = vst.msk [vmem:[#allocation4 + $0x60] sm:$0xff] %vm1722, %v1639
      %1736 = vst.msk [vmem:[#allocation4 + $0x68] sm:$0xff] %vm1722, %v1641
      %1737 = vst.msk [vmem:[#allocation4 + $0x70] sm:$0xff] %vm1722, %v1643
      %1738 = vst.msk [vmem:[#allocation4 + $0x78] sm:$0xff] %vm1722, %v1645
      %1739 = vst.msk [vmem:[#allocation4 + $0x80] sm:$0xff] %vm1722, %v1647
      %1740 = vst.msk [vmem:[#allocation4 + $0x88] sm:$0xff] %vm1722, %v1649
      %1741 = vst.msk [vmem:[#allocation4 + $0x90] sm:$0xff] %vm1722, %v1651
      %1742 = vst.msk [vmem:[#allocation4 + $0x98] sm:$0xff] %vm1722, %v1653
      %1743 = vst.msk [vmem:[#allocation4 + $0xa0] sm:$0xff] %vm1722, %v1655
      %1744 = vst.msk [vmem:[#allocation4 + $0xa8] sm:$0xff] %vm1722, %v1657
      %1745 = vst.msk [vmem:[#allocation4 + $0xb0] sm:$0xff] %vm1722, %v1659
      %1746 = vst.msk [vmem:[#allocation4 + $0xb8] sm:$0xff] %vm1722, %v1661
      %1747 = vst.msk [vmem:[#allocation4 + $0xc0] sm:$0xff] %vm1722, %v1663
      %1748 = vst.msk [vmem:[#allocation4 + $0xc8] sm:$0xff] %vm1722, %v1665
      %1749 = vst.msk [vmem:[#allocation4 + $0xd0] sm:$0xff] %vm1722, %v1667
      %1750 = vst.msk [vmem:[#allocation4 + $0xd8] sm:$0xff] %vm1722, %v1669
      %1751 = vst.msk [vmem:[#allocation4 + $0xe0] sm:$0xff] %vm1722, %v1671
      %1752 = vst.msk [vmem:[#allocation4 + $0xe8] sm:$0xff] %vm1722, %v1673
      %1753 = vst.msk [vmem:[#allocation4 + $0xf0] sm:$0xff] %vm1722, %v1675
      %1754 = vst.msk [vmem:[#allocation4 + $0xf8] sm:$0xff] %vm1722, %v1677
      %1755 = vst.msk [vmem:[#allocation4 + $0x100] sm:$0xff] %vm1722, %v1679
      %1756 = vst.msk [vmem:[#allocation4 + $0x108] sm:$0xff] %vm1722, %v1681
      %1757 = vst.msk [vmem:[#allocation4 + $0x110] sm:$0xff] %vm1722, %v1683
      %1758 = vst.msk [vmem:[#allocation4 + $0x118] sm:$0xff] %vm1722, %v1685
      %v1759 = vld [vmem:[#allocation2 + $0x13] sm:$0xff]
      %v1760 = vld [vmem:[#allocation2 + $0x1b] sm:$0xff]
      %v1761 = vld [vmem:[#allocation2 + $0x23] sm:$0xff]
      %v1762 = vld [vmem:[#allocation2 + $0x2b] sm:$0xff]
      %v1763 = vld [vmem:[#allocation2 + $0x33] sm:$0xff]
      %v1764 = vld [vmem:[#allocation2 + $0x3b] sm:$0xff]
      %v1765 = vld [vmem:[#allocation2 + $0x43] sm:$0xff]
      %v1766 = vld [vmem:[#allocation2 + $0x4b] sm:$0xff]
      %v1767 = vld [vmem:[#allocation2 + $0x53] sm:$0xff]
      %v1768 = vld [vmem:[#allocation2 + $0x5b] sm:$0xff]
      %v1769 = vld [vmem:[#allocation2 + $0x63] sm:$0xff]
      %v1770 = vld [vmem:[#allocation2 + $0x6b] sm:$0xff]
      %v1771 = vld [vmem:[#allocation2 + $0x73] sm:$0xff]
      %v1772 = vld [vmem:[#allocation2 + $0x7b] sm:$0xff]
      %v1773 = vld [vmem:[#allocation2 + $0x83] sm:$0xff]
      %v1774 = vld [vmem:[#allocation2 + $0x8b] sm:$0xff]
      %v1775 = vld [vmem:[#allocation2 + $0x93] sm:$0xff]
      %v1776 = vld [vmem:[#allocation2 + $0x9b] sm:$0xff]
      %v1777 = vld [vmem:[#allocation2 + $0xa3] sm:$0xff]
      %v1778 = vld [vmem:[#allocation2 + $0xab] sm:$0xff]
      %v1779 = vld [vmem:[#allocation2 + $0xb3] sm:$0xff]
      %v1780 = vld [vmem:[#allocation2 + $0xbb] sm:$0xff]
      %v1781 = vld [vmem:[#allocation2 + $0xc3] sm:$0xff]
      %v1782 = vld [vmem:[#allocation2 + $0xcb] sm:$0xff]
      %v1783 = vld [vmem:[#allocation2 + $0xd3] sm:$0xff]
      %v1784 = vld [vmem:[#allocation2 + $0xdb] sm:$0xff]
      %v1785 = vld [vmem:[#allocation2 + $0xe3] sm:$0xff]
      %v1786 = vld [vmem:[#allocation2 + $0xeb] sm:$0xff]
      %v1787 = vld [vmem:[#allocation2 + $0xf3] sm:$0xff]
      %v1788 = vld [vmem:[#allocation2 + $0xfb] sm:$0xff]
      %v1789 = vld [vmem:[#allocation2 + $0x103] sm:$0xff]
      %v1790 = vld [vmem:[#allocation2 + $0x10b] sm:$0xff]
      %v1791 = vld [vmem:[#allocation2 + $0x113] sm:$0xff]
      %v1792 = vld [vmem:[#allocation2 + $0x11b] sm:$0xff]
      %v1793 = vld [vmem:[#allocation2 + $0x123] sm:$0xff]
      %v1794 = vld [vmem:[#allocation2 + $0x12b] sm:$0xff]
      %1831 = vrot.lane.b32.xlu0 %v1759, 16
      %v1832 = vpop.permute.xlu0 %1831
      %1833 = vrot.lane.b32.xlu0 %v1760, 16
      %v1834 = vpop.permute.xlu0 %1833
      %1835 = vrot.lane.b32.xlu0 %v1761, 16
      %v1836 = vpop.permute.xlu0 %1835
      %1837 = vrot.lane.b32.xlu0 %v1762, 16
      %v1838 = vpop.permute.xlu0 %1837
      %1839 = vrot.lane.b32.xlu0 %v1763, 16
      %v1840 = vpop.permute.xlu0 %1839
      %1841 = vrot.lane.b32.xlu0 %v1764, 16
      %v1842 = vpop.permute.xlu0 %1841
      %1843 = vrot.lane.b32.xlu0 %v1765, 16
      %v1844 = vpop.permute.xlu0 %1843
      %1845 = vrot.lane.b32.xlu0 %v1766, 16
      %v1846 = vpop.permute.xlu0 %1845
      %1847 = vrot.lane.b32.xlu0 %v1767, 16
      %v1848 = vpop.permute.xlu0 %1847
      %1849 = vrot.lane.b32.xlu0 %v1768, 16
      %v1850 = vpop.permute.xlu0 %1849
      %1851 = vrot.lane.b32.xlu0 %v1769, 16
      %v1852 = vpop.permute.xlu0 %1851
      %1853 = vrot.lane.b32.xlu0 %v1770, 16
      %v1854 = vpop.permute.xlu0 %1853
      %1855 = vrot.lane.b32.xlu0 %v1771, 16
      %v1856 = vpop.permute.xlu0 %1855
      %1857 = vrot.lane.b32.xlu0 %v1772, 16
      %v1858 = vpop.permute.xlu0 %1857
      %1859 = vrot.lane.b32.xlu0 %v1773, 16
      %v1860 = vpop.permute.xlu0 %1859
      %1861 = vrot.lane.b32.xlu0 %v1774, 16
      %v1862 = vpop.permute.xlu0 %1861
      %1863 = vrot.lane.b32.xlu0 %v1775, 16
      %v1864 = vpop.permute.xlu0 %1863
      %1865 = vrot.lane.b32.xlu0 %v1776, 16
      %v1866 = vpop.permute.xlu0 %1865
      %1867 = vrot.lane.b32.xlu0 %v1777, 16
      %v1868 = vpop.permute.xlu0 %1867
      %1869 = vrot.lane.b32.xlu0 %v1778, 16
      %v1870 = vpop.permute.xlu0 %1869
      %1871 = vrot.lane.b32.xlu0 %v1779, 16
      %v1872 = vpop.permute.xlu0 %1871
      %1873 = vrot.lane.b32.xlu0 %v1780, 16
      %v1874 = vpop.permute.xlu0 %1873
      %1875 = vrot.lane.b32.xlu0 %v1781, 16
      %v1876 = vpop.permute.xlu0 %1875
      %1877 = vrot.lane.b32.xlu0 %v1782, 16
      %v1878 = vpop.permute.xlu0 %1877
      %1879 = vrot.lane.b32.xlu0 %v1783, 16
      %v1880 = vpop.permute.xlu0 %1879
      %1881 = vrot.lane.b32.xlu0 %v1784, 16
      %v1882 = vpop.permute.xlu0 %1881
      %1883 = vrot.lane.b32.xlu0 %v1785, 16
      %v1884 = vpop.permute.xlu0 %1883
      %1885 = vrot.lane.b32.xlu0 %v1786, 16
      %v1886 = vpop.permute.xlu0 %1885
      %1887 = vrot.lane.b32.xlu0 %v1787, 16
      %v1888 = vpop.permute.xlu0 %1887
      %1889 = vrot.lane.b32.xlu0 %v1788, 16
      %v1890 = vpop.permute.xlu0 %1889
      %1891 = vrot.lane.b32.xlu0 %v1789, 16
      %v1892 = vpop.permute.xlu0 %1891
      %1893 = vrot.lane.b32.xlu0 %v1790, 16
      %v1894 = vpop.permute.xlu0 %1893
      %1895 = vrot.lane.b32.xlu0 %v1791, 16
      %v1896 = vpop.permute.xlu0 %1895
      %1897 = vrot.lane.b32.xlu0 %v1792, 16
      %v1898 = vpop.permute.xlu0 %1897
      %1899 = vrot.lane.b32.xlu0 %v1793, 16
      %v1900 = vpop.permute.xlu0 %1899
      %1901 = vrot.lane.b32.xlu0 %v1794, 16
      %v1902 = vpop.permute.xlu0 %1901
      %vm1939 = vcmask 162944
      %1940 = vst.msk [vmem:[#allocation4] sm:$0xff] %vm1939, %v1832
      %1941 = vst.msk [vmem:[#allocation4 + $0x8] sm:$0xff] %vm1939, %v1834
      %1942 = vst.msk [vmem:[#allocation4 + $0x10] sm:$0xff] %vm1939, %v1836
      %1943 = vst.msk [vmem:[#allocation4 + $0x18] sm:$0xff] %vm1939, %v1838
      %1944 = vst.msk [vmem:[#allocation4 + $0x20] sm:$0xff] %vm1939, %v1840
      %1945 = vst.msk [vmem:[#allocation4 + $0x28] sm:$0xff] %vm1939, %v1842
      %1946 = vst.msk [vmem:[#allocation4 + $0x30] sm:$0xff] %vm1939, %v1844
      %1947 = vst.msk [vmem:[#allocation4 + $0x38] sm:$0xff] %vm1939, %v1846
      %1948 = vst.msk [vmem:[#allocation4 + $0x40] sm:$0xff] %vm1939, %v1848
      %1949 = vst.msk [vmem:[#allocation4 + $0x48] sm:$0xff] %vm1939, %v1850
      %1950 = vst.msk [vmem:[#allocation4 + $0x50] sm:$0xff] %vm1939, %v1852
      %1951 = vst.msk [vmem:[#allocation4 + $0x58] sm:$0xff] %vm1939, %v1854
      %1952 = vst.msk [vmem:[#allocation4 + $0x60] sm:$0xff] %vm1939, %v1856
      %1953 = vst.msk [vmem:[#allocation4 + $0x68] sm:$0xff] %vm1939, %v1858
      %1954 = vst.msk [vmem:[#allocation4 + $0x70] sm:$0xff] %vm1939, %v1860
      %1955 = vst.msk [vmem:[#allocation4 + $0x78] sm:$0xff] %vm1939, %v1862
      %1956 = vst.msk [vmem:[#allocation4 + $0x80] sm:$0xff] %vm1939, %v1864
      %1957 = vst.msk [vmem:[#allocation4 + $0x88] sm:$0xff] %vm1939, %v1866
      %1958 = vst.msk [vmem:[#allocation4 + $0x90] sm:$0xff] %vm1939, %v1868
      %1959 = vst.msk [vmem:[#allocation4 + $0x98] sm:$0xff] %vm1939, %v1870
      %1960 = vst.msk [vmem:[#allocation4 + $0xa0] sm:$0xff] %vm1939, %v1872
      %1961 = vst.msk [vmem:[#allocation4 + $0xa8] sm:$0xff] %vm1939, %v1874
      %1962 = vst.msk [vmem:[#allocation4 + $0xb0] sm:$0xff] %vm1939, %v1876
      %1963 = vst.msk [vmem:[#allocation4 + $0xb8] sm:$0xff] %vm1939, %v1878
      %1964 = vst.msk [vmem:[#allocation4 + $0xc0] sm:$0xff] %vm1939, %v1880
      %1965 = vst.msk [vmem:[#allocation4 + $0xc8] sm:$0xff] %vm1939, %v1882
      %1966 = vst.msk [vmem:[#allocation4 + $0xd0] sm:$0xff] %vm1939, %v1884
      %1967 = vst.msk [vmem:[#allocation4 + $0xd8] sm:$0xff] %vm1939, %v1886
      %1968 = vst.msk [vmem:[#allocation4 + $0xe0] sm:$0xff] %vm1939, %v1888
      %1969 = vst.msk [vmem:[#allocation4 + $0xe8] sm:$0xff] %vm1939, %v1890
      %1970 = vst.msk [vmem:[#allocation4 + $0xf0] sm:$0xff] %vm1939, %v1892
      %1971 = vst.msk [vmem:[#allocation4 + $0xf8] sm:$0xff] %vm1939, %v1894
      %1972 = vst.msk [vmem:[#allocation4 + $0x100] sm:$0xff] %vm1939, %v1896
      %1973 = vst.msk [vmem:[#allocation4 + $0x108] sm:$0xff] %vm1939, %v1898
      %1974 = vst.msk [vmem:[#allocation4 + $0x110] sm:$0xff] %vm1939, %v1900
      %1975 = vst.msk [vmem:[#allocation4 + $0x118] sm:$0xff] %vm1939, %v1902
      %v1976 = vld [vmem:[#allocation2 + $0x14] sm:$0xff]
      %v1977 = vld [vmem:[#allocation2 + $0x1c] sm:$0xff]
      %v1978 = vld [vmem:[#allocation2 + $0x24] sm:$0xff]
      %v1979 = vld [vmem:[#allocation2 + $0x2c] sm:$0xff]
      %v1980 = vld [vmem:[#allocation2 + $0x34] sm:$0xff]
      %v1981 = vld [vmem:[#allocation2 + $0x3c] sm:$0xff]
      %v1982 = vld [vmem:[#allocation2 + $0x44] sm:$0xff]
      %v1983 = vld [vmem:[#allocation2 + $0x4c] sm:$0xff]
      %v1984 = vld [vmem:[#allocation2 + $0x54] sm:$0xff]
      %v1985 = vld [vmem:[#allocation2 + $0x5c] sm:$0xff]
      %v1986 = vld [vmem:[#allocation2 + $0x64] sm:$0xff]
      %v1987 = vld [vmem:[#allocation2 + $0x6c] sm:$0xff]
      %v1988 = vld [vmem:[#allocation2 + $0x74] sm:$0xff]
      %v1989 = vld [vmem:[#allocation2 + $0x7c] sm:$0xff]
      %v1990 = vld [vmem:[#allocation2 + $0x84] sm:$0xff]
      %v1991 = vld [vmem:[#allocation2 + $0x8c] sm:$0xff]
      %v1992 = vld [vmem:[#allocation2 + $0x94] sm:$0xff]
      %v1993 = vld [vmem:[#allocation2 + $0x9c] sm:$0xff]
      %v1994 = vld [vmem:[#allocation2 + $0xa4] sm:$0xff]
      %v1995 = vld [vmem:[#allocation2 + $0xac] sm:$0xff]
      %v1996 = vld [vmem:[#allocation2 + $0xb4] sm:$0xff]
      %v1997 = vld [vmem:[#allocation2 + $0xbc] sm:$0xff]
      %v1998 = vld [vmem:[#allocation2 + $0xc4] sm:$0xff]
      %v1999 = vld [vmem:[#allocation2 + $0xcc] sm:$0xff]
      %v2000 = vld [vmem:[#allocation2 + $0xd4] sm:$0xff]
      %v2001 = vld [vmem:[#allocation2 + $0xdc] sm:$0xff]
      %v2002 = vld [vmem:[#allocation2 + $0xe4] sm:$0xff]
      %v2003 = vld [vmem:[#allocation2 + $0xec] sm:$0xff]
      %v2004 = vld [vmem:[#allocation2 + $0xf4] sm:$0xff]
      %v2005 = vld [vmem:[#allocation2 + $0xfc] sm:$0xff]
      %v2006 = vld [vmem:[#allocation2 + $0x104] sm:$0xff]
      %v2007 = vld [vmem:[#allocation2 + $0x10c] sm:$0xff]
      %v2008 = vld [vmem:[#allocation2 + $0x114] sm:$0xff]
      %v2009 = vld [vmem:[#allocation2 + $0x11c] sm:$0xff]
      %v2010 = vld [vmem:[#allocation2 + $0x124] sm:$0xff]
      %v2011 = vld [vmem:[#allocation2 + $0x12c] sm:$0xff]
      %2048 = vrot.lane.b32.xlu0 %v1976, 20
      %v2049 = vpop.permute.xlu0 %2048
      %2050 = vrot.lane.b32.xlu0 %v1977, 20
      %v2051 = vpop.permute.xlu0 %2050
      %2052 = vrot.lane.b32.xlu0 %v1978, 20
      %v2053 = vpop.permute.xlu0 %2052
      %2054 = vrot.lane.b32.xlu0 %v1979, 20
      %v2055 = vpop.permute.xlu0 %2054
      %2056 = vrot.lane.b32.xlu0 %v1980, 20
      %v2057 = vpop.permute.xlu0 %2056
      %2058 = vrot.lane.b32.xlu0 %v1981, 20
      %v2059 = vpop.permute.xlu0 %2058
      %2060 = vrot.lane.b32.xlu0 %v1982, 20
      %v2061 = vpop.permute.xlu0 %2060
      %2062 = vrot.lane.b32.xlu0 %v1983, 20
      %v2063 = vpop.permute.xlu0 %2062
      %2064 = vrot.lane.b32.xlu0 %v1984, 20
      %v2065 = vpop.permute.xlu0 %2064
      %2066 = vrot.lane.b32.xlu0 %v1985, 20
      %v2067 = vpop.permute.xlu0 %2066
      %2068 = vrot.lane.b32.xlu0 %v1986, 20
      %v2069 = vpop.permute.xlu0 %2068
      %2070 = vrot.lane.b32.xlu0 %v1987, 20
      %v2071 = vpop.permute.xlu0 %2070
      %2072 = vrot.lane.b32.xlu0 %v1988, 20
      %v2073 = vpop.permute.xlu0 %2072
      %2074 = vrot.lane.b32.xlu0 %v1989, 20
      %v2075 = vpop.permute.xlu0 %2074
      %2076 = vrot.lane.b32.xlu0 %v1990, 20
      %v2077 = vpop.permute.xlu0 %2076
      %2078 = vrot.lane.b32.xlu0 %v1991, 20
      %v2079 = vpop.permute.xlu0 %2078
      %2080 = vrot.lane.b32.xlu0 %v1992, 20
      %v2081 = vpop.permute.xlu0 %2080
      %2082 = vrot.lane.b32.xlu0 %v1993, 20
      %v2083 = vpop.permute.xlu0 %2082
      %2084 = vrot.lane.b32.xlu0 %v1994, 20
      %v2085 = vpop.permute.xlu0 %2084
      %2086 = vrot.lane.b32.xlu0 %v1995, 20
      %v2087 = vpop.permute.xlu0 %2086
      %2088 = vrot.lane.b32.xlu0 %v1996, 20
      %v2089 = vpop.permute.xlu0 %2088
      %2090 = vrot.lane.b32.xlu0 %v1997, 20
      %v2091 = vpop.permute.xlu0 %2090
      %2092 = vrot.lane.b32.xlu0 %v1998, 20
      %v2093 = vpop.permute.xlu0 %2092
      %2094 = vrot.lane.b32.xlu0 %v1999, 20
      %v2095 = vpop.permute.xlu0 %2094
      %2096 = vrot.lane.b32.xlu0 %v2000, 20
      %v2097 = vpop.permute.xlu0 %2096
      %2098 = vrot.lane.b32.xlu0 %v2001, 20
      %v2099 = vpop.permute.xlu0 %2098
      %2100 = vrot.lane.b32.xlu0 %v2002, 20
      %v2101 = vpop.permute.xlu0 %2100
      %2102 = vrot.lane.b32.xlu0 %v2003, 20
      %v2103 = vpop.permute.xlu0 %2102
      %2104 = vrot.lane.b32.xlu0 %v2004, 20
      %v2105 = vpop.permute.xlu0 %2104
      %2106 = vrot.lane.b32.xlu0 %v2005, 20
      %v2107 = vpop.permute.xlu0 %2106
      %2108 = vrot.lane.b32.xlu0 %v2006, 20
      %v2109 = vpop.permute.xlu0 %2108
      %2110 = vrot.lane.b32.xlu0 %v2007, 20
      %v2111 = vpop.permute.xlu0 %2110
      %2112 = vrot.lane.b32.xlu0 %v2008, 20
      %v2113 = vpop.permute.xlu0 %2112
      %2114 = vrot.lane.b32.xlu0 %v2009, 20
      %v2115 = vpop.permute.xlu0 %2114
      %2116 = vrot.lane.b32.xlu0 %v2010, 20
      %v2117 = vpop.permute.xlu0 %2116
      %2118 = vrot.lane.b32.xlu0 %v2011, 20
      %v2119 = vpop.permute.xlu0 %2118
      %vm2156 = vcmask 195744
      %2157 = vst.msk [vmem:[#allocation4] sm:$0xff] %vm2156, %v2049
      %2158 = vst.msk [vmem:[#allocation4 + $0x8] sm:$0xff] %vm2156, %v2051
      %2159 = vst.msk [vmem:[#allocation4 + $0x10] sm:$0xff] %vm2156, %v2053
      %2160 = vst.msk [vmem:[#allocation4 + $0x18] sm:$0xff] %vm2156, %v2055
      %2161 = vst.msk [vmem:[#allocation4 + $0x20] sm:$0xff] %vm2156, %v2057
      %2162 = vst.msk [vmem:[#allocation4 + $0x28] sm:$0xff] %vm2156, %v2059
      %2163 = vst.msk [vmem:[#allocation4 + $0x30] sm:$0xff] %vm2156, %v2061
      %2164 = vst.msk [vmem:[#allocation4 + $0x38] sm:$0xff] %vm2156, %v2063
      %2165 = vst.msk [vmem:[#allocation4 + $0x40] sm:$0xff] %vm2156, %v2065
      %2166 = vst.msk [vmem:[#allocation4 + $0x48] sm:$0xff] %vm2156, %v2067
      %2167 = vst.msk [vmem:[#allocation4 + $0x50] sm:$0xff] %vm2156, %v2069
      %2168 = vst.msk [vmem:[#allocation4 + $0x58] sm:$0xff] %vm2156, %v2071
      %2169 = vst.msk [vmem:[#allocation4 + $0x60] sm:$0xff] %vm2156, %v2073
      %2170 = vst.msk [vmem:[#allocation4 + $0x68] sm:$0xff] %vm2156, %v2075
      %2171 = vst.msk [vmem:[#allocation4 + $0x70] sm:$0xff] %vm2156, %v2077
      %2172 = vst.msk [vmem:[#allocation4 + $0x78] sm:$0xff] %vm2156, %v2079
      %2173 = vst.msk [vmem:[#allocation4 + $0x80] sm:$0xff] %vm2156, %v2081
      %2174 = vst.msk [vmem:[#allocation4 + $0x88] sm:$0xff] %vm2156, %v2083
      %2175 = vst.msk [vmem:[#allocation4 + $0x90] sm:$0xff] %vm2156, %v2085
      %2176 = vst.msk [vmem:[#allocation4 + $0x98] sm:$0xff] %vm2156, %v2087
      %2177 = vst.msk [vmem:[#allocation4 + $0xa0] sm:$0xff] %vm2156, %v2089
      %2178 = vst.msk [vmem:[#allocation4 + $0xa8] sm:$0xff] %vm2156, %v2091
      %2179 = vst.msk [vmem:[#allocation4 + $0xb0] sm:$0xff] %vm2156, %v2093
      %2180 = vst.msk [vmem:[#allocation4 + $0xb8] sm:$0xff] %vm2156, %v2095
      %2181 = vst.msk [vmem:[#allocation4 + $0xc0] sm:$0xff] %vm2156, %v2097
      %2182 = vst.msk [vmem:[#allocation4 + $0xc8] sm:$0xff] %vm2156, %v2099
      %2183 = vst.msk [vmem:[#allocation4 + $0xd0] sm:$0xff] %vm2156, %v2101
      %2184 = vst.msk [vmem:[#allocation4 + $0xd8] sm:$0xff] %vm2156, %v2103
      %2185 = vst.msk [vmem:[#allocation4 + $0xe0] sm:$0xff] %vm2156, %v2105
      %2186 = vst.msk [vmem:[#allocation4 + $0xe8] sm:$0xff] %vm2156, %v2107
      %2187 = vst.msk [vmem:[#allocation4 + $0xf0] sm:$0xff] %vm2156, %v2109
      %2188 = vst.msk [vmem:[#allocation4 + $0xf8] sm:$0xff] %vm2156, %v2111
      %2189 = vst.msk [vmem:[#allocation4 + $0x100] sm:$0xff] %vm2156, %v2113
      %2190 = vst.msk [vmem:[#allocation4 + $0x108] sm:$0xff] %vm2156, %v2115
      %2191 = vst.msk [vmem:[#allocation4 + $0x110] sm:$0xff] %vm2156, %v2117
      %2192 = vst.msk [vmem:[#allocation4 + $0x118] sm:$0xff] %vm2156, %v2119
      %v2193 = vld [vmem:[#allocation2 + $0x24] sm:$0xff]
      %v2194 = vld [vmem:[#allocation2 + $0x2c] sm:$0xff]
      %v2195 = vld [vmem:[#allocation2 + $0x34] sm:$0xff]
      %v2196 = vld [vmem:[#allocation2 + $0x3c] sm:$0xff]
      %v2197 = vld [vmem:[#allocation2 + $0x44] sm:$0xff]
      %v2198 = vld [vmem:[#allocation2 + $0x4c] sm:$0xff]
      %v2199 = vld [vmem:[#allocation2 + $0x54] sm:$0xff]
      %v2200 = vld [vmem:[#allocation2 + $0x5c] sm:$0xff]
      %v2201 = vld [vmem:[#allocation2 + $0x64] sm:$0xff]
      %v2202 = vld [vmem:[#allocation2 + $0x6c] sm:$0xff]
      %v2203 = vld [vmem:[#allocation2 + $0x74] sm:$0xff]
      %v2204 = vld [vmem:[#allocation2 + $0x7c] sm:$0xff]
      %v2205 = vld [vmem:[#allocation2 + $0x84] sm:$0xff]
      %v2206 = vld [vmem:[#allocation2 + $0x8c] sm:$0xff]
      %v2207 = vld [vmem:[#allocation2 + $0x94] sm:$0xff]
      %v2208 = vld [vmem:[#allocation2 + $0x9c] sm:$0xff]
      %v2209 = vld [vmem:[#allocation2 + $0xa4] sm:$0xff]
      %v2210 = vld [vmem:[#allocation2 + $0xac] sm:$0xff]
      %v2211 = vld [vmem:[#allocation2 + $0xb4] sm:$0xff]
      %v2212 = vld [vmem:[#allocation2 + $0xbc] sm:$0xff]
      %v2213 = vld [vmem:[#allocation2 + $0xc4] sm:$0xff]
      %v2214 = vld [vmem:[#allocation2 + $0xcc] sm:$0xff]
      %v2215 = vld [vmem:[#allocation2 + $0xd4] sm:$0xff]
      %v2216 = vld [vmem:[#allocation2 + $0xdc] sm:$0xff]
      %v2217 = vld [vmem:[#allocation2 + $0xe4] sm:$0xff]
      %v2218 = vld [vmem:[#allocation2 + $0xec] sm:$0xff]
      %v2219 = vld [vmem:[#allocation2 + $0xf4] sm:$0xff]
      %v2220 = vld [vmem:[#allocation2 + $0xfc] sm:$0xff]
      %v2221 = vld [vmem:[#allocation2 + $0x104] sm:$0xff]
      %v2222 = vld [vmem:[#allocation2 + $0x10c] sm:$0xff]
      %v2223 = vld [vmem:[#allocation2 + $0x114] sm:$0xff]
      %v2224 = vld [vmem:[#allocation2 + $0x11c] sm:$0xff]
      %v2225 = vld [vmem:[#allocation2 + $0x124] sm:$0xff]
      %v2226 = vld [vmem:[#allocation2 + $0x12c] sm:$0xff]
      %v2227 = vld [vmem:[#allocation2 + $0x134] sm:$0xff]
      %v2228 = vld [vmem:[#allocation2 + $0x13c] sm:$0xff]
      %2265 = vrot.lane.b32.xlu0 %v2193, 24
      %v2266 = vpop.permute.xlu0 %2265
      %2267 = vrot.lane.b32.xlu0 %v2194, 24
      %v2268 = vpop.permute.xlu0 %2267
      %2269 = vrot.lane.b32.xlu0 %v2195, 24
      %v2270 = vpop.permute.xlu0 %2269
      %2271 = vrot.lane.b32.xlu0 %v2196, 24
      %v2272 = vpop.permute.xlu0 %2271
      %2273 = vrot.lane.b32.xlu0 %v2197, 24
      %v2274 = vpop.permute.xlu0 %2273
      %2275 = vrot.lane.b32.xlu0 %v2198, 24
      %v2276 = vpop.permute.xlu0 %2275
      %2277 = vrot.lane.b32.xlu0 %v2199, 24
      %v2278 = vpop.permute.xlu0 %2277
      %2279 = vrot.lane.b32.xlu0 %v2200, 24
      %v2280 = vpop.permute.xlu0 %2279
      %2281 = vrot.lane.b32.xlu0 %v2201, 24
      %v2282 = vpop.permute.xlu0 %2281
      %2283 = vrot.lane.b32.xlu0 %v2202, 24
      %v2284 = vpop.permute.xlu0 %2283
      %2285 = vrot.lane.b32.xlu0 %v2203, 24
      %v2286 = vpop.permute.xlu0 %2285
      %2287 = vrot.lane.b32.xlu0 %v2204, 24
      %v2288 = vpop.permute.xlu0 %2287
      %2289 = vrot.lane.b32.xlu0 %v2205, 24
      %v2290 = vpop.permute.xlu0 %2289
      %2291 = vrot.lane.b32.xlu0 %v2206, 24
      %v2292 = vpop.permute.xlu0 %2291
      %2293 = vrot.lane.b32.xlu0 %v2207, 24
      %v2294 = vpop.permute.xlu0 %2293
      %2295 = vrot.lane.b32.xlu0 %v2208, 24
      %v2296 = vpop.permute.xlu0 %2295
      %2297 = vrot.lane.b32.xlu0 %v2209, 24
      %v2298 = vpop.permute.xlu0 %2297
      %2299 = vrot.lane.b32.xlu0 %v2210, 24
      %v2300 = vpop.permute.xlu0 %2299
      %2301 = vrot.lane.b32.xlu0 %v2211, 24
      %v2302 = vpop.permute.xlu0 %2301
      %2303 = vrot.lane.b32.xlu0 %v2212, 24
      %v2304 = vpop.permute.xlu0 %2303
      %2305 = vrot.lane.b32.xlu0 %v2213, 24
      %v2306 = vpop.permute.xlu0 %2305
      %2307 = vrot.lane.b32.xlu0 %v2214, 24
      %v2308 = vpop.permute.xlu0 %2307
      %2309 = vrot.lane.b32.xlu0 %v2215, 24
      %v2310 = vpop.permute.xlu0 %2309
      %2311 = vrot.lane.b32.xlu0 %v2216, 24
      %v2312 = vpop.permute.xlu0 %2311
      %2313 = vrot.lane.b32.xlu0 %v2217, 24
      %v2314 = vpop.permute.xlu0 %2313
      %2315 = vrot.lane.b32.xlu0 %v2218, 24
      %v2316 = vpop.permute.xlu0 %2315
      %2317 = vrot.lane.b32.xlu0 %v2219, 24
      %v2318 = vpop.permute.xlu0 %2317
      %2319 = vrot.lane.b32.xlu0 %v2220, 24
      %v2320 = vpop.permute.xlu0 %2319
      %2321 = vrot.lane.b32.xlu0 %v2221, 24
      %v2322 = vpop.permute.xlu0 %2321
      %2323 = vrot.lane.b32.xlu0 %v2222, 24
      %v2324 = vpop.permute.xlu0 %2323
      %2325 = vrot.lane.b32.xlu0 %v2223, 24
      %v2326 = vpop.permute.xlu0 %2325
      %2327 = vrot.lane.b32.xlu0 %v2224, 24
      %v2328 = vpop.permute.xlu0 %2327
      %2329 = vrot.lane.b32.xlu0 %v2225, 24
      %v2330 = vpop.permute.xlu0 %2329
      %2331 = vrot.lane.b32.xlu0 %v2226, 24
      %v2332 = vpop.permute.xlu0 %2331
      %2333 = vrot.lane.b32.xlu0 %v2227, 24
      %v2334 = vpop.permute.xlu0 %2333
      %2335 = vrot.lane.b32.xlu0 %v2228, 24
      %v2336 = vpop.permute.xlu0 %2335
      %vm2373 = vcmask 228544
      %2374 = vst.msk [vmem:[#allocation4] sm:$0xff] %vm2373, %v2266
      %2375 = vst.msk [vmem:[#allocation4 + $0x8] sm:$0xff] %vm2373, %v2268
      %2376 = vst.msk [vmem:[#allocation4 + $0x10] sm:$0xff] %vm2373, %v2270
      %2377 = vst.msk [vmem:[#allocation4 + $0x18] sm:$0xff] %vm2373, %v2272
      %2378 = vst.msk [vmem:[#allocation4 + $0x20] sm:$0xff] %vm2373, %v2274
      %2379 = vst.msk [vmem:[#allocation4 + $0x28] sm:$0xff] %vm2373, %v2276
      %2380 = vst.msk [vmem:[#allocation4 + $0x30] sm:$0xff] %vm2373, %v2278
      %2381 = vst.msk [vmem:[#allocation4 + $0x38] sm:$0xff] %vm2373, %v2280
      %2382 = vst.msk [vmem:[#allocation4 + $0x40] sm:$0xff] %vm2373, %v2282
      %2383 = vst.msk [vmem:[#allocation4 + $0x48] sm:$0xff] %vm2373, %v2284
      %2384 = vst.msk [vmem:[#allocation4 + $0x50] sm:$0xff] %vm2373, %v2286
      %2385 = vst.msk [vmem:[#allocation4 + $0x58] sm:$0xff] %vm2373, %v2288
      %2386 = vst.msk [vmem:[#allocation4 + $0x60] sm:$0xff] %vm2373, %v2290
      %2387 = vst.msk [vmem:[#allocation4 + $0x68] sm:$0xff] %vm2373, %v2292
      %2388 = vst.msk [vmem:[#allocation4 + $0x70] sm:$0xff] %vm2373, %v2294
      %2389 = vst.msk [vmem:[#allocation4 + $0x78] sm:$0xff] %vm2373, %v2296
      %2390 = vst.msk [vmem:[#allocation4 + $0x80] sm:$0xff] %vm2373, %v2298
      %2391 = vst.msk [vmem:[#allocation4 + $0x88] sm:$0xff] %vm2373, %v2300
      %2392 = vst.msk [vmem:[#allocation4 + $0x90] sm:$0xff] %vm2373, %v2302
      %2393 = vst.msk [vmem:[#allocation4 + $0x98] sm:$0xff] %vm2373, %v2304
      %2394 = vst.msk [vmem:[#allocation4 + $0xa0] sm:$0xff] %vm2373, %v2306
      %2395 = vst.msk [vmem:[#allocation4 + $0xa8] sm:$0xff] %vm2373, %v2308
      %2396 = vst.msk [vmem:[#allocation4 + $0xb0] sm:$0xff] %vm2373, %v2310
      %2397 = vst.msk [vmem:[#allocation4 + $0xb8] sm:$0xff] %vm2373, %v2312
      %2398 = vst.msk [vmem:[#allocation4 + $0xc0] sm:$0xff] %vm2373, %v2314
      %2399 = vst.msk [vmem:[#allocation4 + $0xc8] sm:$0xff] %vm2373, %v2316
      %2400 = vst.msk [vmem:[#allocation4 + $0xd0] sm:$0xff] %vm2373, %v2318
      %2401 = vst.msk [vmem:[#allocation4 + $0xd8] sm:$0xff] %vm2373, %v2320
      %2402 = vst.msk [vmem:[#allocation4 + $0xe0] sm:$0xff] %vm2373, %v2322
      %2403 = vst.msk [vmem:[#allocation4 + $0xe8] sm:$0xff] %vm2373, %v2324
      %2404 = vst.msk [vmem:[#allocation4 + $0xf0] sm:$0xff] %vm2373, %v2326
      %2405 = vst.msk [vmem:[#allocation4 + $0xf8] sm:$0xff] %vm2373, %v2328
      %2406 = vst.msk [vmem:[#allocation4 + $0x100] sm:$0xff] %vm2373, %v2330
      %2407 = vst.msk [vmem:[#allocation4 + $0x108] sm:$0xff] %vm2373, %v2332
      %2408 = vst.msk [vmem:[#allocation4 + $0x110] sm:$0xff] %vm2373, %v2334
      %2409 = vst.msk [vmem:[#allocation4 + $0x118] sm:$0xff] %vm2373, %v2336
      %v2410 = vld [vmem:[#allocation2 + $0x25] sm:$0xff]
      %v2411 = vld [vmem:[#allocation2 + $0x2d] sm:$0xff]
      %v2412 = vld [vmem:[#allocation2 + $0x35] sm:$0xff]
      %v2413 = vld [vmem:[#allocation2 + $0x3d] sm:$0xff]
      %v2414 = vld [vmem:[#allocation2 + $0x45] sm:$0xff]
      %v2415 = vld [vmem:[#allocation2 + $0x4d] sm:$0xff]
      %v2416 = vld [vmem:[#allocation2 + $0x55] sm:$0xff]
      %v2417 = vld [vmem:[#allocation2 + $0x5d] sm:$0xff]
      %v2418 = vld [vmem:[#allocation2 + $0x65] sm:$0xff]
      %v2419 = vld [vmem:[#allocation2 + $0x6d] sm:$0xff]
      %v2420 = vld [vmem:[#allocation2 + $0x75] sm:$0xff]
      %v2421 = vld [vmem:[#allocation2 + $0x7d] sm:$0xff]
      %v2422 = vld [vmem:[#allocation2 + $0x85] sm:$0xff]
      %v2423 = vld [vmem:[#allocation2 + $0x8d] sm:$0xff]
      %v2424 = vld [vmem:[#allocation2 + $0x95] sm:$0xff]
      %v2425 = vld [vmem:[#allocation2 + $0x9d] sm:$0xff]
      %v2426 = vld [vmem:[#allocation2 + $0xa5] sm:$0xff]
      %v2427 = vld [vmem:[#allocation2 + $0xad] sm:$0xff]
      %v2428 = vld [vmem:[#allocation2 + $0xb5] sm:$0xff]
      %v2429 = vld [vmem:[#allocation2 + $0xbd] sm:$0xff]
      %v2430 = vld [vmem:[#allocation2 + $0xc5] sm:$0xff]
      %v2431 = vld [vmem:[#allocation2 + $0xcd] sm:$0xff]
      %v2432 = vld [vmem:[#allocation2 + $0xd5] sm:$0xff]
      %v2433 = vld [vmem:[#allocation2 + $0xdd] sm:$0xff]
      %v2434 = vld [vmem:[#allocation2 + $0xe5] sm:$0xff]
      %v2435 = vld [vmem:[#allocation2 + $0xed] sm:$0xff]
      %v2436 = vld [vmem:[#allocation2 + $0xf5] sm:$0xff]
      %v2437 = vld [vmem:[#allocation2 + $0xfd] sm:$0xff]
      %v2438 = vld [vmem:[#allocation2 + $0x105] sm:$0xff]
      %v2439 = vld [vmem:[#allocation2 + $0x10d] sm:$0xff]
      %v2440 = vld [vmem:[#allocation2 + $0x115] sm:$0xff]
      %v2441 = vld [vmem:[#allocation2 + $0x11d] sm:$0xff]
      %v2442 = vld [vmem:[#allocation2 + $0x125] sm:$0xff]
      %v2443 = vld [vmem:[#allocation2 + $0x12d] sm:$0xff]
      %v2444 = vld [vmem:[#allocation2 + $0x135] sm:$0xff]
      %v2445 = vld [vmem:[#allocation2 + $0x13d] sm:$0xff]
      %2482 = vrot.lane.b32.xlu0 %v2410, 28
      %v2483 = vpop.permute.xlu0 %2482
      %2484 = vrot.lane.b32.xlu0 %v2411, 28
      %v2485 = vpop.permute.xlu0 %2484
      %2486 = vrot.lane.b32.xlu0 %v2412, 28
      %v2487 = vpop.permute.xlu0 %2486
      %2488 = vrot.lane.b32.xlu0 %v2413, 28
      %v2489 = vpop.permute.xlu0 %2488
      %2490 = vrot.lane.b32.xlu0 %v2414, 28
      %v2491 = vpop.permute.xlu0 %2490
      %2492 = vrot.lane.b32.xlu0 %v2415, 28
      %v2493 = vpop.permute.xlu0 %2492
      %2494 = vrot.lane.b32.xlu0 %v2416, 28
      %v2495 = vpop.permute.xlu0 %2494
      %2496 = vrot.lane.b32.xlu0 %v2417, 28
      %v2497 = vpop.permute.xlu0 %2496
      %2498 = vrot.lane.b32.xlu0 %v2418, 28
      %v2499 = vpop.permute.xlu0 %2498
      %2500 = vrot.lane.b32.xlu0 %v2419, 28
      %v2501 = vpop.permute.xlu0 %2500
      %2502 = vrot.lane.b32.xlu0 %v2420, 28
      %v2503 = vpop.permute.xlu0 %2502
      %2504 = vrot.lane.b32.xlu0 %v2421, 28
      %v2505 = vpop.permute.xlu0 %2504
      %2506 = vrot.lane.b32.xlu0 %v2422, 28
      %v2507 = vpop.permute.xlu0 %2506
      %2508 = vrot.lane.b32.xlu0 %v2423, 28
      %v2509 = vpop.permute.xlu0 %2508
      %2510 = vrot.lane.b32.xlu0 %v2424, 28
      %v2511 = vpop.permute.xlu0 %2510
      %2512 = vrot.lane.b32.xlu0 %v2425, 28
      %v2513 = vpop.permute.xlu0 %2512
      %2514 = vrot.lane.b32.xlu0 %v2426, 28
      %v2515 = vpop.permute.xlu0 %2514
      %2516 = vrot.lane.b32.xlu0 %v2427, 28
      %v2517 = vpop.permute.xlu0 %2516
      %2518 = vrot.lane.b32.xlu0 %v2428, 28
      %v2519 = vpop.permute.xlu0 %2518
      %2520 = vrot.lane.b32.xlu0 %v2429, 28
      %v2521 = vpop.permute.xlu0 %2520
      %2522 = vrot.lane.b32.xlu0 %v2430, 28
      %v2523 = vpop.permute.xlu0 %2522
      %2524 = vrot.lane.b32.xlu0 %v2431, 28
      %v2525 = vpop.permute.xlu0 %2524
      %2526 = vrot.lane.b32.xlu0 %v2432, 28
      %v2527 = vpop.permute.xlu0 %2526
      %2528 = vrot.lane.b32.xlu0 %v2433, 28
      %v2529 = vpop.permute.xlu0 %2528
      %2530 = vrot.lane.b32.xlu0 %v2434, 28
      %v2531 = vpop.permute.xlu0 %2530
      %2532 = vrot.lane.b32.xlu0 %v2435, 28
      %v2533 = vpop.permute.xlu0 %2532
      %2534 = vrot.lane.b32.xlu0 %v2436, 28
      %v2535 = vpop.permute.xlu0 %2534
      %2536 = vrot.lane.b32.xlu0 %v2437, 28
      %v2537 = vpop.permute.xlu0 %2536
      %2538 = vrot.lane.b32.xlu0 %v2438, 28
      %v2539 = vpop.permute.xlu0 %2538
      %2540 = vrot.lane.b32.xlu0 %v2439, 28
      %v2541 = vpop.permute.xlu0 %2540
      %2542 = vrot.lane.b32.xlu0 %v2440, 28
      %v2543 = vpop.permute.xlu0 %2542
      %2544 = vrot.lane.b32.xlu0 %v2441, 28
      %v2545 = vpop.permute.xlu0 %2544
      %2546 = vrot.lane.b32.xlu0 %v2442, 28
      %v2547 = vpop.permute.xlu0 %2546
      %2548 = vrot.lane.b32.xlu0 %v2443, 28
      %v2549 = vpop.permute.xlu0 %2548
      %2550 = vrot.lane.b32.xlu0 %v2444, 28
      %v2551 = vpop.permute.xlu0 %2550
      %2552 = vrot.lane.b32.xlu0 %v2445, 28
      %v2553 = vpop.permute.xlu0 %2552
      %vm2590 = vcmask 261344
      %2591 = vst.msk [vmem:[#allocation4] sm:$0xff] %vm2590, %v2483
      %2592 = vst.msk [vmem:[#allocation4 + $0x8] sm:$0xff] %vm2590, %v2485
      %2593 = vst.msk [vmem:[#allocation4 + $0x10] sm:$0xff] %vm2590, %v2487
      %2594 = vst.msk [vmem:[#allocation4 + $0x18] sm:$0xff] %vm2590, %v2489
      %2595 = vst.msk [vmem:[#allocation4 + $0x20] sm:$0xff] %vm2590, %v2491
      %2596 = vst.msk [vmem:[#allocation4 + $0x28] sm:$0xff] %vm2590, %v2493
      %2597 = vst.msk [vmem:[#allocation4 + $0x30] sm:$0xff] %vm2590, %v2495
      %2598 = vst.msk [vmem:[#allocation4 + $0x38] sm:$0xff] %vm2590, %v2497
      %2599 = vst.msk [vmem:[#allocation4 + $0x40] sm:$0xff] %vm2590, %v2499
      %2600 = vst.msk [vmem:[#allocation4 + $0x48] sm:$0xff] %vm2590, %v2501
      %2601 = vst.msk [vmem:[#allocation4 + $0x50] sm:$0xff] %vm2590, %v2503
      %2602 = vst.msk [vmem:[#allocation4 + $0x58] sm:$0xff] %vm2590, %v2505
      %2603 = vst.msk [vmem:[#allocation4 + $0x60] sm:$0xff] %vm2590, %v2507
      %2604 = vst.msk [vmem:[#allocation4 + $0x68] sm:$0xff] %vm2590, %v2509
      %2605 = vst.msk [vmem:[#allocation4 + $0x70] sm:$0xff] %vm2590, %v2511
      %2606 = vst.msk [vmem:[#allocation4 + $0x78] sm:$0xff] %vm2590, %v2513
      %2607 = vst.msk [vmem:[#allocation4 + $0x80] sm:$0xff] %vm2590, %v2515
      %2608 = vst.msk [vmem:[#allocation4 + $0x88] sm:$0xff] %vm2590, %v2517
      %2609 = vst.msk [vmem:[#allocation4 + $0x90] sm:$0xff] %vm2590, %v2519
      %2610 = vst.msk [vmem:[#allocation4 + $0x98] sm:$0xff] %vm2590, %v2521
      %2611 = vst.msk [vmem:[#allocation4 + $0xa0] sm:$0xff] %vm2590, %v2523
      %2612 = vst.msk [vmem:[#allocation4 + $0xa8] sm:$0xff] %vm2590, %v2525
      %2613 = vst.msk [vmem:[#allocation4 + $0xb0] sm:$0xff] %vm2590, %v2527
      %2614 = vst.msk [vmem:[#allocation4 + $0xb8] sm:$0xff] %vm2590, %v2529
      %2615 = vst.msk [vmem:[#allocation4 + $0xc0] sm:$0xff] %vm2590, %v2531
      %2616 = vst.msk [vmem:[#allocation4 + $0xc8] sm:$0xff] %vm2590, %v2533
      %2617 = vst.msk [vmem:[#allocation4 + $0xd0] sm:$0xff] %vm2590, %v2535
      %2618 = vst.msk [vmem:[#allocation4 + $0xd8] sm:$0xff] %vm2590, %v2537
      %2619 = vst.msk [vmem:[#allocation4 + $0xe0] sm:$0xff] %vm2590, %v2539
      %2620 = vst.msk [vmem:[#allocation4 + $0xe8] sm:$0xff] %vm2590, %v2541
      %2621 = vst.msk [vmem:[#allocation4 + $0xf0] sm:$0xff] %vm2590, %v2543
      %2622 = vst.msk [vmem:[#allocation4 + $0xf8] sm:$0xff] %vm2590, %v2545
      %2623 = vst.msk [vmem:[#allocation4 + $0x100] sm:$0xff] %vm2590, %v2547
      %2624 = vst.msk [vmem:[#allocation4 + $0x108] sm:$0xff] %vm2590, %v2549
      %2625 = vst.msk [vmem:[#allocation4 + $0x110] sm:$0xff] %vm2590, %v2551
      %2626 = vst.msk [vmem:[#allocation4 + $0x118] sm:$0xff] %vm2590, %v2553
      %v2627 = vld [vmem:[#allocation2 + $0x26] sm:$0xff]
      %v2628 = vld [vmem:[#allocation2 + $0x2e] sm:$0xff]
      %v2629 = vld [vmem:[#allocation2 + $0x36] sm:$0xff]
      %v2630 = vld [vmem:[#allocation2 + $0x3e] sm:$0xff]
      %v2631 = vld [vmem:[#allocation2 + $0x46] sm:$0xff]
      %v2632 = vld [vmem:[#allocation2 + $0x4e] sm:$0xff]
      %v2633 = vld [vmem:[#allocation2 + $0x56] sm:$0xff]
      %v2634 = vld [vmem:[#allocation2 + $0x5e] sm:$0xff]
      %v2635 = vld [vmem:[#allocation2 + $0x66] sm:$0xff]
      %v2636 = vld [vmem:[#allocation2 + $0x6e] sm:$0xff]
      %v2637 = vld [vmem:[#allocation2 + $0x76] sm:$0xff]
      %v2638 = vld [vmem:[#allocation2 + $0x7e] sm:$0xff]
      %v2639 = vld [vmem:[#allocation2 + $0x86] sm:$0xff]
      %v2640 = vld [vmem:[#allocation2 + $0x8e] sm:$0xff]
      %v2641 = vld [vmem:[#allocation2 + $0x96] sm:$0xff]
      %v2642 = vld [vmem:[#allocation2 + $0x9e] sm:$0xff]
      %v2643 = vld [vmem:[#allocation2 + $0xa6] sm:$0xff]
      %v2644 = vld [vmem:[#allocation2 + $0xae] sm:$0xff]
      %v2645 = vld [vmem:[#allocation2 + $0xb6] sm:$0xff]
      %v2646 = vld [vmem:[#allocation2 + $0xbe] sm:$0xff]
      %v2647 = vld [vmem:[#allocation2 + $0xc6] sm:$0xff]
      %v2648 = vld [vmem:[#allocation2 + $0xce] sm:$0xff]
      %v2649 = vld [vmem:[#allocation2 + $0xd6] sm:$0xff]
      %v2650 = vld [vmem:[#allocation2 + $0xde] sm:$0xff]
      %v2651 = vld [vmem:[#allocation2 + $0xe6] sm:$0xff]
      %v2652 = vld [vmem:[#allocation2 + $0xee] sm:$0xff]
      %v2653 = vld [vmem:[#allocation2 + $0xf6] sm:$0xff]
      %v2654 = vld [vmem:[#allocation2 + $0xfe] sm:$0xff]
      %v2655 = vld [vmem:[#allocation2 + $0x106] sm:$0xff]
      %v2656 = vld [vmem:[#allocation2 + $0x10e] sm:$0xff]
      %v2657 = vld [vmem:[#allocation2 + $0x116] sm:$0xff]
      %v2658 = vld [vmem:[#allocation2 + $0x11e] sm:$0xff]
      %v2659 = vld [vmem:[#allocation2 + $0x126] sm:$0xff]
      %v2660 = vld [vmem:[#allocation2 + $0x12e] sm:$0xff]
      %v2661 = vld [vmem:[#allocation2 + $0x136] sm:$0xff]
      %v2662 = vld [vmem:[#allocation2 + $0x13e] sm:$0xff]
      %2699 = vrot.lane.b32.xlu0 %v2627, 32
      %v2700 = vpop.permute.xlu0 %2699
      %2701 = vrot.lane.b32.xlu0 %v2628, 32
      %v2702 = vpop.permute.xlu0 %2701
      %2703 = vrot.lane.b32.xlu0 %v2629, 32
      %v2704 = vpop.permute.xlu0 %2703
      %2705 = vrot.lane.b32.xlu0 %v2630, 32
      %v2706 = vpop.permute.xlu0 %2705
      %2707 = vrot.lane.b32.xlu0 %v2631, 32
      %v2708 = vpop.permute.xlu0 %2707
      %2709 = vrot.lane.b32.xlu0 %v2632, 32
      %v2710 = vpop.permute.xlu0 %2709
      %2711 = vrot.lane.b32.xlu0 %v2633, 32
      %v2712 = vpop.permute.xlu0 %2711
      %2713 = vrot.lane.b32.xlu0 %v2634, 32
      %v2714 = vpop.permute.xlu0 %2713
      %2715 = vrot.lane.b32.xlu0 %v2635, 32
      %v2716 = vpop.permute.xlu0 %2715
      %2717 = vrot.lane.b32.xlu0 %v2636, 32
      %v2718 = vpop.permute.xlu0 %2717
      %2719 = vrot.lane.b32.xlu0 %v2637, 32
      %v2720 = vpop.permute.xlu0 %2719
      %2721 = vrot.lane.b32.xlu0 %v2638, 32
      %v2722 = vpop.permute.xlu0 %2721
      %2723 = vrot.lane.b32.xlu0 %v2639, 32
      %v2724 = vpop.permute.xlu0 %2723
      %2725 = vrot.lane.b32.xlu0 %v2640, 32
      %v2726 = vpop.permute.xlu0 %2725
      %2727 = vrot.lane.b32.xlu0 %v2641, 32
      %v2728 = vpop.permute.xlu0 %2727
      %2729 = vrot.lane.b32.xlu0 %v2642, 32
      %v2730 = vpop.permute.xlu0 %2729
      %2731 = vrot.lane.b32.xlu0 %v2643, 32
      %v2732 = vpop.permute.xlu0 %2731
      %2733 = vrot.lane.b32.xlu0 %v2644, 32
      %v2734 = vpop.permute.xlu0 %2733
      %2735 = vrot.lane.b32.xlu0 %v2645, 32
      %v2736 = vpop.permute.xlu0 %2735
      %2737 = vrot.lane.b32.xlu0 %v2646, 32
      %v2738 = vpop.permute.xlu0 %2737
      %2739 = vrot.lane.b32.xlu0 %v2647, 32
      %v2740 = vpop.permute.xlu0 %2739
      %2741 = vrot.lane.b32.xlu0 %v2648, 32
      %v2742 = vpop.permute.xlu0 %2741
      %2743 = vrot.lane.b32.xlu0 %v2649, 32
      %v2744 = vpop.permute.xlu0 %2743
      %2745 = vrot.lane.b32.xlu0 %v2650, 32
      %v2746 = vpop.permute.xlu0 %2745
      %2747 = vrot.lane.b32.xlu0 %v2651, 32
      %v2748 = vpop.permute.xlu0 %2747
      %2749 = vrot.lane.b32.xlu0 %v2652, 32
      %v2750 = vpop.permute.xlu0 %2749
      %2751 = vrot.lane.b32.xlu0 %v2653, 32
      %v2752 = vpop.permute.xlu0 %2751
      %2753 = vrot.lane.b32.xlu0 %v2654, 32
      %v2754 = vpop.permute.xlu0 %2753
      %2755 = vrot.lane.b32.xlu0 %v2655, 32
      %v2756 = vpop.permute.xlu0 %2755
      %2757 = vrot.lane.b32.xlu0 %v2656, 32
      %v2758 = vpop.permute.xlu0 %2757
      %2759 = vrot.lane.b32.xlu0 %v2657, 32
      %v2760 = vpop.permute.xlu0 %2759
      %2761 = vrot.lane.b32.xlu0 %v2658, 32
      %v2762 = vpop.permute.xlu0 %2761
      %2763 = vrot.lane.b32.xlu0 %v2659, 32
      %v2764 = vpop.permute.xlu0 %2763
      %2765 = vrot.lane.b32.xlu0 %v2660, 32
      %v2766 = vpop.permute.xlu0 %2765
      %2767 = vrot.lane.b32.xlu0 %v2661, 32
      %v2768 = vpop.permute.xlu0 %2767
      %2769 = vrot.lane.b32.xlu0 %v2662, 32
      %v2770 = vpop.permute.xlu0 %2769
      %vm2807 = vcmask 294144
      %2808 = vst.msk [vmem:[#allocation4] sm:$0xff] %vm2807, %v2700
      %2809 = vst.msk [vmem:[#allocation4 + $0x8] sm:$0xff] %vm2807, %v2702
      %2810 = vst.msk [vmem:[#allocation4 + $0x10] sm:$0xff] %vm2807, %v2704
      %2811 = vst.msk [vmem:[#allocation4 + $0x18] sm:$0xff] %vm2807, %v2706
      %2812 = vst.msk [vmem:[#allocation4 + $0x20] sm:$0xff] %vm2807, %v2708
      %2813 = vst.msk [vmem:[#allocation4 + $0x28] sm:$0xff] %vm2807, %v2710
      %2814 = vst.msk [vmem:[#allocation4 + $0x30] sm:$0xff] %vm2807, %v2712
      %2815 = vst.msk [vmem:[#allocation4 + $0x38] sm:$0xff] %vm2807, %v2714
      %2816 = vst.msk [vmem:[#allocation4 + $0x40] sm:$0xff] %vm2807, %v2716
      %2817 = vst.msk [vmem:[#allocation4 + $0x48] sm:$0xff] %vm2807, %v2718
      %2818 = vst.msk [vmem:[#allocation4 + $0x50] sm:$0xff] %vm2807, %v2720
      %2819 = vst.msk [vmem:[#allocation4 + $0x58] sm:$0xff] %vm2807, %v2722
      %2820 = vst.msk [vmem:[#allocation4 + $0x60] sm:$0xff] %vm2807, %v2724
      %2821 = vst.msk [vmem:[#allocation4 + $0x68] sm:$0xff] %vm2807, %v2726
      %2822 = vst.msk [vmem:[#allocation4 + $0x70] sm:$0xff] %vm2807, %v2728
      %2823 = vst.msk [vmem:[#allocation4 + $0x78] sm:$0xff] %vm2807, %v2730
      %2824 = vst.msk [vmem:[#allocation4 + $0x80] sm:$0xff] %vm2807, %v2732
      %2825 = vst.msk [vmem:[#allocation4 + $0x88] sm:$0xff] %vm2807, %v2734
      %2826 = vst.msk [vmem:[#allocation4 + $0x90] sm:$0xff] %vm2807, %v2736
      %2827 = vst.msk [vmem:[#allocation4 + $0x98] sm:$0xff] %vm2807, %v2738
      %2828 = vst.msk [vmem:[#allocation4 + $0xa0] sm:$0xff] %vm2807, %v2740
      %2829 = vst.msk [vmem:[#allocation4 + $0xa8] sm:$0xff] %vm2807, %v2742
      %2830 = vst.msk [vmem:[#allocation4 + $0xb0] sm:$0xff] %vm2807, %v2744
      %2831 = vst.msk [vmem:[#allocation4 + $0xb8] sm:$0xff] %vm2807, %v2746
      %2832 = vst.msk [vmem:[#allocation4 + $0xc0] sm:$0xff] %vm2807, %v2748
      %2833 = vst.msk [vmem:[#allocation4 + $0xc8] sm:$0xff] %vm2807, %v2750
      %2834 = vst.msk [vmem:[#allocation4 + $0xd0] sm:$0xff] %vm2807, %v2752
      %2835 = vst.msk [vmem:[#allocation4 + $0xd8] sm:$0xff] %vm2807, %v2754
      %2836 = vst.msk [vmem:[#allocation4 + $0xe0] sm:$0xff] %vm2807, %v2756
      %2837 = vst.msk [vmem:[#allocation4 + $0xe8] sm:$0xff] %vm2807, %v2758
      %2838 = vst.msk [vmem:[#allocation4 + $0xf0] sm:$0xff] %vm2807, %v2760
      %2839 = vst.msk [vmem:[#allocation4 + $0xf8] sm:$0xff] %vm2807, %v2762
      %2840 = vst.msk [vmem:[#allocation4 + $0x100] sm:$0xff] %vm2807, %v2764
      %2841 = vst.msk [vmem:[#allocation4 + $0x108] sm:$0xff] %vm2807, %v2766
      %2842 = vst.msk [vmem:[#allocation4 + $0x110] sm:$0xff] %vm2807, %v2768
      %2843 = vst.msk [vmem:[#allocation4 + $0x118] sm:$0xff] %vm2807, %v2770
      %v2844 = vld [vmem:[#allocation4] sm:$0xff]
      %v2845 = vld [vmem:[#allocation4 + $0x8] sm:$0xff]
      %v2846 = vld [vmem:[#allocation4 + $0x10] sm:$0xff]
      %v2847 = vld [vmem:[#allocation4 + $0x18] sm:$0xff]
      %v2848 = vld [vmem:[#allocation4 + $0x20] sm:$0xff]
      %v2849 = vld [vmem:[#allocation4 + $0x28] sm:$0xff]
      %v2850 = vld [vmem:[#allocation4 + $0x30] sm:$0xff]
      %v2851 = vld [vmem:[#allocation4 + $0x38] sm:$0xff]
      %v2852 = vld [vmem:[#allocation4 + $0x40] sm:$0xff]
      %v2853 = vld [vmem:[#allocation4 + $0x48] sm:$0xff]
      %v2854 = vld [vmem:[#allocation4 + $0x50] sm:$0xff]
      %v2855 = vld [vmem:[#allocation4 + $0x58] sm:$0xff]
      %v2856 = vld [vmem:[#allocation4 + $0x60] sm:$0xff]
      %v2857 = vld [vmem:[#allocation4 + $0x68] sm:$0xff]
      %v2858 = vld [vmem:[#allocation4 + $0x70] sm:$0xff]
      %v2859 = vld [vmem:[#allocation4 + $0x78] sm:$0xff]
      %v2860 = vld [vmem:[#allocation4 + $0x80] sm:$0xff]
      %v2861 = vld [vmem:[#allocation4 + $0x88] sm:$0xff]
      %v2862 = vld [vmem:[#allocation4 + $0x90] sm:$0xff]
      %v2863 = vld [vmem:[#allocation4 + $0x98] sm:$0xff]
      %v2864 = vld [vmem:[#allocation4 + $0xa0] sm:$0xff]
      %v2865 = vld [vmem:[#allocation4 + $0xa8] sm:$0xff]
      %v2866 = vld [vmem:[#allocation4 + $0xb0] sm:$0xff]
      %v2867 = vld [vmem:[#allocation4 + $0xb8] sm:$0xff]
      %v2868 = vld [vmem:[#allocation4 + $0xc0] sm:$0xff]
      %v2869 = vld [vmem:[#allocation4 + $0xc8] sm:$0xff]
      %v2870 = vld [vmem:[#allocation4 + $0xd0] sm:$0xff]
      %v2871 = vld [vmem:[#allocation4 + $0xd8] sm:$0xff]
      %v2872 = vld [vmem:[#allocation4 + $0xe0] sm:$0xff]
      %v2873 = vld [vmem:[#allocation4 + $0xe8] sm:$0xff]
      %v2874 = vld [vmem:[#allocation4 + $0xf0] sm:$0xff]
      %v2875 = vld [vmem:[#allocation4 + $0xf8] sm:$0xff]
      %v2876 = vld [vmem:[#allocation4 + $0x100] sm:$0xff]
      %v2877 = vld [vmem:[#allocation4 + $0x108] sm:$0xff]
      %v2878 = vld [vmem:[#allocation4 + $0x110] sm:$0xff]
      %v2879 = vld [vmem:[#allocation4 + $0x118] sm:$0xff]
      %v2880 = vld [vmem:[%s1] sm:$0xff]
      %v2881 = vld [vmem:[%s1 + $0x8] sm:$0xff]
      %v2882 = vld [vmem:[%s1 + $0x10] sm:$0xff]
      %v2883 = vld [vmem:[%s1 + $0x18] sm:$0xff]
      %v2884 = vld [vmem:[%s1 + $0x20] sm:$0xf]
      %vm2885 = vcmask 293888
      %v2887 = vsel %vm2885, %v2844, 0
      %v2890 = vsel %vm2885, %v2845, 0
      %v2893 = vsel %vm2885, %v2846, 0
      %v2896 = vsel %vm2885, %v2847, 0
      %v2899 = vsel %vm2885, %v2848, 0
      %v2902 = vsel %vm2885, %v2849, 0
      %v2905 = vsel %vm2885, %v2850, 0
      %v2908 = vsel %vm2885, %v2851, 0
      %v2911 = vsel %vm2885, %v2852, 0
      %v2914 = vsel %vm2885, %v2853, 0
      %v2917 = vsel %vm2885, %v2854, 0
      %v2920 = vsel %vm2885, %v2855, 0
      %v2923 = vsel %vm2885, %v2856, 0
      %v2926 = vsel %vm2885, %v2857, 0
      %v2929 = vsel %vm2885, %v2858, 0
      %v2932 = vsel %vm2885, %v2859, 0
      %v2935 = vsel %vm2885, %v2860, 0
      %v2938 = vsel %vm2885, %v2861, 0
      %v2941 = vsel %vm2885, %v2862, 0
      %v2944 = vsel %vm2885, %v2863, 0
      %v2947 = vsel %vm2885, %v2864, 0
      %v2950 = vsel %vm2885, %v2865, 0
      %v2953 = vsel %vm2885, %v2866, 0
      %v2956 = vsel %vm2885, %v2867, 0
      %v2959 = vsel %vm2885, %v2868, 0
      %v2962 = vsel %vm2885, %v2869, 0
      %v2965 = vsel %vm2885, %v2870, 0
      %v2968 = vsel %vm2885, %v2871, 0
      %v2971 = vsel %vm2885, %v2872, 0
      %v2974 = vsel %vm2885, %v2873, 0
      %v2977 = vsel %vm2885, %v2874, 0
      %v2980 = vsel %vm2885, %v2875, 0
      %v2983 = vsel %vm2885, %v2876, 0
      %v2986 = vsel %vm2885, %v2877, 0
      %v2989 = vsel %vm2885, %v2878, 0
      %v2992 = vsel %vm2885, %v2879, 0
      %vm2994 = vcmask 1043456
      %v2996 = vsel %vm2994, %v2884, 0
      %2998 = vmatprep.subr.mxu0 0.0
      %2999 = vmatpush1.msra.mxu0 0.0
      %3000 = vmatprep.subr.mxu0 0.0
      %3001 = vmatpush1.msra.mxu0 0.0
      %3002 = vmatprep.subr.mxu0 0.0
      %3003 = vmatpush1.msra.mxu0 0.0
      %3004 = vmatprep.subr.mxu0 0.0
      %3005 = vmatpush1.msra.mxu0 0.0
      %3006 = vmatprep.subr.mxu0 0.0
      %3007 = vmatpush1.msra.mxu0 0.0
      %3008 = vmatprep.subr.mxu0 0.0
      %3009 = vmatpush1.msra.mxu0 0.0
      %3010 = vmatprep.subr.mxu0 0.0
      %3011 = vmatpush1.msra.mxu0 0.0
      %3012 = vmatprep.subr.mxu0 0.0
      %3013 = vmatpush1.msra.mxu0 0.0
      %3014 = vmatprep.subr.mxu0 0.0
      %3015 = vmatpush1.msra.mxu0 0.0
      %3016 = vmatprep.subr.mxu0 0.0
      %3017 = vmatpush1.msra.mxu0 0.0
      %3018 = vmatprep.subr.mxu0 0.0
      %3019 = vmatpush1.msra.mxu0 0.0
      %3020 = vmatprep.subr.mxu0 0.0
      %3021 = vmatpush1.msra.mxu0 %v2996
      %3022 = vmatprep.subr.mxu0 0.0
      %3023 = vmatpush1.msra.mxu0 %v2883
      %3024 = vmatprep.subr.mxu0 0.0
      %3025 = vmatpush1.msra.mxu0 %v2882
      %3026 = vmatprep.subr.mxu0 0.0
      %3027 = vmatpush1.msra.mxu0 %v2881
      %3028 = vmatprep.subr.mxu0 0.0
      %3029 = vmatpush1.msra.mxu0 %v2880
      %3030 = vmatprep.subr.mxu0 0.0
      %3031 = vmatpush2.msra.mxu0 0.0
      %3032 = vmatprep.subr.mxu0 0.0
      %3033 = vmatpush2.msra.mxu0 0.0
      %3034 = vmatprep.subr.mxu0 0.0
      %3035 = vmatpush2.msra.mxu0 0.0
      %3036 = vmatprep.subr.mxu0 0.0
      %3037 = vmatpush2.msra.mxu0 0.0
      %3038 = vmatprep.subr.mxu0 0.0
      %3039 = vmatpush2.msra.mxu0 0.0
      %3040 = vmatprep.subr.mxu0 0.0
      %3041 = vmatpush2.msra.mxu0 0.0
      %3042 = vmatprep.subr.mxu0 0.0
      %3043 = vmatpush2.msra.mxu0 0.0
      %3044 = vmatprep.subr.mxu0 0.0
      %3045 = vmatpush2.msra.mxu0 0.0
      %3046 = vmatprep.subr.mxu0 0.0
      %3047 = vmatpush2.msra.mxu0 0.0
      %3048 = vmatprep.subr.mxu0 0.0
      %3049 = vmatpush2.msra.mxu0 0.0
      %3050 = vmatprep.subr.mxu0 0.0
      %3051 = vmatpush2.msra.mxu0 0.0
      %3052 = vmatprep.subr.mxu0 0.0
      %3053 = vmatpush2.msra.mxu0 0.0
      %3054 = vmatprep.subr.mxu0 0.0
      %3055 = vmatpush2.msra.mxu0 0.0
      %3056 = vmatprep.subr.mxu0 0.0
      %3057 = vmatpush2.msra.mxu0 0.0
      %3058 = vmatprep.subr.mxu0 0.0
      %3059 = vmatpush2.msra.mxu0 0.0
      %3060 = vmatprep.subr.mxu0 0.0
      %3061 = vmatpush2.msra.mxu0 0.0
      %3062 = vmatprep.mubr.f32.mxu0 0.0
      %3063 = vmatmul.mubr.f32.gmra.mxu0 %v2887
      %v3064 = vpop.f32.mrf.mxu0
      %v3065 = vadd.f32 0.0, %v3064
      %v3066 = vpop.f32.mrf.mxu0
      %3067 = vmatprep.mubr.f32.mxu0 0.0
      %3068 = vmatmul.mubr.f32.gmra.mxu0 %v2890
      %v3069 = vpop.f32.mrf.mxu0
      %v3070 = vadd.f32 0.0, %v3069
      %v3071 = vpop.f32.mrf.mxu0
      %3072 = vmatprep.mubr.f32.mxu0 0.0
      %3073 = vmatmul.mubr.f32.gmra.mxu0 %v2893
      %v3074 = vpop.f32.mrf.mxu0
      %v3075 = vadd.f32 0.0, %v3074
      %v3076 = vpop.f32.mrf.mxu0
      %3077 = vmatprep.mubr.f32.mxu0 0.0
      %3078 = vmatmul.mubr.f32.gmra.mxu0 %v2896
      %v3079 = vpop.f32.mrf.mxu0
      %v3080 = vadd.f32 0.0, %v3079
      %v3081 = vpop.f32.mrf.mxu0
      %3082 = vmatprep.mubr.f32.mxu0 0.0
      %3083 = vmatmul.mubr.f32.gmra.mxu0 %v2899
      %v3084 = vpop.f32.mrf.mxu0
      %v3085 = vadd.f32 0.0, %v3084
      %v3086 = vpop.f32.mrf.mxu0
      %3087 = vmatprep.mubr.f32.mxu0 0.0
      %3088 = vmatmul.mubr.f32.gmra.mxu0 %v2902
      %v3089 = vpop.f32.mrf.mxu0
      %v3090 = vadd.f32 0.0, %v3089
      %v3091 = vpop.f32.mrf.mxu0
      %3092 = vmatprep.mubr.f32.mxu0 0.0
      %3093 = vmatmul.mubr.f32.gmra.mxu0 %v2905
      %v3094 = vpop.f32.mrf.mxu0
      %v3095 = vadd.f32 0.0, %v3094
      %v3096 = vpop.f32.mrf.mxu0
      %3097 = vmatprep.mubr.f32.mxu0 0.0
      %3098 = vmatmul.mubr.f32.gmra.mxu0 %v2908
      %v3099 = vpop.f32.mrf.mxu0
      %v3100 = vadd.f32 0.0, %v3099
      %v3101 = vpop.f32.mrf.mxu0
      %3102 = vmatprep.mubr.f32.mxu0 0.0
      %3103 = vmatmul.mubr.f32.gmra.mxu0 %v2911
      %v3104 = vpop.f32.mrf.mxu0
      %v3105 = vadd.f32 0.0, %v3104
      %v3106 = vpop.f32.mrf.mxu0
      %3107 = vmatprep.mubr.f32.mxu0 0.0
      %3108 = vmatmul.mubr.f32.gmra.mxu0 %v2914
      %v3109 = vpop.f32.mrf.mxu0
      %v3110 = vadd.f32 0.0, %v3109
      %v3111 = vpop.f32.mrf.mxu0
      %3112 = vmatprep.mubr.f32.mxu0 0.0
      %3113 = vmatmul.mubr.f32.gmra.mxu0 %v2917
      %v3114 = vpop.f32.mrf.mxu0
      %v3115 = vadd.f32 0.0, %v3114
      %v3116 = vpop.f32.mrf.mxu0
      %3117 = vmatprep.mubr.f32.mxu0 0.0
      %3118 = vmatmul.mubr.f32.gmra.mxu0 %v2920
      %v3119 = vpop.f32.mrf.mxu0
      %v3120 = vadd.f32 0.0, %v3119
      %v3121 = vpop.f32.mrf.mxu0
      %3122 = vmatprep.mubr.f32.mxu0 0.0
      %3123 = vmatmul.mubr.f32.gmra.mxu0 %v2923
      %v3124 = vpop.f32.mrf.mxu0
      %v3125 = vadd.f32 0.0, %v3124
      %v3126 = vpop.f32.mrf.mxu0
      %3127 = vmatprep.mubr.f32.mxu0 0.0
      %3128 = vmatmul.mubr.f32.gmra.mxu0 %v2926
      %v3129 = vpop.f32.mrf.mxu0
      %v3130 = vadd.f32 0.0, %v3129
      %v3131 = vpop.f32.mrf.mxu0
      %3132 = vmatprep.mubr.f32.mxu0 0.0
      %3133 = vmatmul.mubr.f32.gmra.mxu0 %v2929
      %v3134 = vpop.f32.mrf.mxu0
      %v3135 = vadd.f32 0.0, %v3134
      %v3136 = vpop.f32.mrf.mxu0
      %3137 = vmatprep.mubr.f32.mxu0 0.0
      %3138 = vmatmul.mubr.f32.gmra.mxu0 %v2932
      %v3139 = vpop.f32.mrf.mxu0
      %v3140 = vadd.f32 0.0, %v3139
      %v3141 = vpop.f32.mrf.mxu0
      %3142 = vmatprep.mubr.f32.mxu0 0.0
      %3143 = vmatmul.mubr.f32.gmra.mxu0 %v2935
      %v3144 = vpop.f32.mrf.mxu0
      %v3145 = vadd.f32 0.0, %v3144
      %v3146 = vpop.f32.mrf.mxu0
      %3147 = vmatprep.mubr.f32.mxu0 0.0
      %3148 = vmatmul.mubr.f32.gmra.mxu0 %v2938
      %v3149 = vpop.f32.mrf.mxu0
      %v3150 = vadd.f32 0.0, %v3149
      %v3151 = vpop.f32.mrf.mxu0
      %3152 = vmatprep.mubr.f32.mxu0 0.0
      %3153 = vmatmul.mubr.f32.gmra.mxu0 %v2941
      %v3154 = vpop.f32.mrf.mxu0
      %v3155 = vadd.f32 0.0, %v3154
      %v3156 = vpop.f32.mrf.mxu0
      %3157 = vmatprep.mubr.f32.mxu0 0.0
      %3158 = vmatmul.mubr.f32.gmra.mxu0 %v2944
      %v3159 = vpop.f32.mrf.mxu0
      %v3160 = vadd.f32 0.0, %v3159
      %v3161 = vpop.f32.mrf.mxu0
      %3162 = vmatprep.mubr.f32.mxu0 0.0
      %3163 = vmatmul.mubr.f32.gmra.mxu0 %v2947
      %v3164 = vpop.f32.mrf.mxu0
      %v3165 = vadd.f32 0.0, %v3164
      %v3166 = vpop.f32.mrf.mxu0
      %3167 = vmatprep.mubr.f32.mxu0 0.0
      %3168 = vmatmul.mubr.f32.gmra.mxu0 %v2950
      %v3169 = vpop.f32.mrf.mxu0
      %v3170 = vadd.f32 0.0, %v3169
      %v3171 = vpop.f32.mrf.mxu0
      %3172 = vmatprep.mubr.f32.mxu0 0.0
      %3173 = vmatmul.mubr.f32.gmra.mxu0 %v2953
      %v3174 = vpop.f32.mrf.mxu0
      %v3175 = vadd.f32 0.0, %v3174
      %v3176 = vpop.f32.mrf.mxu0
      %3177 = vmatprep.mubr.f32.mxu0 0.0
      %3178 = vmatmul.mubr.f32.gmra.mxu0 %v2956
      %v3179 = vpop.f32.mrf.mxu0
      %v3180 = vadd.f32 0.0, %v3179
      %v3181 = vpop.f32.mrf.mxu0
      %3182 = vmatprep.mubr.f32.mxu0 0.0
      %3183 = vmatmul.mubr.f32.gmra.mxu0 %v2959
      %v3184 = vpop.f32.mrf.mxu0
      %v3185 = vadd.f32 0.0, %v3184
      %v3186 = vpop.f32.mrf.mxu0
      %3187 = vmatprep.mubr.f32.mxu0 0.0
      %3188 = vmatmul.mubr.f32.gmra.mxu0 %v2962
      %v3189 = vpop.f32.mrf.mxu0
      %v3190 = vadd.f32 0.0, %v3189
      %v3191 = vpop.f32.mrf.mxu0
      %3192 = vmatprep.mubr.f32.mxu0 0.0
      %3193 = vmatmul.mubr.f32.gmra.mxu0 %v2965
      %v3194 = vpop.f32.mrf.mxu0
      %v3195 = vadd.f32 0.0, %v3194
      %v3196 = vpop.f32.mrf.mxu0
      %3197 = vmatprep.mubr.f32.mxu0 0.0
      %3198 = vmatmul.mubr.f32.gmra.mxu0 %v2968
      %v3199 = vpop.f32.mrf.mxu0
      %v3200 = vadd.f32 0.0, %v3199
      %v3201 = vpop.f32.mrf.mxu0
      %3202 = vmatprep.mubr.f32.mxu0 0.0
      %3203 = vmatmul.mubr.f32.gmra.mxu0 %v2971
      %v3204 = vpop.f32.mrf.mxu0
      %v3205 = vadd.f32 0.0, %v3204
      %v3206 = vpop.f32.mrf.mxu0
      %3207 = vmatprep.mubr.f32.mxu0 0.0
      %3208 = vmatmul.mubr.f32.gmra.mxu0 %v2974
      %v3209 = vpop.f32.mrf.mxu0
      %v3210 = vadd.f32 0.0, %v3209
      %v3211 = vpop.f32.mrf.mxu0
      %3212 = vmatprep.mubr.f32.mxu0 0.0
      %3213 = vmatmul.mubr.f32.gmra.mxu0 %v2977
      %v3214 = vpop.f32.mrf.mxu0
      %v3215 = vadd.f32 0.0, %v3214
      %v3216 = vpop.f32.mrf.mxu0
      %3217 = vmatprep.mubr.f32.mxu0 0.0
      %3218 = vmatmul.mubr.f32.gmra.mxu0 %v2980
      %v3219 = vpop.f32.mrf.mxu0
      %v3220 = vadd.f32 0.0, %v3219
      %v3221 = vpop.f32.mrf.mxu0
      %3222 = vmatprep.mubr.f32.mxu0 0.0
      %3223 = vmatmul.mubr.f32.gmra.mxu0 %v2983
      %v3224 = vpop.f32.mrf.mxu0
      %v3225 = vadd.f32 0.0, %v3224
      %v3226 = vpop.f32.mrf.mxu0
      %3227 = vmatprep.mubr.f32.mxu0 0.0
      %3228 = vmatmul.mubr.f32.gmra.mxu0 %v2986
      %v3229 = vpop.f32.mrf.mxu0
      %v3230 = vadd.f32 0.0, %v3229
      %v3231 = vpop.f32.mrf.mxu0
      %3232 = vmatprep.mubr.f32.mxu0 0.0
      %3233 = vmatmul.mubr.f32.gmra.mxu0 %v2989
      %v3234 = vpop.f32.mrf.mxu0
      %v3235 = vadd.f32 0.0, %v3234
      %v3236 = vpop.f32.mrf.mxu0
      %3237 = vmatprep.mubr.f32.mxu0 0.0
      %3238 = vmatmul.mubr.f32.gmra.mxu0 %v2992
      %v3239 = vpop.f32.mrf.mxu0
      %v3240 = vadd.f32 0.0, %v3239
      %v3241 = vpop.f32.mrf.mxu0
      %3242 = vdwg.mxu0
      %v3243 = vld [vmem:[%s2] sm:$0x1]
      %v3245 = vlaneseq
      %v3246 = vshrl.u32 %v3245, 7
      %v3247 = vsub.s32 0, %v3246
      %v3248 = vrot.slane %v3243, %v3247
      %v3250 = vmul.f32 %v3065, %v3248
      %v3251 = vmul.f32 %v3070, %v3248
      %v3252 = vmul.f32 %v3075, %v3248
      %v3253 = vmul.f32 %v3080, %v3248
      %v3254 = vmul.f32 %v3085, %v3248
      %v3255 = vmul.f32 %v3090, %v3248
      %v3256 = vmul.f32 %v3095, %v3248
      %v3257 = vmul.f32 %v3100, %v3248
      %v3258 = vmul.f32 %v3105, %v3248
      %v3259 = vmul.f32 %v3110, %v3248
      %v3260 = vmul.f32 %v3115, %v3248
      %v3261 = vmul.f32 %v3120, %v3248
      %v3262 = vmul.f32 %v3125, %v3248
      %v3263 = vmul.f32 %v3130, %v3248
      %v3264 = vmul.f32 %v3135, %v3248
      %v3265 = vmul.f32 %v3140, %v3248
      %v3266 = vmul.f32 %v3145, %v3248
      %v3267 = vmul.f32 %v3150, %v3248
      %v3268 = vmul.f32 %v3155, %v3248
      %v3269 = vmul.f32 %v3160, %v3248
      %v3270 = vmul.f32 %v3165, %v3248
      %v3271 = vmul.f32 %v3170, %v3248
      %v3272 = vmul.f32 %v3175, %v3248
      %v3273 = vmul.f32 %v3180, %v3248
      %v3274 = vmul.f32 %v3185, %v3248
      %v3275 = vmul.f32 %v3190, %v3248
      %v3276 = vmul.f32 %v3195, %v3248
      %v3277 = vmul.f32 %v3200, %v3248
      %v3278 = vmul.f32 %v3205, %v3248
      %v3279 = vmul.f32 %v3210, %v3248
      %v3280 = vmul.f32 %v3215, %v3248
      %v3281 = vmul.f32 %v3220, %v3248
      %v3282 = vmul.f32 %v3225, %v3248
      %v3283 = vmul.f32 %v3230, %v3248
      %v3284 = vmul.f32 %v3235, %v3248
      %v3285 = vmul.f32 %v3240, %v3248
      %v3286 = vld [vmem:[%s3] sm:$0x1]
      %v3288 = vlaneseq
      %v3289 = vshrl.u32 %v3288, 7
      %v3290 = vsub.s32 0, %v3289
      %v3291 = vrot.slane %v3286, %v3290
      %v3293 = vadd.f32 %v3250, %v3291
      %v3294 = vadd.f32 %v3251, %v3291
      %v3295 = vadd.f32 %v3252, %v3291
      %v3296 = vadd.f32 %v3253, %v3291
      %v3297 = vadd.f32 %v3254, %v3291
      %v3298 = vadd.f32 %v3255, %v3291
      %v3299 = vadd.f32 %v3256, %v3291
      %v3300 = vadd.f32 %v3257, %v3291
      %v3301 = vadd.f32 %v3258, %v3291
      %v3302 = vadd.f32 %v3259, %v3291
      %v3303 = vadd.f32 %v3260, %v3291
      %v3304 = vadd.f32 %v3261, %v3291
      %v3305 = vadd.f32 %v3262, %v3291
      %v3306 = vadd.f32 %v3263, %v3291
      %v3307 = vadd.f32 %v3264, %v3291
      %v3308 = vadd.f32 %v3265, %v3291
      %v3309 = vadd.f32 %v3266, %v3291
      %v3310 = vadd.f32 %v3267, %v3291
      %v3311 = vadd.f32 %v3268, %v3291
      %v3312 = vadd.f32 %v3269, %v3291
      %v3313 = vadd.f32 %v3270, %v3291
      %v3314 = vadd.f32 %v3271, %v3291
      %v3315 = vadd.f32 %v3272, %v3291
      %v3316 = vadd.f32 %v3273, %v3291
      %v3317 = vadd.f32 %v3274, %v3291
      %v3318 = vadd.f32 %v3275, %v3291
      %v3319 = vadd.f32 %v3276, %v3291
      %v3320 = vadd.f32 %v3277, %v3291
      %v3321 = vadd.f32 %v3278, %v3291
      %v3322 = vadd.f32 %v3279, %v3291
      %v3323 = vadd.f32 %v3280, %v3291
      %v3324 = vadd.f32 %v3281, %v3291
      %v3325 = vadd.f32 %v3282, %v3291
      %v3326 = vadd.f32 %v3283, %v3291
      %v3327 = vadd.f32 %v3284, %v3291
      %v3328 = vadd.f32 %v3285, %v3291
      %v3329 = vmax.f32 %v3293, 0.0
      %v3330 = vmax.f32 %v3294, 0.0
      %v3331 = vmax.f32 %v3295, 0.0
      %v3332 = vmax.f32 %v3296, 0.0
      %v3333 = vmax.f32 %v3297, 0.0
      %v3334 = vmax.f32 %v3298, 0.0
      %v3335 = vmax.f32 %v3299, 0.0
      %v3336 = vmax.f32 %v3300, 0.0
      %v3337 = vmax.f32 %v3301, 0.0
      %v3338 = vmax.f32 %v3302, 0.0
      %v3339 = vmax.f32 %v3303, 0.0
      %v3340 = vmax.f32 %v3304, 0.0
      %v3341 = vmax.f32 %v3305, 0.0
      %v3342 = vmax.f32 %v3306, 0.0
      %v3343 = vmax.f32 %v3307, 0.0
      %v3344 = vmax.f32 %v3308, 0.0
      %v3345 = vmax.f32 %v3309, 0.0
      %v3346 = vmax.f32 %v3310, 0.0
      %v3347 = vmax.f32 %v3311, 0.0
      %v3348 = vmax.f32 %v3312, 0.0
      %v3349 = vmax.f32 %v3313, 0.0
      %v3350 = vmax.f32 %v3314, 0.0
      %v3351 = vmax.f32 %v3315, 0.0
      %v3352 = vmax.f32 %v3316, 0.0
      %v3353 = vmax.f32 %v3317, 0.0
      %v3354 = vmax.f32 %v3318, 0.0
      %v3355 = vmax.f32 %v3319, 0.0
      %v3356 = vmax.f32 %v3320, 0.0
      %v3357 = vmax.f32 %v3321, 0.0
      %v3358 = vmax.f32 %v3322, 0.0
      %v3359 = vmax.f32 %v3323, 0.0
      %v3360 = vmax.f32 %v3324, 0.0
      %v3361 = vmax.f32 %v3325, 0.0
      %v3362 = vmax.f32 %v3326, 0.0
      %v3363 = vmax.f32 %v3327, 0.0
      %v3364 = vmax.f32 %v3328, 0.0
      %v3365 = vsel %vm1000, 1, 0
      %v3366 = vsel %vm1001, 1, 0
      %v3367 = vsel %vm1002, 1, 0
      %v3368 = vsel %vm1003, 1, 0
      %v3369 = vsel %vm1004, 1, 0
      %v3370 = vsel %vm1005, 1, 0
      %v3371 = vsel %vm1006, 1, 0
      %v3372 = vsel %vm1007, 1, 0
      %v3373 = vsel %vm1008, 1, 0
      %v3374 = vsel %vm1009, 1, 0
      %v3375 = vsel %vm1010, 1, 0
      %v3376 = vsel %vm1011, 1, 0
      %v3377 = vsel %vm1012, 1, 0
      %v3378 = vsel %vm1013, 1, 0
      %v3379 = vsel %vm1014, 1, 0
      %v3380 = vsel %vm1015, 1, 0
      %v3381 = vsel %vm1016, 1, 0
      %v3382 = vsel %vm1017, 1, 0
      %v3383 = vsel %vm1018, 1, 0
      %v3384 = vsel %vm1019, 1, 0
      %v3385 = vsel %vm1020, 1, 0
      %v3386 = vsel %vm1021, 1, 0
      %v3387 = vsel %vm1022, 1, 0
      %v3388 = vsel %vm1023, 1, 0
      %v3389 = vsel %vm1024, 1, 0
      %v3390 = vsel %vm1025, 1, 0
      %v3391 = vsel %vm1026, 1, 0
      %v3392 = vsel %vm1027, 1, 0
      %v3393 = vsel %vm1028, 1, 0
      %v3394 = vsel %vm1029, 1, 0
      %v3395 = vsel %vm1030, 1, 0
      %v3396 = vsel %vm1031, 1, 0
      %v3397 = vsel %vm1032, 1, 0
      %v3398 = vsel %vm1033, 1, 0
      %v3399 = vsel %vm1034, 1, 0
      %v3400 = vsel %vm1035, 1, 0
      %vm3401 = vcmp.eq.s32.totalorder %v3365, 1
      %vm3402 = vcmp.eq.s32.totalorder %v3366, 1
      %vm3403 = vcmp.eq.s32.totalorder %v3367, 1
      %vm3404 = vcmp.eq.s32.totalorder %v3368, 1
      %vm3405 = vcmp.eq.s32.totalorder %v3369, 1
      %vm3406 = vcmp.eq.s32.totalorder %v3370, 1
      %vm3407 = vcmp.eq.s32.totalorder %v3371, 1
      %vm3408 = vcmp.eq.s32.totalorder %v3372, 1
      %vm3409 = vcmp.eq.s32.totalorder %v3373, 1
      %vm3410 = vcmp.eq.s32.totalorder %v3374, 1
      %vm3411 = vcmp.eq.s32.totalorder %v3375, 1
      %vm3412 = vcmp.eq.s32.totalorder %v3376, 1
      %vm3413 = vcmp.eq.s32.totalorder %v3377, 1
      %vm3414 = vcmp.eq.s32.totalorder %v3378, 1
      %vm3415 = vcmp.eq.s32.totalorder %v3379, 1
      %vm3416 = vcmp.eq.s32.totalorder %v3380, 1
      %vm3417 = vcmp.eq.s32.totalorder %v3381, 1
      %vm3418 = vcmp.eq.s32.totalorder %v3382, 1
      %vm3419 = vcmp.eq.s32.totalorder %v3383, 1
      %vm3420 = vcmp.eq.s32.totalorder %v3384, 1
      %vm3421 = vcmp.eq.s32.totalorder %v3385, 1
      %vm3422 = vcmp.eq.s32.totalorder %v3386, 1
      %vm3423 = vcmp.eq.s32.totalorder %v3387, 1
      %vm3424 = vcmp.eq.s32.totalorder %v3388, 1
      %vm3425 = vcmp.eq.s32.totalorder %v3389, 1
      %vm3426 = vcmp.eq.s32.totalorder %v3390, 1
      %vm3427 = vcmp.eq.s32.totalorder %v3391, 1
      %vm3428 = vcmp.eq.s32.totalorder %v3392, 1
      %vm3429 = vcmp.eq.s32.totalorder %v3393, 1
      %vm3430 = vcmp.eq.s32.totalorder %v3394, 1
      %vm3431 = vcmp.eq.s32.totalorder %v3395, 1
      %vm3432 = vcmp.eq.s32.totalorder %v3396, 1
      %vm3433 = vcmp.eq.s32.totalorder %v3397, 1
      %vm3434 = vcmp.eq.s32.totalorder %v3398, 1
      %vm3435 = vcmp.eq.s32.totalorder %v3399, 1
      %vm3436 = vcmp.eq.s32.totalorder %v3400, 1
      %v3437 = vsel %vm3401, %v3329, 0.0
      %v3438 = vsel %vm3402, %v3330, 0.0
      %v3439 = vsel %vm3403, %v3331, 0.0
      %v3440 = vsel %vm3404, %v3332, 0.0
      %v3441 = vsel %vm3405, %v3333, 0.0
      %v3442 = vsel %vm3406, %v3334, 0.0
      %v3443 = vsel %vm3407, %v3335, 0.0
      %v3444 = vsel %vm3408, %v3336, 0.0
      %v3445 = vsel %vm3409, %v3337, 0.0
      %v3446 = vsel %vm3410, %v3338, 0.0
      %v3447 = vsel %vm3411, %v3339, 0.0
      %v3448 = vsel %vm3412, %v3340, 0.0
      %v3449 = vsel %vm3413, %v3341, 0.0
      %v3450 = vsel %vm3414, %v3342, 0.0
      %v3451 = vsel %vm3415, %v3343, 0.0
      %v3452 = vsel %vm3416, %v3344, 0.0
      %v3453 = vsel %vm3417, %v3345, 0.0
      %v3454 = vsel %vm3418, %v3346, 0.0
      %v3455 = vsel %vm3419, %v3347, 0.0
      %v3456 = vsel %vm3420, %v3348, 0.0
      %v3457 = vsel %vm3421, %v3349, 0.0
      %v3458 = vsel %vm3422, %v3350, 0.0
      %v3459 = vsel %vm3423, %v3351, 0.0
      %v3460 = vsel %vm3424, %v3352, 0.0
      %v3461 = vsel %vm3425, %v3353, 0.0
      %v3462 = vsel %vm3426, %v3354, 0.0
      %v3463 = vsel %vm3427, %v3355, 0.0
      %v3464 = vsel %vm3428, %v3356, 0.0
      %v3465 = vsel %vm3429, %v3357, 0.0
      %v3466 = vsel %vm3430, %v3358, 0.0
      %v3467 = vsel %vm3431, %v3359, 0.0
      %v3468 = vsel %vm3432, %v3360, 0.0
      %v3469 = vsel %vm3433, %v3361, 0.0
      %v3470 = vsel %vm3434, %v3362, 0.0
      %v3471 = vsel %vm3435, %v3363, 0.0
      %v3472 = vsel %vm3436, %v3364, 0.0
      %3473 = vst.msk [vmem:[#allocation3] sm:$0xff] %vm279, 0.0
      %3474 = vst.msk [vmem:[#allocation3 + $0x8] sm:$0xff] %vm279, 0.0
      %vm3475 = vcmask 26624
      %3476 = vst.msk [vmem:[#allocation3 + $0x10] sm:$0x7] %vm3475, 0.0
      %3477 = vst.msk [vmem:[#allocation3 + $0x133] sm:$0xff] %vm279, 0.0
      %3478 = vst.msk [vmem:[#allocation3 + $0x13b] sm:$0xff] %vm279, 0.0
      %3479 = vst.msk [vmem:[#allocation3 + $0x143] sm:$0xff] %vm279, 0.0
      %vm3480 = vcmask 24576
      %3481 = vst.msk [vmem:[#allocation3 + $0x14b] sm:$0x1] %vm3480, 0.0
      %3482 = vst.msk [vmem:[#allocation3 + $0x13] sm:$0xff] %vm279, %v3437
      %3483 = vst.msk [vmem:[#allocation3 + $0x1b] sm:$0xff] %vm279, %v3438
      %3484 = vst.msk [vmem:[#allocation3 + $0x23] sm:$0xff] %vm279, %v3439
      %3485 = vst.msk [vmem:[#allocation3 + $0x2b] sm:$0xff] %vm279, %v3440
      %3486 = vst.msk [vmem:[#allocation3 + $0x33] sm:$0xff] %vm279, %v3441
      %3487 = vst.msk [vmem:[#allocation3 + $0x3b] sm:$0xff] %vm279, %v3442
      %3488 = vst.msk [vmem:[#allocation3 + $0x43] sm:$0xff] %vm279, %v3443
      %3489 = vst.msk [vmem:[#allocation3 + $0x4b] sm:$0xff] %vm279, %v3444
      %3490 = vst.msk [vmem:[#allocation3 + $0x53] sm:$0xff] %vm279, %v3445
      %3491 = vst.msk [vmem:[#allocation3 + $0x5b] sm:$0xff] %vm279, %v3446
      %3492 = vst.msk [vmem:[#allocation3 + $0x63] sm:$0xff] %vm279, %v3447
      %3493 = vst.msk [vmem:[#allocation3 + $0x6b] sm:$0xff] %vm279, %v3448
      %3494 = vst.msk [vmem:[#allocation3 + $0x73] sm:$0xff] %vm279, %v3449
      %3495 = vst.msk [vmem:[#allocation3 + $0x7b] sm:$0xff] %vm279, %v3450
      %3496 = vst.msk [vmem:[#allocation3 + $0x83] sm:$0xff] %vm279, %v3451
      %3497 = vst.msk [vmem:[#allocation3 + $0x8b] sm:$0xff] %vm279, %v3452
      %3498 = vst.msk [vmem:[#allocation3 + $0x93] sm:$0xff] %vm279, %v3453
      %3499 = vst.msk [vmem:[#allocation3 + $0x9b] sm:$0xff] %vm279, %v3454
      %3500 = vst.msk [vmem:[#allocation3 + $0xa3] sm:$0xff] %vm279, %v3455
      %3501 = vst.msk [vmem:[#allocation3 + $0xab] sm:$0xff] %vm279, %v3456
      %3502 = vst.msk [vmem:[#allocation3 + $0xb3] sm:$0xff] %vm279, %v3457
      %3503 = vst.msk [vmem:[#allocation3 + $0xbb] sm:$0xff] %vm279, %v3458
      %3504 = vst.msk [vmem:[#allocation3 + $0xc3] sm:$0xff] %vm279, %v3459
      %3505 = vst.msk [vmem:[#allocation3 + $0xcb] sm:$0xff] %vm279, %v3460
      %3506 = vst.msk [vmem:[#allocation3 + $0xd3] sm:$0xff] %vm279, %v3461
      %3507 = vst.msk [vmem:[#allocation3 + $0xdb] sm:$0xff] %vm279, %v3462
      %3508 = vst.msk [vmem:[#allocation3 + $0xe3] sm:$0xff] %vm279, %v3463
      %3509 = vst.msk [vmem:[#allocation3 + $0xeb] sm:$0xff] %vm279, %v3464
      %3510 = vst.msk [vmem:[#allocation3 + $0xf3] sm:$0xff] %vm279, %v3465
      %3511 = vst.msk [vmem:[#allocation3 + $0xfb] sm:$0xff] %vm279, %v3466
      %3512 = vst.msk [vmem:[#allocation3 + $0x103] sm:$0xff] %vm279, %v3467
      %3513 = vst.msk [vmem:[#allocation3 + $0x10b] sm:$0xff] %vm279, %v3468
      %3514 = vst.msk [vmem:[#allocation3 + $0x113] sm:$0xff] %vm279, %v3469
      %3515 = vst.msk [vmem:[#allocation3 + $0x11b] sm:$0xff] %vm279, %v3470
      %3516 = vst.msk [vmem:[#allocation3 + $0x123] sm:$0xff] %vm279, %v3471
      %3517 = vst.msk [vmem:[#allocation3 + $0x12b] sm:$0xff] %vm279, %v3472
      %v3518 = vld [vmem:[#allocation3] sm:$0xff]
      %v3519 = vld [vmem:[#allocation3 + $0x8] sm:$0xff]
      %v3520 = vld [vmem:[#allocation3 + $0x10] sm:$0xff]
      %v3521 = vld [vmem:[#allocation3 + $0x18] sm:$0xff]
      %v3522 = vld [vmem:[#allocation3 + $0x20] sm:$0xff]
      %v3523 = vld [vmem:[#allocation3 + $0x28] sm:$0xff]
      %v3524 = vld [vmem:[#allocation3 + $0x30] sm:$0xff]
      %v3525 = vld [vmem:[#allocation3 + $0x38] sm:$0xff]
      %v3526 = vld [vmem:[#allocation3 + $0x40] sm:$0xff]
      %v3527 = vld [vmem:[#allocation3 + $0x48] sm:$0xff]
      %v3528 = vld [vmem:[#allocation3 + $0x50] sm:$0xff]
      %v3529 = vld [vmem:[#allocation3 + $0x58] sm:$0xff]
      %v3530 = vld [vmem:[#allocation3 + $0x60] sm:$0xff]
      %v3531 = vld [vmem:[#allocation3 + $0x68] sm:$0xff]
      %v3532 = vld [vmem:[#allocation3 + $0x70] sm:$0xff]
      %v3533 = vld [vmem:[#allocation3 + $0x78] sm:$0xff]
      %v3534 = vld [vmem:[#allocation3 + $0x80] sm:$0xff]
      %v3535 = vld [vmem:[#allocation3 + $0x88] sm:$0xff]
      %v3536 = vld [vmem:[#allocation3 + $0x90] sm:$0xff]
      %v3537 = vld [vmem:[#allocation3 + $0x98] sm:$0xff]
      %v3538 = vld [vmem:[#allocation3 + $0xa0] sm:$0xff]
      %v3539 = vld [vmem:[#allocation3 + $0xa8] sm:$0xff]
      %v3540 = vld [vmem:[#allocation3 + $0xb0] sm:$0xff]
      %v3541 = vld [vmem:[#allocation3 + $0xb8] sm:$0xff]
      %v3542 = vld [vmem:[#allocation3 + $0xc0] sm:$0xff]
      %v3543 = vld [vmem:[#allocation3 + $0xc8] sm:$0xff]
      %v3544 = vld [vmem:[#allocation3 + $0xd0] sm:$0xff]
      %v3545 = vld [vmem:[#allocation3 + $0xd8] sm:$0xff]
      %v3546 = vld [vmem:[#allocation3 + $0xe0] sm:$0xff]
      %v3547 = vld [vmem:[#allocation3 + $0xe8] sm:$0xff]
      %v3548 = vld [vmem:[#allocation3 + $0xf0] sm:$0xff]
      %v3549 = vld [vmem:[#allocation3 + $0xf8] sm:$0xff]
      %v3550 = vld [vmem:[#allocation3 + $0x100] sm:$0xff]
      %v3551 = vld [vmem:[#allocation3 + $0x108] sm:$0xff]
      %v3552 = vld [vmem:[#allocation3 + $0x110] sm:$0xff]
      %v3553 = vld [vmem:[#allocation3 + $0x118] sm:$0xff]
      %3554 = vst.msk [vmem:[#allocation4] sm:$0xff] %vm279, %v3518
      %3555 = vst.msk [vmem:[#allocation4 + $0x8] sm:$0xff] %vm279, %v3519
      %3556 = vst.msk [vmem:[#allocation4 + $0x10] sm:$0xff] %vm279, %v3520
      %3557 = vst.msk [vmem:[#allocation4 + $0x18] sm:$0xff] %vm279, %v3521
      %3558 = vst.msk [vmem:[#allocation4 + $0x20] sm:$0xff] %vm279, %v3522
      %3559 = vst.msk [vmem:[#allocation4 + $0x28] sm:$0xff] %vm279, %v3523
      %3560 = vst.msk [vmem:[#allocation4 + $0x30] sm:$0xff] %vm279, %v3524
      %3561 = vst.msk [vmem:[#allocation4 + $0x38] sm:$0xff] %vm279, %v3525
      %3562 = vst.msk [vmem:[#allocation4 + $0x40] sm:$0xff] %vm279, %v3526
      %3563 = vst.msk [vmem:[#allocation4 + $0x48] sm:$0xff] %vm279, %v3527
      %3564 = vst.msk [vmem:[#allocation4 + $0x50] sm:$0xff] %vm279, %v3528
      %3565 = vst.msk [vmem:[#allocation4 + $0x58] sm:$0xff] %vm279, %v3529
      %3566 = vst.msk [vmem:[#allocation4 + $0x60] sm:$0xff] %vm279, %v3530
      %3567 = vst.msk [vmem:[#allocation4 + $0x68] sm:$0xff] %vm279, %v3531
      %3568 = vst.msk [vmem:[#allocation4 + $0x70] sm:$0xff] %vm279, %v3532
      %3569 = vst.msk [vmem:[#allocation4 + $0x78] sm:$0xff] %vm279, %v3533
      %3570 = vst.msk [vmem:[#allocation4 + $0x80] sm:$0xff] %vm279, %v3534
      %3571 = vst.msk [vmem:[#allocation4 + $0x88] sm:$0xff] %vm279, %v3535
      %3572 = vst.msk [vmem:[#allocation4 + $0x90] sm:$0xff] %vm279, %v3536
      %3573 = vst.msk [vmem:[#allocation4 + $0x98] sm:$0xff] %vm279, %v3537
      %3574 = vst.msk [vmem:[#allocation4 + $0xa0] sm:$0xff] %vm279, %v3538
      %3575 = vst.msk [vmem:[#allocation4 + $0xa8] sm:$0xff] %vm279, %v3539
      %3576 = vst.msk [vmem:[#allocation4 + $0xb0] sm:$0xff] %vm279, %v3540
      %3577 = vst.msk [vmem:[#allocation4 + $0xb8] sm:$0xff] %vm279, %v3541
      %3578 = vst.msk [vmem:[#allocation4 + $0xc0] sm:$0xff] %vm279, %v3542
      %3579 = vst.msk [vmem:[#allocation4 + $0xc8] sm:$0xff] %vm279, %v3543
      %3580 = vst.msk [vmem:[#allocation4 + $0xd0] sm:$0xff] %vm279, %v3544
      %3581 = vst.msk [vmem:[#allocation4 + $0xd8] sm:$0xff] %vm279, %v3545
      %3582 = vst.msk [vmem:[#allocation4 + $0xe0] sm:$0xff] %vm279, %v3546
      %3583 = vst.msk [vmem:[#allocation4 + $0xe8] sm:$0xff] %vm279, %v3547
      %3584 = vst.msk [vmem:[#allocation4 + $0xf0] sm:$0xff] %vm279, %v3548
      %3585 = vst.msk [vmem:[#allocation4 + $0xf8] sm:$0xff] %vm279, %v3549
      %3586 = vst.msk [vmem:[#allocation4 + $0x100] sm:$0xff] %vm279, %v3550
      %3587 = vst.msk [vmem:[#allocation4 + $0x108] sm:$0xff] %vm279, %v3551
      %3588 = vst.msk [vmem:[#allocation4 + $0x110] sm:$0xff] %vm279, %v3552
      %3589 = vst.msk [vmem:[#allocation4 + $0x118] sm:$0xff] %vm279, %v3553
      %v3590 = vld [vmem:[#allocation3 + $0x1] sm:$0xff]
      %v3591 = vld [vmem:[#allocation3 + $0x9] sm:$0xff]
      %v3592 = vld [vmem:[#allocation3 + $0x11] sm:$0xff]
      %v3593 = vld [vmem:[#allocation3 + $0x19] sm:$0xff]
      %v3594 = vld [vmem:[#allocation3 + $0x21] sm:$0xff]
      %v3595 = vld [vmem:[#allocation3 + $0x29] sm:$0xff]
      %v3596 = vld [vmem:[#allocation3 + $0x31] sm:$0xff]
      %v3597 = vld [vmem:[#allocation3 + $0x39] sm:$0xff]
      %v3598 = vld [vmem:[#allocation3 + $0x41] sm:$0xff]
      %v3599 = vld [vmem:[#allocation3 + $0x49] sm:$0xff]
      %v3600 = vld [vmem:[#allocation3 + $0x51] sm:$0xff]
      %v3601 = vld [vmem:[#allocation3 + $0x59] sm:$0xff]
      %v3602 = vld [vmem:[#allocation3 + $0x61] sm:$0xff]
      %v3603 = vld [vmem:[#allocation3 + $0x69] sm:$0xff]
      %v3604 = vld [vmem:[#allocation3 + $0x71] sm:$0xff]
      %v3605 = vld [vmem:[#allocation3 + $0x79] sm:$0xff]
      %v3606 = vld [vmem:[#allocation3 + $0x81] sm:$0xff]
      %v3607 = vld [vmem:[#allocation3 + $0x89] sm:$0xff]
      %v3608 = vld [vmem:[#allocation3 + $0x91] sm:$0xff]
      %v3609 = vld [vmem:[#allocation3 + $0x99] sm:$0xff]
      %v3610 = vld [vmem:[#allocation3 + $0xa1] sm:$0xff]
      %v3611 = vld [vmem:[#allocation3 + $0xa9] sm:$0xff]
      %v3612 = vld [vmem:[#allocation3 + $0xb1] sm:$0xff]
      %v3613 = vld [vmem:[#allocation3 + $0xb9] sm:$0xff]
      %v3614 = vld [vmem:[#allocation3 + $0xc1] sm:$0xff]
      %v3615 = vld [vmem:[#allocation3 + $0xc9] sm:$0xff]
      %v3616 = vld [vmem:[#allocation3 + $0xd1] sm:$0xff]
      %v3617 = vld [vmem:[#allocation3 + $0xd9] sm:$0xff]
      %v3618 = vld [vmem:[#allocation3 + $0xe1] sm:$0xff]
      %v3619 = vld [vmem:[#allocation3 + $0xe9] sm:$0xff]
      %v3620 = vld [vmem:[#allocation3 + $0xf1] sm:$0xff]
      %v3621 = vld [vmem:[#allocation3 + $0xf9] sm:$0xff]
      %v3622 = vld [vmem:[#allocation3 + $0x101] sm:$0xff]
      %v3623 = vld [vmem:[#allocation3 + $0x109] sm:$0xff]
      %v3624 = vld [vmem:[#allocation3 + $0x111] sm:$0xff]
      %v3625 = vld [vmem:[#allocation3 + $0x119] sm:$0xff]
      %3662 = vrot.lane.b32.xlu0 %v3590, 4
      %v3663 = vpop.permute.xlu0 %3662
      %3664 = vrot.lane.b32.xlu0 %v3591, 4
      %v3665 = vpop.permute.xlu0 %3664
      %3666 = vrot.lane.b32.xlu0 %v3592, 4
      %v3667 = vpop.permute.xlu0 %3666
      %3668 = vrot.lane.b32.xlu0 %v3593, 4
      %v3669 = vpop.permute.xlu0 %3668
      %3670 = vrot.lane.b32.xlu0 %v3594, 4
      %v3671 = vpop.permute.xlu0 %3670
      %3672 = vrot.lane.b32.xlu0 %v3595, 4
      %v3673 = vpop.permute.xlu0 %3672
      %3674 = vrot.lane.b32.xlu0 %v3596, 4
      %v3675 = vpop.permute.xlu0 %3674
      %3676 = vrot.lane.b32.xlu0 %v3597, 4
      %v3677 = vpop.permute.xlu0 %3676
      %3678 = vrot.lane.b32.xlu0 %v3598, 4
      %v3679 = vpop.permute.xlu0 %3678
      %3680 = vrot.lane.b32.xlu0 %v3599, 4
      %v3681 = vpop.permute.xlu0 %3680
      %3682 = vrot.lane.b32.xlu0 %v3600, 4
      %v3683 = vpop.permute.xlu0 %3682
      %3684 = vrot.lane.b32.xlu0 %v3601, 4
      %v3685 = vpop.permute.xlu0 %3684
      %3686 = vrot.lane.b32.xlu0 %v3602, 4
      %v3687 = vpop.permute.xlu0 %3686
      %3688 = vrot.lane.b32.xlu0 %v3603, 4
      %v3689 = vpop.permute.xlu0 %3688
      %3690 = vrot.lane.b32.xlu0 %v3604, 4
      %v3691 = vpop.permute.xlu0 %3690
      %3692 = vrot.lane.b32.xlu0 %v3605, 4
      %v3693 = vpop.permute.xlu0 %3692
      %3694 = vrot.lane.b32.xlu0 %v3606, 4
      %v3695 = vpop.permute.xlu0 %3694
      %3696 = vrot.lane.b32.xlu0 %v3607, 4
      %v3697 = vpop.permute.xlu0 %3696
      %3698 = vrot.lane.b32.xlu0 %v3608, 4
      %v3699 = vpop.permute.xlu0 %3698
      %3700 = vrot.lane.b32.xlu0 %v3609, 4
      %v3701 = vpop.permute.xlu0 %3700
      %3702 = vrot.lane.b32.xlu0 %v3610, 4
      %v3703 = vpop.permute.xlu0 %3702
      %3704 = vrot.lane.b32.xlu0 %v3611, 4
      %v3705 = vpop.permute.xlu0 %3704
      %3706 = vrot.lane.b32.xlu0 %v3612, 4
      %v3707 = vpop.permute.xlu0 %3706
      %3708 = vrot.lane.b32.xlu0 %v3613, 4
      %v3709 = vpop.permute.xlu0 %3708
      %3710 = vrot.lane.b32.xlu0 %v3614, 4
      %v3711 = vpop.permute.xlu0 %3710
      %3712 = vrot.lane.b32.xlu0 %v3615, 4
      %v3713 = vpop.permute.xlu0 %3712
      %3714 = vrot.lane.b32.xlu0 %v3616, 4
      %v3715 = vpop.permute.xlu0 %3714
      %3716 = vrot.lane.b32.xlu0 %v3617, 4
      %v3717 = vpop.permute.xlu0 %3716
      %3718 = vrot.lane.b32.xlu0 %v3618, 4
      %v3719 = vpop.permute.xlu0 %3718
      %3720 = vrot.lane.b32.xlu0 %v3619, 4
      %v3721 = vpop.permute.xlu0 %3720
      %3722 = vrot.lane.b32.xlu0 %v3620, 4
      %v3723 = vpop.permute.xlu0 %3722
      %3724 = vrot.lane.b32.xlu0 %v3621, 4
      %v3725 = vpop.permute.xlu0 %3724
      %3726 = vrot.lane.b32.xlu0 %v3622, 4
      %v3727 = vpop.permute.xlu0 %3726
      %3728 = vrot.lane.b32.xlu0 %v3623, 4
      %v3729 = vpop.permute.xlu0 %3728
      %3730 = vrot.lane.b32.xlu0 %v3624, 4
      %v3731 = vpop.permute.xlu0 %3730
      %3732 = vrot.lane.b32.xlu0 %v3625, 4
      %v3733 = vpop.permute.xlu0 %3732
      %3770 = vst.msk [vmem:[#allocation4] sm:$0xff] %vm1288, %v3663
      %3771 = vst.msk [vmem:[#allocation4 + $0x8] sm:$0xff] %vm1288, %v3665
      %3772 = vst.msk [vmem:[#allocation4 + $0x10] sm:$0xff] %vm1288, %v3667
      %3773 = vst.msk [vmem:[#allocation4 + $0x18] sm:$0xff] %vm1288, %v3669
      %3774 = vst.msk [vmem:[#allocation4 + $0x20] sm:$0xff] %vm1288, %v3671
      %3775 = vst.msk [vmem:[#allocation4 + $0x28] sm:$0xff] %vm1288, %v3673
      %3776 = vst.msk [vmem:[#allocation4 + $0x30] sm:$0xff] %vm1288, %v3675
      %3777 = vst.msk [vmem:[#allocation4 + $0x38] sm:$0xff] %vm1288, %v3677
      %3778 = vst.msk [vmem:[#allocation4 + $0x40] sm:$0xff] %vm1288, %v3679
      %3779 = vst.msk [vmem:[#allocation4 + $0x48] sm:$0xff] %vm1288, %v3681
      %3780 = vst.msk [vmem:[#allocation4 + $0x50] sm:$0xff] %vm1288, %v3683
      %3781 = vst.msk [vmem:[#allocation4 + $0x58] sm:$0xff] %vm1288, %v3685
      %3782 = vst.msk [vmem:[#allocation4 + $0x60] sm:$0xff] %vm1288, %v3687
      %3783 = vst.msk [vmem:[#allocation4 + $0x68] sm:$0xff] %vm1288, %v3689
      %3784 = vst.msk [vmem:[#allocation4 + $0x70] sm:$0xff] %vm1288, %v3691
      %3785 = vst.msk [vmem:[#allocation4 + $0x78] sm:$0xff] %vm1288, %v3693
      %3786 = vst.msk [vmem:[#allocation4 + $0x80] sm:$0xff] %vm1288, %v3695
      %3787 = vst.msk [vmem:[#allocation4 + $0x88] sm:$0xff] %vm1288, %v3697
      %3788 = vst.msk [vmem:[#allocation4 + $0x90] sm:$0xff] %vm1288, %v3699
      %3789 = vst.msk [vmem:[#allocation4 + $0x98] sm:$0xff] %vm1288, %v3701
      %3790 = vst.msk [vmem:[#allocation4 + $0xa0] sm:$0xff] %vm1288, %v3703
      %3791 = vst.msk [vmem:[#allocation4 + $0xa8] sm:$0xff] %vm1288, %v3705
      %3792 = vst.msk [vmem:[#allocation4 + $0xb0] sm:$0xff] %vm1288, %v3707
      %3793 = vst.msk [vmem:[#allocation4 + $0xb8] sm:$0xff] %vm1288, %v3709
      %3794 = vst.msk [vmem:[#allocation4 + $0xc0] sm:$0xff] %vm1288, %v3711
      %3795 = vst.msk [vmem:[#allocation4 + $0xc8] sm:$0xff] %vm1288, %v3713
      %3796 = vst.msk [vmem:[#allocation4 + $0xd0] sm:$0xff] %vm1288, %v3715
      %3797 = vst.msk [vmem:[#allocation4 + $0xd8] sm:$0xff] %vm1288, %v3717
      %3798 = vst.msk [vmem:[#allocation4 + $0xe0] sm:$0xff] %vm1288, %v3719
      %3799 = vst.msk [vmem:[#allocation4 + $0xe8] sm:$0xff] %vm1288, %v3721
      %3800 = vst.msk [vmem:[#allocation4 + $0xf0] sm:$0xff] %vm1288, %v3723
      %3801 = vst.msk [vmem:[#allocation4 + $0xf8] sm:$0xff] %vm1288, %v3725
      %3802 = vst.msk [vmem:[#allocation4 + $0x100] sm:$0xff] %vm1288, %v3727
      %3803 = vst.msk [vmem:[#allocation4 + $0x108] sm:$0xff] %vm1288, %v3729
      %3804 = vst.msk [vmem:[#allocation4 + $0x110] sm:$0xff] %vm1288, %v3731
      %3805 = vst.msk [vmem:[#allocation4 + $0x118] sm:$0xff] %vm1288, %v3733
      %v3806 = vld [vmem:[#allocation3 + $0x2] sm:$0xff]
      %v3807 = vld [vmem:[#allocation3 + $0xa] sm:$0xff]
      %v3808 = vld [vmem:[#allocation3 + $0x12] sm:$0xff]
      %v3809 = vld [vmem:[#allocation3 + $0x1a] sm:$0xff]
      %v3810 = vld [vmem:[#allocation3 + $0x22] sm:$0xff]
      %v3811 = vld [vmem:[#allocation3 + $0x2a] sm:$0xff]
      %v3812 = vld [vmem:[#allocation3 + $0x32] sm:$0xff]
      %v3813 = vld [vmem:[#allocation3 + $0x3a] sm:$0xff]
      %v3814 = vld [vmem:[#allocation3 + $0x42] sm:$0xff]
      %v3815 = vld [vmem:[#allocation3 + $0x4a] sm:$0xff]
      %v3816 = vld [vmem:[#allocation3 + $0x52] sm:$0xff]
      %v3817 = vld [vmem:[#allocation3 + $0x5a] sm:$0xff]
      %v3818 = vld [vmem:[#allocation3 + $0x62] sm:$0xff]
      %v3819 = vld [vmem:[#allocation3 + $0x6a] sm:$0xff]
      %v3820 = vld [vmem:[#allocation3 + $0x72] sm:$0xff]
      %v3821 = vld [vmem:[#allocation3 + $0x7a] sm:$0xff]
      %v3822 = vld [vmem:[#allocation3 + $0x82] sm:$0xff]
      %v3823 = vld [vmem:[#allocation3 + $0x8a] sm:$0xff]
      %v3824 = vld [vmem:[#allocation3 + $0x92] sm:$0xff]
      %v3825 = vld [vmem:[#allocation3 + $0x9a] sm:$0xff]
      %v3826 = vld [vmem:[#allocation3 + $0xa2] sm:$0xff]
      %v3827 = vld [vmem:[#allocation3 + $0xaa] sm:$0xff]
      %v3828 = vld [vmem:[#allocation3 + $0xb2] sm:$0xff]
      %v3829 = vld [vmem:[#allocation3 + $0xba] sm:$0xff]
      %v3830 = vld [vmem:[#allocation3 + $0xc2] sm:$0xff]
      %v3831 = vld [vmem:[#allocation3 + $0xca] sm:$0xff]
      %v3832 = vld [vmem:[#allocation3 + $0xd2] sm:$0xff]
      %v3833 = vld [vmem:[#allocation3 + $0xda] sm:$0xff]
      %v3834 = vld [vmem:[#allocation3 + $0xe2] sm:$0xff]
      %v3835 = vld [vmem:[#allocation3 + $0xea] sm:$0xff]
      %v3836 = vld [vmem:[#allocation3 + $0xf2] sm:$0xff]
      %v3837 = vld [vmem:[#allocation3 + $0xfa] sm:$0xff]
      %v3838 = vld [vmem:[#allocation3 + $0x102] sm:$0xff]
      %v3839 = vld [vmem:[#allocation3 + $0x10a] sm:$0xff]
      %v3840 = vld [vmem:[#allocation3 + $0x112] sm:$0xff]
      %v3841 = vld [vmem:[#allocation3 + $0x11a] sm:$0xff]
      %3878 = vrot.lane.b32.xlu0 %v3806, 8
      %v3879 = vpop.permute.xlu0 %3878
      %3880 = vrot.lane.b32.xlu0 %v3807, 8
      %v3881 = vpop.permute.xlu0 %3880
      %3882 = vrot.lane.b32.xlu0 %v3808, 8
      %v3883 = vpop.permute.xlu0 %3882
      %3884 = vrot.lane.b32.xlu0 %v3809, 8
      %v3885 = vpop.permute.xlu0 %3884
      %3886 = vrot.lane.b32.xlu0 %v3810, 8
      %v3887 = vpop.permute.xlu0 %3886
      %3888 = vrot.lane.b32.xlu0 %v3811, 8
      %v3889 = vpop.permute.xlu0 %3888
      %3890 = vrot.lane.b32.xlu0 %v3812, 8
      %v3891 = vpop.permute.xlu0 %3890
      %3892 = vrot.lane.b32.xlu0 %v3813, 8
      %v3893 = vpop.permute.xlu0 %3892
      %3894 = vrot.lane.b32.xlu0 %v3814, 8
      %v3895 = vpop.permute.xlu0 %3894
      %3896 = vrot.lane.b32.xlu0 %v3815, 8
      %v3897 = vpop.permute.xlu0 %3896
      %3898 = vrot.lane.b32.xlu0 %v3816, 8
      %v3899 = vpop.permute.xlu0 %3898
      %3900 = vrot.lane.b32.xlu0 %v3817, 8
      %v3901 = vpop.permute.xlu0 %3900
      %3902 = vrot.lane.b32.xlu0 %v3818, 8
      %v3903 = vpop.permute.xlu0 %3902
      %3904 = vrot.lane.b32.xlu0 %v3819, 8
      %v3905 = vpop.permute.xlu0 %3904
      %3906 = vrot.lane.b32.xlu0 %v3820, 8
      %v3907 = vpop.permute.xlu0 %3906
      %3908 = vrot.lane.b32.xlu0 %v3821, 8
      %v3909 = vpop.permute.xlu0 %3908
      %3910 = vrot.lane.b32.xlu0 %v3822, 8
      %v3911 = vpop.permute.xlu0 %3910
      %3912 = vrot.lane.b32.xlu0 %v3823, 8
      %v3913 = vpop.permute.xlu0 %3912
      %3914 = vrot.lane.b32.xlu0 %v3824, 8
      %v3915 = vpop.permute.xlu0 %3914
      %3916 = vrot.lane.b32.xlu0 %v3825, 8
      %v3917 = vpop.permute.xlu0 %3916
      %3918 = vrot.lane.b32.xlu0 %v3826, 8
      %v3919 = vpop.permute.xlu0 %3918
      %3920 = vrot.lane.b32.xlu0 %v3827, 8
      %v3921 = vpop.permute.xlu0 %3920
      %3922 = vrot.lane.b32.xlu0 %v3828, 8
      %v3923 = vpop.permute.xlu0 %3922
      %3924 = vrot.lane.b32.xlu0 %v3829, 8
      %v3925 = vpop.permute.xlu0 %3924
      %3926 = vrot.lane.b32.xlu0 %v3830, 8
      %v3927 = vpop.permute.xlu0 %3926
      %3928 = vrot.lane.b32.xlu0 %v3831, 8
      %v3929 = vpop.permute.xlu0 %3928
      %3930 = vrot.lane.b32.xlu0 %v3832, 8
      %v3931 = vpop.permute.xlu0 %3930
      %3932 = vrot.lane.b32.xlu0 %v3833, 8
      %v3933 = vpop.permute.xlu0 %3932
      %3934 = vrot.lane.b32.xlu0 %v3834, 8
      %v3935 = vpop.permute.xlu0 %3934
      %3936 = vrot.lane.b32.xlu0 %v3835, 8
      %v3937 = vpop.permute.xlu0 %3936
      %3938 = vrot.lane.b32.xlu0 %v3836, 8
      %v3939 = vpop.permute.xlu0 %3938
      %3940 = vrot.lane.b32.xlu0 %v3837, 8
      %v3941 = vpop.permute.xlu0 %3940
      %3942 = vrot.lane.b32.xlu0 %v3838, 8
      %v3943 = vpop.permute.xlu0 %3942
      %3944 = vrot.lane.b32.xlu0 %v3839, 8
      %v3945 = vpop.permute.xlu0 %3944
      %3946 = vrot.lane.b32.xlu0 %v3840, 8
      %v3947 = vpop.permute.xlu0 %3946
      %3948 = vrot.lane.b32.xlu0 %v3841, 8
      %v3949 = vpop.permute.xlu0 %3948
      %3986 = vst.msk [vmem:[#allocation4] sm:$0xff] %vm1505, %v3879
      %3987 = vst.msk [vmem:[#allocation4 + $0x8] sm:$0xff] %vm1505, %v3881
      %3988 = vst.msk [vmem:[#allocation4 + $0x10] sm:$0xff] %vm1505, %v3883
      %3989 = vst.msk [vmem:[#allocation4 + $0x18] sm:$0xff] %vm1505, %v3885
      %3990 = vst.msk [vmem:[#allocation4 + $0x20] sm:$0xff] %vm1505, %v3887
      %3991 = vst.msk [vmem:[#allocation4 + $0x28] sm:$0xff] %vm1505, %v3889
      %3992 = vst.msk [vmem:[#allocation4 + $0x30] sm:$0xff] %vm1505, %v3891
      %3993 = vst.msk [vmem:[#allocation4 + $0x38] sm:$0xff] %vm1505, %v3893
      %3994 = vst.msk [vmem:[#allocation4 + $0x40] sm:$0xff] %vm1505, %v3895
      %3995 = vst.msk [vmem:[#allocation4 + $0x48] sm:$0xff] %vm1505, %v3897
      %3996 = vst.msk [vmem:[#allocation4 + $0x50] sm:$0xff] %vm1505, %v3899
      %3997 = vst.msk [vmem:[#allocation4 + $0x58] sm:$0xff] %vm1505, %v3901
      %3998 = vst.msk [vmem:[#allocation4 + $0x60] sm:$0xff] %vm1505, %v3903
      %3999 = vst.msk [vmem:[#allocation4 + $0x68] sm:$0xff] %vm1505, %v3905
      %4000 = vst.msk [vmem:[#allocation4 + $0x70] sm:$0xff] %vm1505, %v3907
      %4001 = vst.msk [vmem:[#allocation4 + $0x78] sm:$0xff] %vm1505, %v3909
      %4002 = vst.msk [vmem:[#allocation4 + $0x80] sm:$0xff] %vm1505, %v3911
      %4003 = vst.msk [vmem:[#allocation4 + $0x88] sm:$0xff] %vm1505, %v3913
      %4004 = vst.msk [vmem:[#allocation4 + $0x90] sm:$0xff] %vm1505, %v3915
      %4005 = vst.msk [vmem:[#allocation4 + $0x98] sm:$0xff] %vm1505, %v3917
      %4006 = vst.msk [vmem:[#allocation4 + $0xa0] sm:$0xff] %vm1505, %v3919
      %4007 = vst.msk [vmem:[#allocation4 + $0xa8] sm:$0xff] %vm1505, %v3921
      %4008 = vst.msk [vmem:[#allocation4 + $0xb0] sm:$0xff] %vm1505, %v3923
      %4009 = vst.msk [vmem:[#allocation4 + $0xb8] sm:$0xff] %vm1505, %v3925
      %4010 = vst.msk [vmem:[#allocation4 + $0xc0] sm:$0xff] %vm1505, %v3927
      %4011 = vst.msk [vmem:[#allocation4 + $0xc8] sm:$0xff] %vm1505, %v3929
      %4012 = vst.msk [vmem:[#allocation4 + $0xd0] sm:$0xff] %vm1505, %v3931
      %4013 = vst.msk [vmem:[#allocation4 + $0xd8] sm:$0xff] %vm1505, %v3933
      %4014 = vst.msk [vmem:[#allocation4 + $0xe0] sm:$0xff] %vm1505, %v3935
      %4015 = vst.msk [vmem:[#allocation4 + $0xe8] sm:$0xff] %vm1505, %v3937
      %4016 = vst.msk [vmem:[#allocation4 + $0xf0] sm:$0xff] %vm1505, %v3939
      %4017 = vst.msk [vmem:[#allocation4 + $0xf8] sm:$0xff] %vm1505, %v3941
      %4018 = vst.msk [vmem:[#allocation4 + $0x100] sm:$0xff] %vm1505, %v3943
      %4019 = vst.msk [vmem:[#allocation4 + $0x108] sm:$0xff] %vm1505, %v3945
      %4020 = vst.msk [vmem:[#allocation4 + $0x110] sm:$0xff] %vm1505, %v3947
      %4021 = vst.msk [vmem:[#allocation4 + $0x118] sm:$0xff] %vm1505, %v3949
      %v4022 = vld [vmem:[#allocation3 + $0x12] sm:$0xff]
      %v4023 = vld [vmem:[#allocation3 + $0x1a] sm:$0xff]
      %v4024 = vld [vmem:[#allocation3 + $0x22] sm:$0xff]
      %v4025 = vld [vmem:[#allocation3 + $0x2a] sm:$0xff]
      %v4026 = vld [vmem:[#allocation3 + $0x32] sm:$0xff]
      %v4027 = vld [vmem:[#allocation3 + $0x3a] sm:$0xff]
      %v4028 = vld [vmem:[#allocation3 + $0x42] sm:$0xff]
      %v4029 = vld [vmem:[#allocation3 + $0x4a] sm:$0xff]
      %v4030 = vld [vmem:[#allocation3 + $0x52] sm:$0xff]
      %v4031 = vld [vmem:[#allocation3 + $0x5a] sm:$0xff]
      %v4032 = vld [vmem:[#allocation3 + $0x62] sm:$0xff]
      %v4033 = vld [vmem:[#allocation3 + $0x6a] sm:$0xff]
      %v4034 = vld [vmem:[#allocation3 + $0x72] sm:$0xff]
      %v4035 = vld [vmem:[#allocation3 + $0x7a] sm:$0xff]
      %v4036 = vld [vmem:[#allocation3 + $0x82] sm:$0xff]
      %v4037 = vld [vmem:[#allocation3 + $0x8a] sm:$0xff]
      %v4038 = vld [vmem:[#allocation3 + $0x92] sm:$0xff]
      %v4039 = vld [vmem:[#allocation3 + $0x9a] sm:$0xff]
      %v4040 = vld [vmem:[#allocation3 + $0xa2] sm:$0xff]
      %v4041 = vld [vmem:[#allocation3 + $0xaa] sm:$0xff]
      %v4042 = vld [vmem:[#allocation3 + $0xb2] sm:$0xff]
      %v4043 = vld [vmem:[#allocation3 + $0xba] sm:$0xff]
      %v4044 = vld [vmem:[#allocation3 + $0xc2] sm:$0xff]
      %v4045 = vld [vmem:[#allocation3 + $0xca] sm:$0xff]
      %v4046 = vld [vmem:[#allocation3 + $0xd2] sm:$0xff]
      %v4047 = vld [vmem:[#allocation3 + $0xda] sm:$0xff]
      %v4048 = vld [vmem:[#allocation3 + $0xe2] sm:$0xff]
      %v4049 = vld [vmem:[#allocation3 + $0xea] sm:$0xff]
      %v4050 = vld [vmem:[#allocation3 + $0xf2] sm:$0xff]
      %v4051 = vld [vmem:[#allocation3 + $0xfa] sm:$0xff]
      %v4052 = vld [vmem:[#allocation3 + $0x102] sm:$0xff]
      %v4053 = vld [vmem:[#allocation3 + $0x10a] sm:$0xff]
      %v4054 = vld [vmem:[#allocation3 + $0x112] sm:$0xff]
      %v4055 = vld [vmem:[#allocation3 + $0x11a] sm:$0xff]
      %v4056 = vld [vmem:[#allocation3 + $0x122] sm:$0xff]
      %v4057 = vld [vmem:[#allocation3 + $0x12a] sm:$0xff]
      %4094 = vrot.lane.b32.xlu0 %v4022, 12
      %v4095 = vpop.permute.xlu0 %4094
      %4096 = vrot.lane.b32.xlu0 %v4023, 12
      %v4097 = vpop.permute.xlu0 %4096
      %4098 = vrot.lane.b32.xlu0 %v4024, 12
      %v4099 = vpop.permute.xlu0 %4098
      %4100 = vrot.lane.b32.xlu0 %v4025, 12
      %v4101 = vpop.permute.xlu0 %4100
      %4102 = vrot.lane.b32.xlu0 %v4026, 12
      %v4103 = vpop.permute.xlu0 %4102
      %4104 = vrot.lane.b32.xlu0 %v4027, 12
      %v4105 = vpop.permute.xlu0 %4104
      %4106 = vrot.lane.b32.xlu0 %v4028, 12
      %v4107 = vpop.permute.xlu0 %4106
      %4108 = vrot.lane.b32.xlu0 %v4029, 12
      %v4109 = vpop.permute.xlu0 %4108
      %4110 = vrot.lane.b32.xlu0 %v4030, 12
      %v4111 = vpop.permute.xlu0 %4110
      %4112 = vrot.lane.b32.xlu0 %v4031, 12
      %v4113 = vpop.permute.xlu0 %4112
      %4114 = vrot.lane.b32.xlu0 %v4032, 12
      %v4115 = vpop.permute.xlu0 %4114
      %4116 = vrot.lane.b32.xlu0 %v4033, 12
      %v4117 = vpop.permute.xlu0 %4116
      %4118 = vrot.lane.b32.xlu0 %v4034, 12
      %v4119 = vpop.permute.xlu0 %4118
      %4120 = vrot.lane.b32.xlu0 %v4035, 12
      %v4121 = vpop.permute.xlu0 %4120
      %4122 = vrot.lane.b32.xlu0 %v4036, 12
      %v4123 = vpop.permute.xlu0 %4122
      %4124 = vrot.lane.b32.xlu0 %v4037, 12
      %v4125 = vpop.permute.xlu0 %4124
      %4126 = vrot.lane.b32.xlu0 %v4038, 12
      %v4127 = vpop.permute.xlu0 %4126
      %4128 = vrot.lane.b32.xlu0 %v4039, 12
      %v4129 = vpop.permute.xlu0 %4128
      %4130 = vrot.lane.b32.xlu0 %v4040, 12
      %v4131 = vpop.permute.xlu0 %4130
      %4132 = vrot.lane.b32.xlu0 %v4041, 12
      %v4133 = vpop.permute.xlu0 %4132
      %4134 = vrot.lane.b32.xlu0 %v4042, 12
      %v4135 = vpop.permute.xlu0 %4134
      %4136 = vrot.lane.b32.xlu0 %v4043, 12
      %v4137 = vpop.permute.xlu0 %4136
      %4138 = vrot.lane.b32.xlu0 %v4044, 12
      %v4139 = vpop.permute.xlu0 %4138
      %4140 = vrot.lane.b32.xlu0 %v4045, 12
      %v4141 = vpop.permute.xlu0 %4140
      %4142 = vrot.lane.b32.xlu0 %v4046, 12
      %v4143 = vpop.permute.xlu0 %4142
      %4144 = vrot.lane.b32.xlu0 %v4047, 12
      %v4145 = vpop.permute.xlu0 %4144
      %4146 = vrot.lane.b32.xlu0 %v4048, 12
      %v4147 = vpop.permute.xlu0 %4146
      %4148 = vrot.lane.b32.xlu0 %v4049, 12
      %v4149 = vpop.permute.xlu0 %4148
      %4150 = vrot.lane.b32.xlu0 %v4050, 12
      %v4151 = vpop.permute.xlu0 %4150
      %4152 = vrot.lane.b32.xlu0 %v4051, 12
      %v4153 = vpop.permute.xlu0 %4152
      %4154 = vrot.lane.b32.xlu0 %v4052, 12
      %v4155 = vpop.permute.xlu0 %4154
      %4156 = vrot.lane.b32.xlu0 %v4053, 12
      %v4157 = vpop.permute.xlu0 %4156
      %4158 = vrot.lane.b32.xlu0 %v4054, 12
      %v4159 = vpop.permute.xlu0 %4158
      %4160 = vrot.lane.b32.xlu0 %v4055, 12
      %v4161 = vpop.permute.xlu0 %4160
      %4162 = vrot.lane.b32.xlu0 %v4056, 12
      %v4163 = vpop.permute.xlu0 %4162
      %4164 = vrot.lane.b32.xlu0 %v4057, 12
      %v4165 = vpop.permute.xlu0 %4164
      %4202 = vst.msk [vmem:[#allocation4] sm:$0xff] %vm1722, %v4095
      %4203 = vst.msk [vmem:[#allocation4 + $0x8] sm:$0xff] %vm1722, %v4097
      %4204 = vst.msk [vmem:[#allocation4 + $0x10] sm:$0xff] %vm1722, %v4099
      %4205 = vst.msk [vmem:[#allocation4 + $0x18] sm:$0xff] %vm1722, %v4101
      %4206 = vst.msk [vmem:[#allocation4 + $0x20] sm:$0xff] %vm1722, %v4103
      %4207 = vst.msk [vmem:[#allocation4 + $0x28] sm:$0xff] %vm1722, %v4105
      %4208 = vst.msk [vmem:[#allocation4 + $0x30] sm:$0xff] %vm1722, %v4107
      %4209 = vst.msk [vmem:[#allocation4 + $0x38] sm:$0xff] %vm1722, %v4109
      %4210 = vst.msk [vmem:[#allocation4 + $0x40] sm:$0xff] %vm1722, %v4111
      %4211 = vst.msk [vmem:[#allocation4 + $0x48] sm:$0xff] %vm1722, %v4113
      %4212 = vst.msk [vmem:[#allocation4 + $0x50] sm:$0xff] %vm1722, %v4115
      %4213 = vst.msk [vmem:[#allocation4 + $0x58] sm:$0xff] %vm1722, %v4117
      %4214 = vst.msk [vmem:[#allocation4 + $0x60] sm:$0xff] %vm1722, %v4119
      %4215 = vst.msk [vmem:[#allocation4 + $0x68] sm:$0xff] %vm1722, %v4121
      %4216 = vst.msk [vmem:[#allocation4 + $0x70] sm:$0xff] %vm1722, %v4123
      %4217 = vst.msk [vmem:[#allocation4 + $0x78] sm:$0xff] %vm1722, %v4125
      %4218 = vst.msk [vmem:[#allocation4 + $0x80] sm:$0xff] %vm1722, %v4127
      %4219 = vst.msk [vmem:[#allocation4 + $0x88] sm:$0xff] %vm1722, %v4129
      %4220 = vst.msk [vmem:[#allocation4 + $0x90] sm:$0xff] %vm1722, %v4131
      %4221 = vst.msk [vmem:[#allocation4 + $0x98] sm:$0xff] %vm1722, %v4133
      %4222 = vst.msk [vmem:[#allocation4 + $0xa0] sm:$0xff] %vm1722, %v4135
      %4223 = vst.msk [vmem:[#allocation4 + $0xa8] sm:$0xff] %vm1722, %v4137
      %4224 = vst.msk [vmem:[#allocation4 + $0xb0] sm:$0xff] %vm1722, %v4139
      %4225 = vst.msk [vmem:[#allocation4 + $0xb8] sm:$0xff] %vm1722, %v4141
      %4226 = vst.msk [vmem:[#allocation4 + $0xc0] sm:$0xff] %vm1722, %v4143
      %4227 = vst.msk [vmem:[#allocation4 + $0xc8] sm:$0xff] %vm1722, %v4145
      %4228 = vst.msk [vmem:[#allocation4 + $0xd0] sm:$0xff] %vm1722, %v4147
      %4229 = vst.msk [vmem:[#allocation4 + $0xd8] sm:$0xff] %vm1722, %v4149
      %4230 = vst.msk [vmem:[#allocation4 + $0xe0] sm:$0xff] %vm1722, %v4151
      %4231 = vst.msk [vmem:[#allocation4 + $0xe8] sm:$0xff] %vm1722, %v4153
      %4232 = vst.msk [vmem:[#allocation4 + $0xf0] sm:$0xff] %vm1722, %v4155
      %4233 = vst.msk [vmem:[#allocation4 + $0xf8] sm:$0xff] %vm1722, %v4157
      %4234 = vst.msk [vmem:[#allocation4 + $0x100] sm:$0xff] %vm1722, %v4159
      %4235 = vst.msk [vmem:[#allocation4 + $0x108] sm:$0xff] %vm1722, %v4161
      %4236 = vst.msk [vmem:[#allocation4 + $0x110] sm:$0xff] %vm1722, %v4163
      %4237 = vst.msk [vmem:[#allocation4 + $0x118] sm:$0xff] %vm1722, %v4165
      %v4238 = vld [vmem:[#allocation3 + $0x13] sm:$0xff]
      %v4239 = vld [vmem:[#allocation3 + $0x1b] sm:$0xff]
      %v4240 = vld [vmem:[#allocation3 + $0x23] sm:$0xff]
      %v4241 = vld [vmem:[#allocation3 + $0x2b] sm:$0xff]
      %v4242 = vld [vmem:[#allocation3 + $0x33] sm:$0xff]
      %v4243 = vld [vmem:[#allocation3 + $0x3b] sm:$0xff]
      %v4244 = vld [vmem:[#allocation3 + $0x43] sm:$0xff]
      %v4245 = vld [vmem:[#allocation3 + $0x4b] sm:$0xff]
      %v4246 = vld [vmem:[#allocation3 + $0x53] sm:$0xff]
      %v4247 = vld [vmem:[#allocation3 + $0x5b] sm:$0xff]
      %v4248 = vld [vmem:[#allocation3 + $0x63] sm:$0xff]
      %v4249 = vld [vmem:[#allocation3 + $0x6b] sm:$0xff]
      %v4250 = vld [vmem:[#allocation3 + $0x73] sm:$0xff]
      %v4251 = vld [vmem:[#allocation3 + $0x7b] sm:$0xff]
      %v4252 = vld [vmem:[#allocation3 + $0x83] sm:$0xff]
      %v4253 = vld [vmem:[#allocation3 + $0x8b] sm:$0xff]
      %v4254 = vld [vmem:[#allocation3 + $0x93] sm:$0xff]
      %v4255 = vld [vmem:[#allocation3 + $0x9b] sm:$0xff]
      %v4256 = vld [vmem:[#allocation3 + $0xa3] sm:$0xff]
      %v4257 = vld [vmem:[#allocation3 + $0xab] sm:$0xff]
      %v4258 = vld [vmem:[#allocation3 + $0xb3] sm:$0xff]
      %v4259 = vld [vmem:[#allocation3 + $0xbb] sm:$0xff]
      %v4260 = vld [vmem:[#allocation3 + $0xc3] sm:$0xff]
      %v4261 = vld [vmem:[#allocation3 + $0xcb] sm:$0xff]
      %v4262 = vld [vmem:[#allocation3 + $0xd3] sm:$0xff]
      %v4263 = vld [vmem:[#allocation3 + $0xdb] sm:$0xff]
      %v4264 = vld [vmem:[#allocation3 + $0xe3] sm:$0xff]
      %v4265 = vld [vmem:[#allocation3 + $0xeb] sm:$0xff]
      %v4266 = vld [vmem:[#allocation3 + $0xf3] sm:$0xff]
      %v4267 = vld [vmem:[#allocation3 + $0xfb] sm:$0xff]
      %v4268 = vld [vmem:[#allocation3 + $0x103] sm:$0xff]
      %v4269 = vld [vmem:[#allocation3 + $0x10b] sm:$0xff]
      %v4270 = vld [vmem:[#allocation3 + $0x113] sm:$0xff]
      %v4271 = vld [vmem:[#allocation3 + $0x11b] sm:$0xff]
      %v4272 = vld [vmem:[#allocation3 + $0x123] sm:$0xff]
      %v4273 = vld [vmem:[#allocation3 + $0x12b] sm:$0xff]
      %4310 = vrot.lane.b32.xlu0 %v4238, 16
      %v4311 = vpop.permute.xlu0 %4310
      %4312 = vrot.lane.b32.xlu0 %v4239, 16
      %v4313 = vpop.permute.xlu0 %4312
      %4314 = vrot.lane.b32.xlu0 %v4240, 16
      %v4315 = vpop.permute.xlu0 %4314
      %4316 = vrot.lane.b32.xlu0 %v4241, 16
      %v4317 = vpop.permute.xlu0 %4316
      %4318 = vrot.lane.b32.xlu0 %v4242, 16
      %v4319 = vpop.permute.xlu0 %4318
      %4320 = vrot.lane.b32.xlu0 %v4243, 16
      %v4321 = vpop.permute.xlu0 %4320
      %4322 = vrot.lane.b32.xlu0 %v4244, 16
      %v4323 = vpop.permute.xlu0 %4322
      %4324 = vrot.lane.b32.xlu0 %v4245, 16
      %v4325 = vpop.permute.xlu0 %4324
      %4326 = vrot.lane.b32.xlu0 %v4246, 16
      %v4327 = vpop.permute.xlu0 %4326
      %4328 = vrot.lane.b32.xlu0 %v4247, 16
      %v4329 = vpop.permute.xlu0 %4328
      %4330 = vrot.lane.b32.xlu0 %v4248, 16
      %v4331 = vpop.permute.xlu0 %4330
      %4332 = vrot.lane.b32.xlu0 %v4249, 16
      %v4333 = vpop.permute.xlu0 %4332
      %4334 = vrot.lane.b32.xlu0 %v4250, 16
      %v4335 = vpop.permute.xlu0 %4334
      %4336 = vrot.lane.b32.xlu0 %v4251, 16
      %v4337 = vpop.permute.xlu0 %4336
      %4338 = vrot.lane.b32.xlu0 %v4252, 16
      %v4339 = vpop.permute.xlu0 %4338
      %4340 = vrot.lane.b32.xlu0 %v4253, 16
      %v4341 = vpop.permute.xlu0 %4340
      %4342 = vrot.lane.b32.xlu0 %v4254, 16
      %v4343 = vpop.permute.xlu0 %4342
      %4344 = vrot.lane.b32.xlu0 %v4255, 16
      %v4345 = vpop.permute.xlu0 %4344
      %4346 = vrot.lane.b32.xlu0 %v4256, 16
      %v4347 = vpop.permute.xlu0 %4346
      %4348 = vrot.lane.b32.xlu0 %v4257, 16
      %v4349 = vpop.permute.xlu0 %4348
      %4350 = vrot.lane.b32.xlu0 %v4258, 16
      %v4351 = vpop.permute.xlu0 %4350
      %4352 = vrot.lane.b32.xlu0 %v4259, 16
      %v4353 = vpop.permute.xlu0 %4352
      %4354 = vrot.lane.b32.xlu0 %v4260, 16
      %v4355 = vpop.permute.xlu0 %4354
      %4356 = vrot.lane.b32.xlu0 %v4261, 16
      %v4357 = vpop.permute.xlu0 %4356
      %4358 = vrot.lane.b32.xlu0 %v4262, 16
      %v4359 = vpop.permute.xlu0 %4358
      %4360 = vrot.lane.b32.xlu0 %v4263, 16
      %v4361 = vpop.permute.xlu0 %4360
      %4362 = vrot.lane.b32.xlu0 %v4264, 16
      %v4363 = vpop.permute.xlu0 %4362
      %4364 = vrot.lane.b32.xlu0 %v4265, 16
      %v4365 = vpop.permute.xlu0 %4364
      %4366 = vrot.lane.b32.xlu0 %v4266, 16
      %v4367 = vpop.permute.xlu0 %4366
      %4368 = vrot.lane.b32.xlu0 %v4267, 16
      %v4369 = vpop.permute.xlu0 %4368
      %4370 = vrot.lane.b32.xlu0 %v4268, 16
      %v4371 = vpop.permute.xlu0 %4370
      %4372 = vrot.lane.b32.xlu0 %v4269, 16
      %v4373 = vpop.permute.xlu0 %4372
      %4374 = vrot.lane.b32.xlu0 %v4270, 16
      %v4375 = vpop.permute.xlu0 %4374
      %4376 = vrot.lane.b32.xlu0 %v4271, 16
      %v4377 = vpop.permute.xlu0 %4376
      %4378 = vrot.lane.b32.xlu0 %v4272, 16
      %v4379 = vpop.permute.xlu0 %4378
      %4380 = vrot.lane.b32.xlu0 %v4273, 16
      %v4381 = vpop.permute.xlu0 %4380
      %4418 = vst.msk [vmem:[#allocation4] sm:$0xff] %vm1939, %v4311
      %4419 = vst.msk [vmem:[#allocation4 + $0x8] sm:$0xff] %vm1939, %v4313
      %4420 = vst.msk [vmem:[#allocation4 + $0x10] sm:$0xff] %vm1939, %v4315
      %4421 = vst.msk [vmem:[#allocation4 + $0x18] sm:$0xff] %vm1939, %v4317
      %4422 = vst.msk [vmem:[#allocation4 + $0x20] sm:$0xff] %vm1939, %v4319
      %4423 = vst.msk [vmem:[#allocation4 + $0x28] sm:$0xff] %vm1939, %v4321
      %4424 = vst.msk [vmem:[#allocation4 + $0x30] sm:$0xff] %vm1939, %v4323
      %4425 = vst.msk [vmem:[#allocation4 + $0x38] sm:$0xff] %vm1939, %v4325
      %4426 = vst.msk [vmem:[#allocation4 + $0x40] sm:$0xff] %vm1939, %v4327
      %4427 = vst.msk [vmem:[#allocation4 + $0x48] sm:$0xff] %vm1939, %v4329
      %4428 = vst.msk [vmem:[#allocation4 + $0x50] sm:$0xff] %vm1939, %v4331
      %4429 = vst.msk [vmem:[#allocation4 + $0x58] sm:$0xff] %vm1939, %v4333
      %4430 = vst.msk [vmem:[#allocation4 + $0x60] sm:$0xff] %vm1939, %v4335
      %4431 = vst.msk [vmem:[#allocation4 + $0x68] sm:$0xff] %vm1939, %v4337
      %4432 = vst.msk [vmem:[#allocation4 + $0x70] sm:$0xff] %vm1939, %v4339
      %4433 = vst.msk [vmem:[#allocation4 + $0x78] sm:$0xff] %vm1939, %v4341
      %4434 = vst.msk [vmem:[#allocation4 + $0x80] sm:$0xff] %vm1939, %v4343
      %4435 = vst.msk [vmem:[#allocation4 + $0x88] sm:$0xff] %vm1939, %v4345
      %4436 = vst.msk [vmem:[#allocation4 + $0x90] sm:$0xff] %vm1939, %v4347
      %4437 = vst.msk [vmem:[#allocation4 + $0x98] sm:$0xff] %vm1939, %v4349
      %4438 = vst.msk [vmem:[#allocation4 + $0xa0] sm:$0xff] %vm1939, %v4351
      %4439 = vst.msk [vmem:[#allocation4 + $0xa8] sm:$0xff] %vm1939, %v4353
      %4440 = vst.msk [vmem:[#allocation4 + $0xb0] sm:$0xff] %vm1939, %v4355
      %4441 = vst.msk [vmem:[#allocation4 + $0xb8] sm:$0xff] %vm1939, %v4357
      %4442 = vst.msk [vmem:[#allocation4 + $0xc0] sm:$0xff] %vm1939, %v4359
      %4443 = vst.msk [vmem:[#allocation4 + $0xc8] sm:$0xff] %vm1939, %v4361
      %4444 = vst.msk [vmem:[#allocation4 + $0xd0] sm:$0xff] %vm1939, %v4363
      %4445 = vst.msk [vmem:[#allocation4 + $0xd8] sm:$0xff] %vm1939, %v4365
      %4446 = vst.msk [vmem:[#allocation4 + $0xe0] sm:$0xff] %vm1939, %v4367
      %4447 = vst.msk [vmem:[#allocation4 + $0xe8] sm:$0xff] %vm1939, %v4369
      %4448 = vst.msk [vmem:[#allocation4 + $0xf0] sm:$0xff] %vm1939, %v4371
      %4449 = vst.msk [vmem:[#allocation4 + $0xf8] sm:$0xff] %vm1939, %v4373
      %4450 = vst.msk [vmem:[#allocation4 + $0x100] sm:$0xff] %vm1939, %v4375
      %4451 = vst.msk [vmem:[#allocation4 + $0x108] sm:$0xff] %vm1939, %v4377
      %4452 = vst.msk [vmem:[#allocation4 + $0x110] sm:$0xff] %vm1939, %v4379
      %4453 = vst.msk [vmem:[#allocation4 + $0x118] sm:$0xff] %vm1939, %v4381
      %v4454 = vld [vmem:[#allocation3 + $0x14] sm:$0xff]
      %v4455 = vld [vmem:[#allocation3 + $0x1c] sm:$0xff]
      %v4456 = vld [vmem:[#allocation3 + $0x24] sm:$0xff]
      %v4457 = vld [vmem:[#allocation3 + $0x2c] sm:$0xff]
      %v4458 = vld [vmem:[#allocation3 + $0x34] sm:$0xff]
      %v4459 = vld [vmem:[#allocation3 + $0x3c] sm:$0xff]
      %v4460 = vld [vmem:[#allocation3 + $0x44] sm:$0xff]
      %v4461 = vld [vmem:[#allocation3 + $0x4c] sm:$0xff]
      %v4462 = vld [vmem:[#allocation3 + $0x54] sm:$0xff]
      %v4463 = vld [vmem:[#allocation3 + $0x5c] sm:$0xff]
      %v4464 = vld [vmem:[#allocation3 + $0x64] sm:$0xff]
      %v4465 = vld [vmem:[#allocation3 + $0x6c] sm:$0xff]
      %v4466 = vld [vmem:[#allocation3 + $0x74] sm:$0xff]
      %v4467 = vld [vmem:[#allocation3 + $0x7c] sm:$0xff]
      %v4468 = vld [vmem:[#allocation3 + $0x84] sm:$0xff]
      %v4469 = vld [vmem:[#allocation3 + $0x8c] sm:$0xff]
      %v4470 = vld [vmem:[#allocation3 + $0x94] sm:$0xff]
      %v4471 = vld [vmem:[#allocation3 + $0x9c] sm:$0xff]
      %v4472 = vld [vmem:[#allocation3 + $0xa4] sm:$0xff]
      %v4473 = vld [vmem:[#allocation3 + $0xac] sm:$0xff]
      %v4474 = vld [vmem:[#allocation3 + $0xb4] sm:$0xff]
      %v4475 = vld [vmem:[#allocation3 + $0xbc] sm:$0xff]
      %v4476 = vld [vmem:[#allocation3 + $0xc4] sm:$0xff]
      %v4477 = vld [vmem:[#allocation3 + $0xcc] sm:$0xff]
      %v4478 = vld [vmem:[#allocation3 + $0xd4] sm:$0xff]
      %v4479 = vld [vmem:[#allocation3 + $0xdc] sm:$0xff]
      %v4480 = vld [vmem:[#allocation3 + $0xe4] sm:$0xff]
      %v4481 = vld [vmem:[#allocation3 + $0xec] sm:$0xff]
      %v4482 = vld [vmem:[#allocation3 + $0xf4] sm:$0xff]
      %v4483 = vld [vmem:[#allocation3 + $0xfc] sm:$0xff]
      %v4484 = vld [vmem:[#allocation3 + $0x104] sm:$0xff]
      %v4485 = vld [vmem:[#allocation3 + $0x10c] sm:$0xff]
      %v4486 = vld [vmem:[#allocation3 + $0x114] sm:$0xff]
      %v4487 = vld [vmem:[#allocation3 + $0x11c] sm:$0xff]
      %v4488 = vld [vmem:[#allocation3 + $0x124] sm:$0xff]
      %v4489 = vld [vmem:[#allocation3 + $0x12c] sm:$0xff]
      %4526 = vrot.lane.b32.xlu0 %v4454, 20
      %v4527 = vpop.permute.xlu0 %4526
      %4528 = vrot.lane.b32.xlu0 %v4455, 20
      %v4529 = vpop.permute.xlu0 %4528
      %4530 = vrot.lane.b32.xlu0 %v4456, 20
      %v4531 = vpop.permute.xlu0 %4530
      %4532 = vrot.lane.b32.xlu0 %v4457, 20
      %v4533 = vpop.permute.xlu0 %4532
      %4534 = vrot.lane.b32.xlu0 %v4458, 20
      %v4535 = vpop.permute.xlu0 %4534
      %4536 = vrot.lane.b32.xlu0 %v4459, 20
      %v4537 = vpop.permute.xlu0 %4536
      %4538 = vrot.lane.b32.xlu0 %v4460, 20
      %v4539 = vpop.permute.xlu0 %4538
      %4540 = vrot.lane.b32.xlu0 %v4461, 20
      %v4541 = vpop.permute.xlu0 %4540
      %4542 = vrot.lane.b32.xlu0 %v4462, 20
      %v4543 = vpop.permute.xlu0 %4542
      %4544 = vrot.lane.b32.xlu0 %v4463, 20
      %v4545 = vpop.permute.xlu0 %4544
      %4546 = vrot.lane.b32.xlu0 %v4464, 20
      %v4547 = vpop.permute.xlu0 %4546
      %4548 = vrot.lane.b32.xlu0 %v4465, 20
      %v4549 = vpop.permute.xlu0 %4548
      %4550 = vrot.lane.b32.xlu0 %v4466, 20
      %v4551 = vpop.permute.xlu0 %4550
      %4552 = vrot.lane.b32.xlu0 %v4467, 20
      %v4553 = vpop.permute.xlu0 %4552
      %4554 = vrot.lane.b32.xlu0 %v4468, 20
      %v4555 = vpop.permute.xlu0 %4554
      %4556 = vrot.lane.b32.xlu0 %v4469, 20
      %v4557 = vpop.permute.xlu0 %4556
      %4558 = vrot.lane.b32.xlu0 %v4470, 20
      %v4559 = vpop.permute.xlu0 %4558
      %4560 = vrot.lane.b32.xlu0 %v4471, 20
      %v4561 = vpop.permute.xlu0 %4560
      %4562 = vrot.lane.b32.xlu0 %v4472, 20
      %v4563 = vpop.permute.xlu0 %4562
      %4564 = vrot.lane.b32.xlu0 %v4473, 20
      %v4565 = vpop.permute.xlu0 %4564
      %4566 = vrot.lane.b32.xlu0 %v4474, 20
      %v4567 = vpop.permute.xlu0 %4566
      %4568 = vrot.lane.b32.xlu0 %v4475, 20
      %v4569 = vpop.permute.xlu0 %4568
      %4570 = vrot.lane.b32.xlu0 %v4476, 20
      %v4571 = vpop.permute.xlu0 %4570
      %4572 = vrot.lane.b32.xlu0 %v4477, 20
      %v4573 = vpop.permute.xlu0 %4572
      %4574 = vrot.lane.b32.xlu0 %v4478, 20
      %v4575 = vpop.permute.xlu0 %4574
      %4576 = vrot.lane.b32.xlu0 %v4479, 20
      %v4577 = vpop.permute.xlu0 %4576
      %4578 = vrot.lane.b32.xlu0 %v4480, 20
      %v4579 = vpop.permute.xlu0 %4578
      %4580 = vrot.lane.b32.xlu0 %v4481, 20
      %v4581 = vpop.permute.xlu0 %4580
      %4582 = vrot.lane.b32.xlu0 %v4482, 20
      %v4583 = vpop.permute.xlu0 %4582
      %4584 = vrot.lane.b32.xlu0 %v4483, 20
      %v4585 = vpop.permute.xlu0 %4584
      %4586 = vrot.lane.b32.xlu0 %v4484, 20
      %v4587 = vpop.permute.xlu0 %4586
      %4588 = vrot.lane.b32.xlu0 %v4485, 20
      %v4589 = vpop.permute.xlu0 %4588
      %4590 = vrot.lane.b32.xlu0 %v4486, 20
      %v4591 = vpop.permute.xlu0 %4590
      %4592 = vrot.lane.b32.xlu0 %v4487, 20
      %v4593 = vpop.permute.xlu0 %4592
      %4594 = vrot.lane.b32.xlu0 %v4488, 20
      %v4595 = vpop.permute.xlu0 %4594
      %4596 = vrot.lane.b32.xlu0 %v4489, 20
      %v4597 = vpop.permute.xlu0 %4596
      %4634 = vst.msk [vmem:[#allocation4] sm:$0xff] %vm2156, %v4527
      %4635 = vst.msk [vmem:[#allocation4 + $0x8] sm:$0xff] %vm2156, %v4529
      %4636 = vst.msk [vmem:[#allocation4 + $0x10] sm:$0xff] %vm2156, %v4531
      %4637 = vst.msk [vmem:[#allocation4 + $0x18] sm:$0xff] %vm2156, %v4533
      %4638 = vst.msk [vmem:[#allocation4 + $0x20] sm:$0xff] %vm2156, %v4535
      %4639 = vst.msk [vmem:[#allocation4 + $0x28] sm:$0xff] %vm2156, %v4537
      %4640 = vst.msk [vmem:[#allocation4 + $0x30] sm:$0xff] %vm2156, %v4539
      %4641 = vst.msk [vmem:[#allocation4 + $0x38] sm:$0xff] %vm2156, %v4541
      %4642 = vst.msk [vmem:[#allocation4 + $0x40] sm:$0xff] %vm2156, %v4543
      %4643 = vst.msk [vmem:[#allocation4 + $0x48] sm:$0xff] %vm2156, %v4545
      %4644 = vst.msk [vmem:[#allocation4 + $0x50] sm:$0xff] %vm2156, %v4547
      %4645 = vst.msk [vmem:[#allocation4 + $0x58] sm:$0xff] %vm2156, %v4549
      %4646 = vst.msk [vmem:[#allocation4 + $0x60] sm:$0xff] %vm2156, %v4551
      %4647 = vst.msk [vmem:[#allocation4 + $0x68] sm:$0xff] %vm2156, %v4553
      %4648 = vst.msk [vmem:[#allocation4 + $0x70] sm:$0xff] %vm2156, %v4555
      %4649 = vst.msk [vmem:[#allocation4 + $0x78] sm:$0xff] %vm2156, %v4557
      %4650 = vst.msk [vmem:[#allocation4 + $0x80] sm:$0xff] %vm2156, %v4559
      %4651 = vst.msk [vmem:[#allocation4 + $0x88] sm:$0xff] %vm2156, %v4561
      %4652 = vst.msk [vmem:[#allocation4 + $0x90] sm:$0xff] %vm2156, %v4563
      %4653 = vst.msk [vmem:[#allocation4 + $0x98] sm:$0xff] %vm2156, %v4565
      %4654 = vst.msk [vmem:[#allocation4 + $0xa0] sm:$0xff] %vm2156, %v4567
      %4655 = vst.msk [vmem:[#allocation4 + $0xa8] sm:$0xff] %vm2156, %v4569
      %4656 = vst.msk [vmem:[#allocation4 + $0xb0] sm:$0xff] %vm2156, %v4571
      %4657 = vst.msk [vmem:[#allocation4 + $0xb8] sm:$0xff] %vm2156, %v4573
      %4658 = vst.msk [vmem:[#allocation4 + $0xc0] sm:$0xff] %vm2156, %v4575
      %4659 = vst.msk [vmem:[#allocation4 + $0xc8] sm:$0xff] %vm2156, %v4577
      %4660 = vst.msk [vmem:[#allocation4 + $0xd0] sm:$0xff] %vm2156, %v4579
      %4661 = vst.msk [vmem:[#allocation4 + $0xd8] sm:$0xff] %vm2156, %v4581
      %4662 = vst.msk [vmem:[#allocation4 + $0xe0] sm:$0xff] %vm2156, %v4583
      %4663 = vst.msk [vmem:[#allocation4 + $0xe8] sm:$0xff] %vm2156, %v4585
      %4664 = vst.msk [vmem:[#allocation4 + $0xf0] sm:$0xff] %vm2156, %v4587
      %4665 = vst.msk [vmem:[#allocation4 + $0xf8] sm:$0xff] %vm2156, %v4589
      %4666 = vst.msk [vmem:[#allocation4 + $0x100] sm:$0xff] %vm2156, %v4591
      %4667 = vst.msk [vmem:[#allocation4 + $0x108] sm:$0xff] %vm2156, %v4593
      %4668 = vst.msk [vmem:[#allocation4 + $0x110] sm:$0xff] %vm2156, %v4595
      %4669 = vst.msk [vmem:[#allocation4 + $0x118] sm:$0xff] %vm2156, %v4597
      %v4670 = vld [vmem:[#allocation3 + $0x24] sm:$0xff]
      %v4671 = vld [vmem:[#allocation3 + $0x2c] sm:$0xff]
      %v4672 = vld [vmem:[#allocation3 + $0x34] sm:$0xff]
      %v4673 = vld [vmem:[#allocation3 + $0x3c] sm:$0xff]
      %v4674 = vld [vmem:[#allocation3 + $0x44] sm:$0xff]
      %v4675 = vld [vmem:[#allocation3 + $0x4c] sm:$0xff]
      %v4676 = vld [vmem:[#allocation3 + $0x54] sm:$0xff]
      %v4677 = vld [vmem:[#allocation3 + $0x5c] sm:$0xff]
      %v4678 = vld [vmem:[#allocation3 + $0x64] sm:$0xff]
      %v4679 = vld [vmem:[#allocation3 + $0x6c] sm:$0xff]
      %v4680 = vld [vmem:[#allocation3 + $0x74] sm:$0xff]
      %v4681 = vld [vmem:[#allocation3 + $0x7c] sm:$0xff]
      %v4682 = vld [vmem:[#allocation3 + $0x84] sm:$0xff]
      %v4683 = vld [vmem:[#allocation3 + $0x8c] sm:$0xff]
      %v4684 = vld [vmem:[#allocation3 + $0x94] sm:$0xff]
      %v4685 = vld [vmem:[#allocation3 + $0x9c] sm:$0xff]
      %v4686 = vld [vmem:[#allocation3 + $0xa4] sm:$0xff]
      %v4687 = vld [vmem:[#allocation3 + $0xac] sm:$0xff]
      %v4688 = vld [vmem:[#allocation3 + $0xb4] sm:$0xff]
      %v4689 = vld [vmem:[#allocation3 + $0xbc] sm:$0xff]
      %v4690 = vld [vmem:[#allocation3 + $0xc4] sm:$0xff]
      %v4691 = vld [vmem:[#allocation3 + $0xcc] sm:$0xff]
      %v4692 = vld [vmem:[#allocation3 + $0xd4] sm:$0xff]
      %v4693 = vld [vmem:[#allocation3 + $0xdc] sm:$0xff]
      %v4694 = vld [vmem:[#allocation3 + $0xe4] sm:$0xff]
      %v4695 = vld [vmem:[#allocation3 + $0xec] sm:$0xff]
      %v4696 = vld [vmem:[#allocation3 + $0xf4] sm:$0xff]
      %v4697 = vld [vmem:[#allocation3 + $0xfc] sm:$0xff]
      %v4698 = vld [vmem:[#allocation3 + $0x104] sm:$0xff]
      %v4699 = vld [vmem:[#allocation3 + $0x10c] sm:$0xff]
      %v4700 = vld [vmem:[#allocation3 + $0x114] sm:$0xff]
      %v4701 = vld [vmem:[#allocation3 + $0x11c] sm:$0xff]
      %v4702 = vld [vmem:[#allocation3 + $0x124] sm:$0xff]
      %v4703 = vld [vmem:[#allocation3 + $0x12c] sm:$0xff]
      %v4704 = vld [vmem:[#allocation3 + $0x134] sm:$0xff]
      %v4705 = vld [vmem:[#allocation3 + $0x13c] sm:$0xff]
      %4742 = vrot.lane.b32.xlu0 %v4670, 24
      %v4743 = vpop.permute.xlu0 %4742
      %4744 = vrot.lane.b32.xlu0 %v4671, 24
      %v4745 = vpop.permute.xlu0 %4744
      %4746 = vrot.lane.b32.xlu0 %v4672, 24
      %v4747 = vpop.permute.xlu0 %4746
      %4748 = vrot.lane.b32.xlu0 %v4673, 24
      %v4749 = vpop.permute.xlu0 %4748
      %4750 = vrot.lane.b32.xlu0 %v4674, 24
      %v4751 = vpop.permute.xlu0 %4750
      %4752 = vrot.lane.b32.xlu0 %v4675, 24
      %v4753 = vpop.permute.xlu0 %4752
      %4754 = vrot.lane.b32.xlu0 %v4676, 24
      %v4755 = vpop.permute.xlu0 %4754
      %4756 = vrot.lane.b32.xlu0 %v4677, 24
      %v4757 = vpop.permute.xlu0 %4756
      %4758 = vrot.lane.b32.xlu0 %v4678, 24
      %v4759 = vpop.permute.xlu0 %4758
      %4760 = vrot.lane.b32.xlu0 %v4679, 24
      %v4761 = vpop.permute.xlu0 %4760
      %4762 = vrot.lane.b32.xlu0 %v4680, 24
      %v4763 = vpop.permute.xlu0 %4762
      %4764 = vrot.lane.b32.xlu0 %v4681, 24
      %v4765 = vpop.permute.xlu0 %4764
      %4766 = vrot.lane.b32.xlu0 %v4682, 24
      %v4767 = vpop.permute.xlu0 %4766
      %4768 = vrot.lane.b32.xlu0 %v4683, 24
      %v4769 = vpop.permute.xlu0 %4768
      %4770 = vrot.lane.b32.xlu0 %v4684, 24
      %v4771 = vpop.permute.xlu0 %4770
      %4772 = vrot.lane.b32.xlu0 %v4685, 24
      %v4773 = vpop.permute.xlu0 %4772
      %4774 = vrot.lane.b32.xlu0 %v4686, 24
      %v4775 = vpop.permute.xlu0 %4774
      %4776 = vrot.lane.b32.xlu0 %v4687, 24
      %v4777 = vpop.permute.xlu0 %4776
      %4778 = vrot.lane.b32.xlu0 %v4688, 24
      %v4779 = vpop.permute.xlu0 %4778
      %4780 = vrot.lane.b32.xlu0 %v4689, 24
      %v4781 = vpop.permute.xlu0 %4780
      %4782 = vrot.lane.b32.xlu0 %v4690, 24
      %v4783 = vpop.permute.xlu0 %4782
      %4784 = vrot.lane.b32.xlu0 %v4691, 24
      %v4785 = vpop.permute.xlu0 %4784
      %4786 = vrot.lane.b32.xlu0 %v4692, 24
      %v4787 = vpop.permute.xlu0 %4786
      %4788 = vrot.lane.b32.xlu0 %v4693, 24
      %v4789 = vpop.permute.xlu0 %4788
      %4790 = vrot.lane.b32.xlu0 %v4694, 24
      %v4791 = vpop.permute.xlu0 %4790
      %4792 = vrot.lane.b32.xlu0 %v4695, 24
      %v4793 = vpop.permute.xlu0 %4792
      %4794 = vrot.lane.b32.xlu0 %v4696, 24
      %v4795 = vpop.permute.xlu0 %4794
      %4796 = vrot.lane.b32.xlu0 %v4697, 24
      %v4797 = vpop.permute.xlu0 %4796
      %4798 = vrot.lane.b32.xlu0 %v4698, 24
      %v4799 = vpop.permute.xlu0 %4798
      %4800 = vrot.lane.b32.xlu0 %v4699, 24
      %v4801 = vpop.permute.xlu0 %4800
      %4802 = vrot.lane.b32.xlu0 %v4700, 24
      %v4803 = vpop.permute.xlu0 %4802
      %4804 = vrot.lane.b32.xlu0 %v4701, 24
      %v4805 = vpop.permute.xlu0 %4804
      %4806 = vrot.lane.b32.xlu0 %v4702, 24
      %v4807 = vpop.permute.xlu0 %4806
      %4808 = vrot.lane.b32.xlu0 %v4703, 24
      %v4809 = vpop.permute.xlu0 %4808
      %4810 = vrot.lane.b32.xlu0 %v4704, 24
      %v4811 = vpop.permute.xlu0 %4810
      %4812 = vrot.lane.b32.xlu0 %v4705, 24
      %v4813 = vpop.permute.xlu0 %4812
      %4850 = vst.msk [vmem:[#allocation4] sm:$0xff] %vm2373, %v4743
      %4851 = vst.msk [vmem:[#allocation4 + $0x8] sm:$0xff] %vm2373, %v4745
      %4852 = vst.msk [vmem:[#allocation4 + $0x10] sm:$0xff] %vm2373, %v4747
      %4853 = vst.msk [vmem:[#allocation4 + $0x18] sm:$0xff] %vm2373, %v4749
      %4854 = vst.msk [vmem:[#allocation4 + $0x20] sm:$0xff] %vm2373, %v4751
      %4855 = vst.msk [vmem:[#allocation4 + $0x28] sm:$0xff] %vm2373, %v4753
      %4856 = vst.msk [vmem:[#allocation4 + $0x30] sm:$0xff] %vm2373, %v4755
      %4857 = vst.msk [vmem:[#allocation4 + $0x38] sm:$0xff] %vm2373, %v4757
      %4858 = vst.msk [vmem:[#allocation4 + $0x40] sm:$0xff] %vm2373, %v4759
      %4859 = vst.msk [vmem:[#allocation4 + $0x48] sm:$0xff] %vm2373, %v4761
      %4860 = vst.msk [vmem:[#allocation4 + $0x50] sm:$0xff] %vm2373, %v4763
      %4861 = vst.msk [vmem:[#allocation4 + $0x58] sm:$0xff] %vm2373, %v4765
      %4862 = vst.msk [vmem:[#allocation4 + $0x60] sm:$0xff] %vm2373, %v4767
      %4863 = vst.msk [vmem:[#allocation4 + $0x68] sm:$0xff] %vm2373, %v4769
      %4864 = vst.msk [vmem:[#allocation4 + $0x70] sm:$0xff] %vm2373, %v4771
      %4865 = vst.msk [vmem:[#allocation4 + $0x78] sm:$0xff] %vm2373, %v4773
      %4866 = vst.msk [vmem:[#allocation4 + $0x80] sm:$0xff] %vm2373, %v4775
      %4867 = vst.msk [vmem:[#allocation4 + $0x88] sm:$0xff] %vm2373, %v4777
      %4868 = vst.msk [vmem:[#allocation4 + $0x90] sm:$0xff] %vm2373, %v4779
      %4869 = vst.msk [vmem:[#allocation4 + $0x98] sm:$0xff] %vm2373, %v4781
      %4870 = vst.msk [vmem:[#allocation4 + $0xa0] sm:$0xff] %vm2373, %v4783
      %4871 = vst.msk [vmem:[#allocation4 + $0xa8] sm:$0xff] %vm2373, %v4785
      %4872 = vst.msk [vmem:[#allocation4 + $0xb0] sm:$0xff] %vm2373, %v4787
      %4873 = vst.msk [vmem:[#allocation4 + $0xb8] sm:$0xff] %vm2373, %v4789
      %4874 = vst.msk [vmem:[#allocation4 + $0xc0] sm:$0xff] %vm2373, %v4791
      %4875 = vst.msk [vmem:[#allocation4 + $0xc8] sm:$0xff] %vm2373, %v4793
      %4876 = vst.msk [vmem:[#allocation4 + $0xd0] sm:$0xff] %vm2373, %v4795
      %4877 = vst.msk [vmem:[#allocation4 + $0xd8] sm:$0xff] %vm2373, %v4797
      %4878 = vst.msk [vmem:[#allocation4 + $0xe0] sm:$0xff] %vm2373, %v4799
      %4879 = vst.msk [vmem:[#allocation4 + $0xe8] sm:$0xff] %vm2373, %v4801
      %4880 = vst.msk [vmem:[#allocation4 + $0xf0] sm:$0xff] %vm2373, %v4803
      %4881 = vst.msk [vmem:[#allocation4 + $0xf8] sm:$0xff] %vm2373, %v4805
      %4882 = vst.msk [vmem:[#allocation4 + $0x100] sm:$0xff] %vm2373, %v4807
      %4883 = vst.msk [vmem:[#allocation4 + $0x108] sm:$0xff] %vm2373, %v4809
      %4884 = vst.msk [vmem:[#allocation4 + $0x110] sm:$0xff] %vm2373, %v4811
      %4885 = vst.msk [vmem:[#allocation4 + $0x118] sm:$0xff] %vm2373, %v4813
      %v4886 = vld [vmem:[#allocation3 + $0x25] sm:$0xff]
      %v4887 = vld [vmem:[#allocation3 + $0x2d] sm:$0xff]
      %v4888 = vld [vmem:[#allocation3 + $0x35] sm:$0xff]
      %v4889 = vld [vmem:[#allocation3 + $0x3d] sm:$0xff]
      %v4890 = vld [vmem:[#allocation3 + $0x45] sm:$0xff]
      %v4891 = vld [vmem:[#allocation3 + $0x4d] sm:$0xff]
      %v4892 = vld [vmem:[#allocation3 + $0x55] sm:$0xff]
      %v4893 = vld [vmem:[#allocation3 + $0x5d] sm:$0xff]
      %v4894 = vld [vmem:[#allocation3 + $0x65] sm:$0xff]
      %v4895 = vld [vmem:[#allocation3 + $0x6d] sm:$0xff]
      %v4896 = vld [vmem:[#allocation3 + $0x75] sm:$0xff]
      %v4897 = vld [vmem:[#allocation3 + $0x7d] sm:$0xff]
      %v4898 = vld [vmem:[#allocation3 + $0x85] sm:$0xff]
      %v4899 = vld [vmem:[#allocation3 + $0x8d] sm:$0xff]
      %v4900 = vld [vmem:[#allocation3 + $0x95] sm:$0xff]
      %v4901 = vld [vmem:[#allocation3 + $0x9d] sm:$0xff]
      %v4902 = vld [vmem:[#allocation3 + $0xa5] sm:$0xff]
      %v4903 = vld [vmem:[#allocation3 + $0xad] sm:$0xff]
      %v4904 = vld [vmem:[#allocation3 + $0xb5] sm:$0xff]
      %v4905 = vld [vmem:[#allocation3 + $0xbd] sm:$0xff]
      %v4906 = vld [vmem:[#allocation3 + $0xc5] sm:$0xff]
      %v4907 = vld [vmem:[#allocation3 + $0xcd] sm:$0xff]
      %v4908 = vld [vmem:[#allocation3 + $0xd5] sm:$0xff]
      %v4909 = vld [vmem:[#allocation3 + $0xdd] sm:$0xff]
      %v4910 = vld [vmem:[#allocation3 + $0xe5] sm:$0xff]
      %v4911 = vld [vmem:[#allocation3 + $0xed] sm:$0xff]
      %v4912 = vld [vmem:[#allocation3 + $0xf5] sm:$0xff]
      %v4913 = vld [vmem:[#allocation3 + $0xfd] sm:$0xff]
      %v4914 = vld [vmem:[#allocation3 + $0x105] sm:$0xff]
      %v4915 = vld [vmem:[#allocation3 + $0x10d] sm:$0xff]
      %v4916 = vld [vmem:[#allocation3 + $0x115] sm:$0xff]
      %v4917 = vld [vmem:[#allocation3 + $0x11d] sm:$0xff]
      %v4918 = vld [vmem:[#allocation3 + $0x125] sm:$0xff]
      %v4919 = vld [vmem:[#allocation3 + $0x12d] sm:$0xff]
      %v4920 = vld [vmem:[#allocation3 + $0x135] sm:$0xff]
      %v4921 = vld [vmem:[#allocation3 + $0x13d] sm:$0xff]
      %4958 = vrot.lane.b32.xlu0 %v4886, 28
      %v4959 = vpop.permute.xlu0 %4958
      %4960 = vrot.lane.b32.xlu0 %v4887, 28
      %v4961 = vpop.permute.xlu0 %4960
      %4962 = vrot.lane.b32.xlu0 %v4888, 28
      %v4963 = vpop.permute.xlu0 %4962
      %4964 = vrot.lane.b32.xlu0 %v4889, 28
      %v4965 = vpop.permute.xlu0 %4964
      %4966 = vrot.lane.b32.xlu0 %v4890, 28
      %v4967 = vpop.permute.xlu0 %4966
      %4968 = vrot.lane.b32.xlu0 %v4891, 28
      %v4969 = vpop.permute.xlu0 %4968
      %4970 = vrot.lane.b32.xlu0 %v4892, 28
      %v4971 = vpop.permute.xlu0 %4970
      %4972 = vrot.lane.b32.xlu0 %v4893, 28
      %v4973 = vpop.permute.xlu0 %4972
      %4974 = vrot.lane.b32.xlu0 %v4894, 28
      %v4975 = vpop.permute.xlu0 %4974
      %4976 = vrot.lane.b32.xlu0 %v4895, 28
      %v4977 = vpop.permute.xlu0 %4976
      %4978 = vrot.lane.b32.xlu0 %v4896, 28
      %v4979 = vpop.permute.xlu0 %4978
      %4980 = vrot.lane.b32.xlu0 %v4897, 28
      %v4981 = vpop.permute.xlu0 %4980
      %4982 = vrot.lane.b32.xlu0 %v4898, 28
      %v4983 = vpop.permute.xlu0 %4982
      %4984 = vrot.lane.b32.xlu0 %v4899, 28
      %v4985 = vpop.permute.xlu0 %4984
      %4986 = vrot.lane.b32.xlu0 %v4900, 28
      %v4987 = vpop.permute.xlu0 %4986
      %4988 = vrot.lane.b32.xlu0 %v4901, 28
      %v4989 = vpop.permute.xlu0 %4988
      %4990 = vrot.lane.b32.xlu0 %v4902, 28
      %v4991 = vpop.permute.xlu0 %4990
      %4992 = vrot.lane.b32.xlu0 %v4903, 28
      %v4993 = vpop.permute.xlu0 %4992
      %4994 = vrot.lane.b32.xlu0 %v4904, 28
      %v4995 = vpop.permute.xlu0 %4994
      %4996 = vrot.lane.b32.xlu0 %v4905, 28
      %v4997 = vpop.permute.xlu0 %4996
      %4998 = vrot.lane.b32.xlu0 %v4906, 28
      %v4999 = vpop.permute.xlu0 %4998
      %5000 = vrot.lane.b32.xlu0 %v4907, 28
      %v5001 = vpop.permute.xlu0 %5000
      %5002 = vrot.lane.b32.xlu0 %v4908, 28
      %v5003 = vpop.permute.xlu0 %5002
      %5004 = vrot.lane.b32.xlu0 %v4909, 28
      %v5005 = vpop.permute.xlu0 %5004
      %5006 = vrot.lane.b32.xlu0 %v4910, 28
      %v5007 = vpop.permute.xlu0 %5006
      %5008 = vrot.lane.b32.xlu0 %v4911, 28
      %v5009 = vpop.permute.xlu0 %5008
      %5010 = vrot.lane.b32.xlu0 %v4912, 28
      %v5011 = vpop.permute.xlu0 %5010
      %5012 = vrot.lane.b32.xlu0 %v4913, 28
      %v5013 = vpop.permute.xlu0 %5012
      %5014 = vrot.lane.b32.xlu0 %v4914, 28
      %v5015 = vpop.permute.xlu0 %5014
      %5016 = vrot.lane.b32.xlu0 %v4915, 28
      %v5017 = vpop.permute.xlu0 %5016
      %5018 = vrot.lane.b32.xlu0 %v4916, 28
      %v5019 = vpop.permute.xlu0 %5018
      %5020 = vrot.lane.b32.xlu0 %v4917, 28
      %v5021 = vpop.permute.xlu0 %5020
      %5022 = vrot.lane.b32.xlu0 %v4918, 28
      %v5023 = vpop.permute.xlu0 %5022
      %5024 = vrot.lane.b32.xlu0 %v4919, 28
      %v5025 = vpop.permute.xlu0 %5024
      %5026 = vrot.lane.b32.xlu0 %v4920, 28
      %v5027 = vpop.permute.xlu0 %5026
      %5028 = vrot.lane.b32.xlu0 %v4921, 28
      %v5029 = vpop.permute.xlu0 %5028
      %5066 = vst.msk [vmem:[#allocation4] sm:$0xff] %vm2590, %v4959
      %5067 = vst.msk [vmem:[#allocation4 + $0x8] sm:$0xff] %vm2590, %v4961
      %5068 = vst.msk [vmem:[#allocation4 + $0x10] sm:$0xff] %vm2590, %v4963
      %5069 = vst.msk [vmem:[#allocation4 + $0x18] sm:$0xff] %vm2590, %v4965
      %5070 = vst.msk [vmem:[#allocation4 + $0x20] sm:$0xff] %vm2590, %v4967
      %5071 = vst.msk [vmem:[#allocation4 + $0x28] sm:$0xff] %vm2590, %v4969
      %5072 = vst.msk [vmem:[#allocation4 + $0x30] sm:$0xff] %vm2590, %v4971
      %5073 = vst.msk [vmem:[#allocation4 + $0x38] sm:$0xff] %vm2590, %v4973
      %5074 = vst.msk [vmem:[#allocation4 + $0x40] sm:$0xff] %vm2590, %v4975
      %5075 = vst.msk [vmem:[#allocation4 + $0x48] sm:$0xff] %vm2590, %v4977
      %5076 = vst.msk [vmem:[#allocation4 + $0x50] sm:$0xff] %vm2590, %v4979
      %5077 = vst.msk [vmem:[#allocation4 + $0x58] sm:$0xff] %vm2590, %v4981
      %5078 = vst.msk [vmem:[#allocation4 + $0x60] sm:$0xff] %vm2590, %v4983
      %5079 = vst.msk [vmem:[#allocation4 + $0x68] sm:$0xff] %vm2590, %v4985
      %5080 = vst.msk [vmem:[#allocation4 + $0x70] sm:$0xff] %vm2590, %v4987
      %5081 = vst.msk [vmem:[#allocation4 + $0x78] sm:$0xff] %vm2590, %v4989
      %5082 = vst.msk [vmem:[#allocation4 + $0x80] sm:$0xff] %vm2590, %v4991
      %5083 = vst.msk [vmem:[#allocation4 + $0x88] sm:$0xff] %vm2590, %v4993
      %5084 = vst.msk [vmem:[#allocation4 + $0x90] sm:$0xff] %vm2590, %v4995
      %5085 = vst.msk [vmem:[#allocation4 + $0x98] sm:$0xff] %vm2590, %v4997
      %5086 = vst.msk [vmem:[#allocation4 + $0xa0] sm:$0xff] %vm2590, %v4999
      %5087 = vst.msk [vmem:[#allocation4 + $0xa8] sm:$0xff] %vm2590, %v5001
      %5088 = vst.msk [vmem:[#allocation4 + $0xb0] sm:$0xff] %vm2590, %v5003
      %5089 = vst.msk [vmem:[#allocation4 + $0xb8] sm:$0xff] %vm2590, %v5005
      %5090 = vst.msk [vmem:[#allocation4 + $0xc0] sm:$0xff] %vm2590, %v5007
      %5091 = vst.msk [vmem:[#allocation4 + $0xc8] sm:$0xff] %vm2590, %v5009
      %5092 = vst.msk [vmem:[#allocation4 + $0xd0] sm:$0xff] %vm2590, %v5011
      %5093 = vst.msk [vmem:[#allocation4 + $0xd8] sm:$0xff] %vm2590, %v5013
      %5094 = vst.msk [vmem:[#allocation4 + $0xe0] sm:$0xff] %vm2590, %v5015
      %5095 = vst.msk [vmem:[#allocation4 + $0xe8] sm:$0xff] %vm2590, %v5017
      %5096 = vst.msk [vmem:[#allocation4 + $0xf0] sm:$0xff] %vm2590, %v5019
      %5097 = vst.msk [vmem:[#allocation4 + $0xf8] sm:$0xff] %vm2590, %v5021
      %5098 = vst.msk [vmem:[#allocation4 + $0x100] sm:$0xff] %vm2590, %v5023
      %5099 = vst.msk [vmem:[#allocation4 + $0x108] sm:$0xff] %vm2590, %v5025
      %5100 = vst.msk [vmem:[#allocation4 + $0x110] sm:$0xff] %vm2590, %v5027
      %5101 = vst.msk [vmem:[#allocation4 + $0x118] sm:$0xff] %vm2590, %v5029
      %v5102 = vld [vmem:[#allocation3 + $0x26] sm:$0xff]
      %v5103 = vld [vmem:[#allocation3 + $0x2e] sm:$0xff]
      %v5104 = vld [vmem:[#allocation3 + $0x36] sm:$0xff]
      %v5105 = vld [vmem:[#allocation3 + $0x3e] sm:$0xff]
      %v5106 = vld [vmem:[#allocation3 + $0x46] sm:$0xff]
      %v5107 = vld [vmem:[#allocation3 + $0x4e] sm:$0xff]
      %v5108 = vld [vmem:[#allocation3 + $0x56] sm:$0xff]
      %v5109 = vld [vmem:[#allocation3 + $0x5e] sm:$0xff]
      %v5110 = vld [vmem:[#allocation3 + $0x66] sm:$0xff]
      %v5111 = vld [vmem:[#allocation3 + $0x6e] sm:$0xff]
      %v5112 = vld [vmem:[#allocation3 + $0x76] sm:$0xff]
      %v5113 = vld [vmem:[#allocation3 + $0x7e] sm:$0xff]
      %v5114 = vld [vmem:[#allocation3 + $0x86] sm:$0xff]
      %v5115 = vld [vmem:[#allocation3 + $0x8e] sm:$0xff]
      %v5116 = vld [vmem:[#allocation3 + $0x96] sm:$0xff]
      %v5117 = vld [vmem:[#allocation3 + $0x9e] sm:$0xff]
      %v5118 = vld [vmem:[#allocation3 + $0xa6] sm:$0xff]
      %v5119 = vld [vmem:[#allocation3 + $0xae] sm:$0xff]
      %v5120 = vld [vmem:[#allocation3 + $0xb6] sm:$0xff]
      %v5121 = vld [vmem:[#allocation3 + $0xbe] sm:$0xff]
      %v5122 = vld [vmem:[#allocation3 + $0xc6] sm:$0xff]
      %v5123 = vld [vmem:[#allocation3 + $0xce] sm:$0xff]
      %v5124 = vld [vmem:[#allocation3 + $0xd6] sm:$0xff]
      %v5125 = vld [vmem:[#allocation3 + $0xde] sm:$0xff]
      %v5126 = vld [vmem:[#allocation3 + $0xe6] sm:$0xff]
      %v5127 = vld [vmem:[#allocation3 + $0xee] sm:$0xff]
      %v5128 = vld [vmem:[#allocation3 + $0xf6] sm:$0xff]
      %v5129 = vld [vmem:[#allocation3 + $0xfe] sm:$0xff]
      %v5130 = vld [vmem:[#allocation3 + $0x106] sm:$0xff]
      %v5131 = vld [vmem:[#allocation3 + $0x10e] sm:$0xff]
      %v5132 = vld [vmem:[#allocation3 + $0x116] sm:$0xff]
      %v5133 = vld [vmem:[#allocation3 + $0x11e] sm:$0xff]
      %v5134 = vld [vmem:[#allocation3 + $0x126] sm:$0xff]
      %v5135 = vld [vmem:[#allocation3 + $0x12e] sm:$0xff]
      %v5136 = vld [vmem:[#allocation3 + $0x136] sm:$0xff]
      %v5137 = vld [vmem:[#allocation3 + $0x13e] sm:$0xff]
      %5174 = vrot.lane.b32.xlu0 %v5102, 32
      %v5175 = vpop.permute.xlu0 %5174
      %5176 = vrot.lane.b32.xlu0 %v5103, 32
      %v5177 = vpop.permute.xlu0 %5176
      %5178 = vrot.lane.b32.xlu0 %v5104, 32
      %v5179 = vpop.permute.xlu0 %5178
      %5180 = vrot.lane.b32.xlu0 %v5105, 32
      %v5181 = vpop.permute.xlu0 %5180
      %5182 = vrot.lane.b32.xlu0 %v5106, 32
      %v5183 = vpop.permute.xlu0 %5182
      %5184 = vrot.lane.b32.xlu0 %v5107, 32
      %v5185 = vpop.permute.xlu0 %5184
      %5186 = vrot.lane.b32.xlu0 %v5108, 32
      %v5187 = vpop.permute.xlu0 %5186
      %5188 = vrot.lane.b32.xlu0 %v5109, 32
      %v5189 = vpop.permute.xlu0 %5188
      %5190 = vrot.lane.b32.xlu0 %v5110, 32
      %v5191 = vpop.permute.xlu0 %5190
      %5192 = vrot.lane.b32.xlu0 %v5111, 32
      %v5193 = vpop.permute.xlu0 %5192
      %5194 = vrot.lane.b32.xlu0 %v5112, 32
      %v5195 = vpop.permute.xlu0 %5194
      %5196 = vrot.lane.b32.xlu0 %v5113, 32
      %v5197 = vpop.permute.xlu0 %5196
      %5198 = vrot.lane.b32.xlu0 %v5114, 32
      %v5199 = vpop.permute.xlu0 %5198
      %5200 = vrot.lane.b32.xlu0 %v5115, 32
      %v5201 = vpop.permute.xlu0 %5200
      %5202 = vrot.lane.b32.xlu0 %v5116, 32
      %v5203 = vpop.permute.xlu0 %5202
      %5204 = vrot.lane.b32.xlu0 %v5117, 32
      %v5205 = vpop.permute.xlu0 %5204
      %5206 = vrot.lane.b32.xlu0 %v5118, 32
      %v5207 = vpop.permute.xlu0 %5206
      %5208 = vrot.lane.b32.xlu0 %v5119, 32
      %v5209 = vpop.permute.xlu0 %5208
      %5210 = vrot.lane.b32.xlu0 %v5120, 32
      %v5211 = vpop.permute.xlu0 %5210
      %5212 = vrot.lane.b32.xlu0 %v5121, 32
      %v5213 = vpop.permute.xlu0 %5212
      %5214 = vrot.lane.b32.xlu0 %v5122, 32
      %v5215 = vpop.permute.xlu0 %5214
      %5216 = vrot.lane.b32.xlu0 %v5123, 32
      %v5217 = vpop.permute.xlu0 %5216
      %5218 = vrot.lane.b32.xlu0 %v5124, 32
      %v5219 = vpop.permute.xlu0 %5218
      %5220 = vrot.lane.b32.xlu0 %v5125, 32
      %v5221 = vpop.permute.xlu0 %5220
      %5222 = vrot.lane.b32.xlu0 %v5126, 32
      %v5223 = vpop.permute.xlu0 %5222
      %5224 = vrot.lane.b32.xlu0 %v5127, 32
      %v5225 = vpop.permute.xlu0 %5224
      %5226 = vrot.lane.b32.xlu0 %v5128, 32
      %v5227 = vpop.permute.xlu0 %5226
      %5228 = vrot.lane.b32.xlu0 %v5129, 32
      %v5229 = vpop.permute.xlu0 %5228
      %5230 = vrot.lane.b32.xlu0 %v5130, 32
      %v5231 = vpop.permute.xlu0 %5230
      %5232 = vrot.lane.b32.xlu0 %v5131, 32
      %v5233 = vpop.permute.xlu0 %5232
      %5234 = vrot.lane.b32.xlu0 %v5132, 32
      %v5235 = vpop.permute.xlu0 %5234
      %5236 = vrot.lane.b32.xlu0 %v5133, 32
      %v5237 = vpop.permute.xlu0 %5236
      %5238 = vrot.lane.b32.xlu0 %v5134, 32
      %v5239 = vpop.permute.xlu0 %5238
      %5240 = vrot.lane.b32.xlu0 %v5135, 32
      %v5241 = vpop.permute.xlu0 %5240
      %5242 = vrot.lane.b32.xlu0 %v5136, 32
      %v5243 = vpop.permute.xlu0 %5242
      %5244 = vrot.lane.b32.xlu0 %v5137, 32
      %v5245 = vpop.permute.xlu0 %5244
      %5282 = vst.msk [vmem:[#allocation4] sm:$0xff] %vm2807, %v5175
      %5283 = vst.msk [vmem:[#allocation4 + $0x8] sm:$0xff] %vm2807, %v5177
      %5284 = vst.msk [vmem:[#allocation4 + $0x10] sm:$0xff] %vm2807, %v5179
      %5285 = vst.msk [vmem:[#allocation4 + $0x18] sm:$0xff] %vm2807, %v5181
      %5286 = vst.msk [vmem:[#allocation4 + $0x20] sm:$0xff] %vm2807, %v5183
      %5287 = vst.msk [vmem:[#allocation4 + $0x28] sm:$0xff] %vm2807, %v5185
      %5288 = vst.msk [vmem:[#allocation4 + $0x30] sm:$0xff] %vm2807, %v5187
      %5289 = vst.msk [vmem:[#allocation4 + $0x38] sm:$0xff] %vm2807, %v5189
      %5290 = vst.msk [vmem:[#allocation4 + $0x40] sm:$0xff] %vm2807, %v5191
      %5291 = vst.msk [vmem:[#allocation4 + $0x48] sm:$0xff] %vm2807, %v5193
      %5292 = vst.msk [vmem:[#allocation4 + $0x50] sm:$0xff] %vm2807, %v5195
      %5293 = vst.msk [vmem:[#allocation4 + $0x58] sm:$0xff] %vm2807, %v5197
      %5294 = vst.msk [vmem:[#allocation4 + $0x60] sm:$0xff] %vm2807, %v5199
      %5295 = vst.msk [vmem:[#allocation4 + $0x68] sm:$0xff] %vm2807, %v5201
      %5296 = vst.msk [vmem:[#allocation4 + $0x70] sm:$0xff] %vm2807, %v5203
      %5297 = vst.msk [vmem:[#allocation4 + $0x78] sm:$0xff] %vm2807, %v5205
      %5298 = vst.msk [vmem:[#allocation4 + $0x80] sm:$0xff] %vm2807, %v5207
      %5299 = vst.msk [vmem:[#allocation4 + $0x88] sm:$0xff] %vm2807, %v5209
      %5300 = vst.msk [vmem:[#allocation4 + $0x90] sm:$0xff] %vm2807, %v5211
      %5301 = vst.msk [vmem:[#allocation4 + $0x98] sm:$0xff] %vm2807, %v5213
      %5302 = vst.msk [vmem:[#allocation4 + $0xa0] sm:$0xff] %vm2807, %v5215
      %5303 = vst.msk [vmem:[#allocation4 + $0xa8] sm:$0xff] %vm2807, %v5217
      %5304 = vst.msk [vmem:[#allocation4 + $0xb0] sm:$0xff] %vm2807, %v5219
      %5305 = vst.msk [vmem:[#allocation4 + $0xb8] sm:$0xff] %vm2807, %v5221
      %5306 = vst.msk [vmem:[#allocation4 + $0xc0] sm:$0xff] %vm2807, %v5223
      %5307 = vst.msk [vmem:[#allocation4 + $0xc8] sm:$0xff] %vm2807, %v5225
      %5308 = vst.msk [vmem:[#allocation4 + $0xd0] sm:$0xff] %vm2807, %v5227
      %5309 = vst.msk [vmem:[#allocation4 + $0xd8] sm:$0xff] %vm2807, %v5229
      %5310 = vst.msk [vmem:[#allocation4 + $0xe0] sm:$0xff] %vm2807, %v5231
      %5311 = vst.msk [vmem:[#allocation4 + $0xe8] sm:$0xff] %vm2807, %v5233
      %5312 = vst.msk [vmem:[#allocation4 + $0xf0] sm:$0xff] %vm2807, %v5235
      %5313 = vst.msk [vmem:[#allocation4 + $0xf8] sm:$0xff] %vm2807, %v5237
      %5314 = vst.msk [vmem:[#allocation4 + $0x100] sm:$0xff] %vm2807, %v5239
      %5315 = vst.msk [vmem:[#allocation4 + $0x108] sm:$0xff] %vm2807, %v5241
      %5316 = vst.msk [vmem:[#allocation4 + $0x110] sm:$0xff] %vm2807, %v5243
      %5317 = vst.msk [vmem:[#allocation4 + $0x118] sm:$0xff] %vm2807, %v5245
      %v5318 = vld [vmem:[#allocation4] sm:$0xff]
      %v5319 = vld [vmem:[#allocation4 + $0x8] sm:$0xff]
      %v5320 = vld [vmem:[#allocation4 + $0x10] sm:$0xff]
      %v5321 = vld [vmem:[#allocation4 + $0x18] sm:$0xff]
      %v5322 = vld [vmem:[#allocation4 + $0x20] sm:$0xff]
      %v5323 = vld [vmem:[#allocation4 + $0x28] sm:$0xff]
      %v5324 = vld [vmem:[#allocation4 + $0x30] sm:$0xff]
      %v5325 = vld [vmem:[#allocation4 + $0x38] sm:$0xff]
      %v5326 = vld [vmem:[#allocation4 + $0x40] sm:$0xff]
      %v5327 = vld [vmem:[#allocation4 + $0x48] sm:$0xff]
      %v5328 = vld [vmem:[#allocation4 + $0x50] sm:$0xff]
      %v5329 = vld [vmem:[#allocation4 + $0x58] sm:$0xff]
      %v5330 = vld [vmem:[#allocation4 + $0x60] sm:$0xff]
      %v5331 = vld [vmem:[#allocation4 + $0x68] sm:$0xff]
      %v5332 = vld [vmem:[#allocation4 + $0x70] sm:$0xff]
      %v5333 = vld [vmem:[#allocation4 + $0x78] sm:$0xff]
      %v5334 = vld [vmem:[#allocation4 + $0x80] sm:$0xff]
      %v5335 = vld [vmem:[#allocation4 + $0x88] sm:$0xff]
      %v5336 = vld [vmem:[#allocation4 + $0x90] sm:$0xff]
      %v5337 = vld [vmem:[#allocation4 + $0x98] sm:$0xff]
      %v5338 = vld [vmem:[#allocation4 + $0xa0] sm:$0xff]
      %v5339 = vld [vmem:[#allocation4 + $0xa8] sm:$0xff]
      %v5340 = vld [vmem:[#allocation4 + $0xb0] sm:$0xff]
      %v5341 = vld [vmem:[#allocation4 + $0xb8] sm:$0xff]
      %v5342 = vld [vmem:[#allocation4 + $0xc0] sm:$0xff]
      %v5343 = vld [vmem:[#allocation4 + $0xc8] sm:$0xff]
      %v5344 = vld [vmem:[#allocation4 + $0xd0] sm:$0xff]
      %v5345 = vld [vmem:[#allocation4 + $0xd8] sm:$0xff]
      %v5346 = vld [vmem:[#allocation4 + $0xe0] sm:$0xff]
      %v5347 = vld [vmem:[#allocation4 + $0xe8] sm:$0xff]
      %v5348 = vld [vmem:[#allocation4 + $0xf0] sm:$0xff]
      %v5349 = vld [vmem:[#allocation4 + $0xf8] sm:$0xff]
      %v5350 = vld [vmem:[#allocation4 + $0x100] sm:$0xff]
      %v5351 = vld [vmem:[#allocation4 + $0x108] sm:$0xff]
      %v5352 = vld [vmem:[#allocation4 + $0x110] sm:$0xff]
      %v5353 = vld [vmem:[#allocation4 + $0x118] sm:$0xff]
      %v5354 = vld [vmem:[%s4] sm:$0xff]
      %v5355 = vld [vmem:[%s4 + $0x8] sm:$0xff]
      %v5356 = vld [vmem:[%s4 + $0x10] sm:$0xff]
      %v5357 = vld [vmem:[%s4 + $0x18] sm:$0xff]
      %v5358 = vld [vmem:[%s4 + $0x20] sm:$0xf]
      %v5360 = vsel %vm2885, %v5318, 0
      %v5363 = vsel %vm2885, %v5319, 0
      %v5366 = vsel %vm2885, %v5320, 0
      %v5369 = vsel %vm2885, %v5321, 0
      %v5372 = vsel %vm2885, %v5322, 0
      %v5375 = vsel %vm2885, %v5323, 0
      %v5378 = vsel %vm2885, %v5324, 0
      %v5381 = vsel %vm2885, %v5325, 0
      %v5384 = vsel %vm2885, %v5326, 0
      %v5387 = vsel %vm2885, %v5327, 0
      %v5390 = vsel %vm2885, %v5328, 0
      %v5393 = vsel %vm2885, %v5329, 0
      %v5396 = vsel %vm2885, %v5330, 0
      %v5399 = vsel %vm2885, %v5331, 0
      %v5402 = vsel %vm2885, %v5332, 0
      %v5405 = vsel %vm2885, %v5333, 0
      %v5408 = vsel %vm2885, %v5334, 0
      %v5411 = vsel %vm2885, %v5335, 0
      %v5414 = vsel %vm2885, %v5336, 0
      %v5417 = vsel %vm2885, %v5337, 0
      %v5420 = vsel %vm2885, %v5338, 0
      %v5423 = vsel %vm2885, %v5339, 0
      %v5426 = vsel %vm2885, %v5340, 0
      %v5429 = vsel %vm2885, %v5341, 0
      %v5432 = vsel %vm2885, %v5342, 0
      %v5435 = vsel %vm2885, %v5343, 0
      %v5438 = vsel %vm2885, %v5344, 0
      %v5441 = vsel %vm2885, %v5345, 0
      %v5444 = vsel %vm2885, %v5346, 0
      %v5447 = vsel %vm2885, %v5347, 0
      %v5450 = vsel %vm2885, %v5348, 0
      %v5453 = vsel %vm2885, %v5349, 0
      %v5456 = vsel %vm2885, %v5350, 0
      %v5459 = vsel %vm2885, %v5351, 0
      %v5462 = vsel %vm2885, %v5352, 0
      %v5465 = vsel %vm2885, %v5353, 0
      %v5468 = vsel %vm2994, %v5358, 0
      %5470 = vmatprep.subr.mxu0 0.0
      %5471 = vmatpush1.msra.mxu0 0.0
      %5472 = vmatprep.subr.mxu0 0.0
      %5473 = vmatpush1.msra.mxu0 0.0
      %5474 = vmatprep.subr.mxu0 0.0
      %5475 = vmatpush1.msra.mxu0 0.0
      %5476 = vmatprep.subr.mxu0 0.0
      %5477 = vmatpush1.msra.mxu0 0.0
      %5478 = vmatprep.subr.mxu0 0.0
      %5479 = vmatpush1.msra.mxu0 0.0
      %5480 = vmatprep.subr.mxu0 0.0
      %5481 = vmatpush1.msra.mxu0 0.0
      %5482 = vmatprep.subr.mxu0 0.0
      %5483 = vmatpush1.msra.mxu0 0.0
      %5484 = vmatprep.subr.mxu0 0.0
      %5485 = vmatpush1.msra.mxu0 0.0
      %5486 = vmatprep.subr.mxu0 0.0
      %5487 = vmatpush1.msra.mxu0 0.0
      %5488 = vmatprep.subr.mxu0 0.0
      %5489 = vmatpush1.msra.mxu0 0.0
      %5490 = vmatprep.subr.mxu0 0.0
      %5491 = vmatpush1.msra.mxu0 0.0
      %5492 = vmatprep.subr.mxu0 0.0
      %5493 = vmatpush1.msra.mxu0 %v5468
      %5494 = vmatprep.subr.mxu0 0.0
      %5495 = vmatpush1.msra.mxu0 %v5357
      %5496 = vmatprep.subr.mxu0 0.0
      %5497 = vmatpush1.msra.mxu0 %v5356
      %5498 = vmatprep.subr.mxu0 0.0
      %5499 = vmatpush1.msra.mxu0 %v5355
      %5500 = vmatprep.subr.mxu0 0.0
      %5501 = vmatpush1.msra.mxu0 %v5354
      %5502 = vmatprep.subr.mxu0 0.0
      %5503 = vmatpush2.msra.mxu0 0.0
      %5504 = vmatprep.subr.mxu0 0.0
      %5505 = vmatpush2.msra.mxu0 0.0
      %5506 = vmatprep.subr.mxu0 0.0
      %5507 = vmatpush2.msra.mxu0 0.0
      %5508 = vmatprep.subr.mxu0 0.0
      %5509 = vmatpush2.msra.mxu0 0.0
      %5510 = vmatprep.subr.mxu0 0.0
      %5511 = vmatpush2.msra.mxu0 0.0
      %5512 = vmatprep.subr.mxu0 0.0
      %5513 = vmatpush2.msra.mxu0 0.0
      %5514 = vmatprep.subr.mxu0 0.0
      %5515 = vmatpush2.msra.mxu0 0.0
      %5516 = vmatprep.subr.mxu0 0.0
      %5517 = vmatpush2.msra.mxu0 0.0
      %5518 = vmatprep.subr.mxu0 0.0
      %5519 = vmatpush2.msra.mxu0 0.0
      %5520 = vmatprep.subr.mxu0 0.0
      %5521 = vmatpush2.msra.mxu0 0.0
      %5522 = vmatprep.subr.mxu0 0.0
      %5523 = vmatpush2.msra.mxu0 0.0
      %5524 = vmatprep.subr.mxu0 0.0
      %5525 = vmatpush2.msra.mxu0 0.0
      %5526 = vmatprep.subr.mxu0 0.0
      %5527 = vmatpush2.msra.mxu0 0.0
      %5528 = vmatprep.subr.mxu0 0.0
      %5529 = vmatpush2.msra.mxu0 0.0
      %5530 = vmatprep.subr.mxu0 0.0
      %5531 = vmatpush2.msra.mxu0 0.0
      %5532 = vmatprep.subr.mxu0 0.0
      %5533 = vmatpush2.msra.mxu0 0.0
      %5534 = vmatprep.mubr.f32.mxu0 0.0
      %5535 = vmatmul.mubr.f32.gmra.mxu0 %v5360
      %v5536 = vpop.f32.mrf.mxu0
      %v5537 = vadd.f32 0.0, %v5536
      %v5538 = vpop.f32.mrf.mxu0
      %5539 = vmatprep.mubr.f32.mxu0 0.0
      %5540 = vmatmul.mubr.f32.gmra.mxu0 %v5363
      %v5541 = vpop.f32.mrf.mxu0
      %v5542 = vadd.f32 0.0, %v5541
      %v5543 = vpop.f32.mrf.mxu0
      %5544 = vmatprep.mubr.f32.mxu0 0.0
      %5545 = vmatmul.mubr.f32.gmra.mxu0 %v5366
      %v5546 = vpop.f32.mrf.mxu0
      %v5547 = vadd.f32 0.0, %v5546
      %v5548 = vpop.f32.mrf.mxu0
      %5549 = vmatprep.mubr.f32.mxu0 0.0
      %5550 = vmatmul.mubr.f32.gmra.mxu0 %v5369
      %v5551 = vpop.f32.mrf.mxu0
      %v5552 = vadd.f32 0.0, %v5551
      %v5553 = vpop.f32.mrf.mxu0
      %5554 = vmatprep.mubr.f32.mxu0 0.0
      %5555 = vmatmul.mubr.f32.gmra.mxu0 %v5372
      %v5556 = vpop.f32.mrf.mxu0
      %v5557 = vadd.f32 0.0, %v5556
      %v5558 = vpop.f32.mrf.mxu0
      %5559 = vmatprep.mubr.f32.mxu0 0.0
      %5560 = vmatmul.mubr.f32.gmra.mxu0 %v5375
      %v5561 = vpop.f32.mrf.mxu0
      %v5562 = vadd.f32 0.0, %v5561
      %v5563 = vpop.f32.mrf.mxu0
      %5564 = vmatprep.mubr.f32.mxu0 0.0
      %5565 = vmatmul.mubr.f32.gmra.mxu0 %v5378
      %v5566 = vpop.f32.mrf.mxu0
      %v5567 = vadd.f32 0.0, %v5566
      %v5568 = vpop.f32.mrf.mxu0
      %5569 = vmatprep.mubr.f32.mxu0 0.0
      %5570 = vmatmul.mubr.f32.gmra.mxu0 %v5381
      %v5571 = vpop.f32.mrf.mxu0
      %v5572 = vadd.f32 0.0, %v5571
      %v5573 = vpop.f32.mrf.mxu0
      %5574 = vmatprep.mubr.f32.mxu0 0.0
      %5575 = vmatmul.mubr.f32.gmra.mxu0 %v5384
      %v5576 = vpop.f32.mrf.mxu0
      %v5577 = vadd.f32 0.0, %v5576
      %v5578 = vpop.f32.mrf.mxu0
      %5579 = vmatprep.mubr.f32.mxu0 0.0
      %5580 = vmatmul.mubr.f32.gmra.mxu0 %v5387
      %v5581 = vpop.f32.mrf.mxu0
      %v5582 = vadd.f32 0.0, %v5581
      %v5583 = vpop.f32.mrf.mxu0
      %5584 = vmatprep.mubr.f32.mxu0 0.0
      %5585 = vmatmul.mubr.f32.gmra.mxu0 %v5390
      %v5586 = vpop.f32.mrf.mxu0
      %v5587 = vadd.f32 0.0, %v5586
      %v5588 = vpop.f32.mrf.mxu0
      %5589 = vmatprep.mubr.f32.mxu0 0.0
      %5590 = vmatmul.mubr.f32.gmra.mxu0 %v5393
      %v5591 = vpop.f32.mrf.mxu0
      %v5592 = vadd.f32 0.0, %v5591
      %v5593 = vpop.f32.mrf.mxu0
      %5594 = vmatprep.mubr.f32.mxu0 0.0
      %5595 = vmatmul.mubr.f32.gmra.mxu0 %v5396
      %v5596 = vpop.f32.mrf.mxu0
      %v5597 = vadd.f32 0.0, %v5596
      %v5598 = vpop.f32.mrf.mxu0
      %5599 = vmatprep.mubr.f32.mxu0 0.0
      %5600 = vmatmul.mubr.f32.gmra.mxu0 %v5399
      %v5601 = vpop.f32.mrf.mxu0
      %v5602 = vadd.f32 0.0, %v5601
      %v5603 = vpop.f32.mrf.mxu0
      %5604 = vmatprep.mubr.f32.mxu0 0.0
      %5605 = vmatmul.mubr.f32.gmra.mxu0 %v5402
      %v5606 = vpop.f32.mrf.mxu0
      %v5607 = vadd.f32 0.0, %v5606
      %v5608 = vpop.f32.mrf.mxu0
      %5609 = vmatprep.mubr.f32.mxu0 0.0
      %5610 = vmatmul.mubr.f32.gmra.mxu0 %v5405
      %v5611 = vpop.f32.mrf.mxu0
      %v5612 = vadd.f32 0.0, %v5611
      %v5613 = vpop.f32.mrf.mxu0
      %5614 = vmatprep.mubr.f32.mxu0 0.0
      %5615 = vmatmul.mubr.f32.gmra.mxu0 %v5408
      %v5616 = vpop.f32.mrf.mxu0
      %v5617 = vadd.f32 0.0, %v5616
      %v5618 = vpop.f32.mrf.mxu0
      %5619 = vmatprep.mubr.f32.mxu0 0.0
      %5620 = vmatmul.mubr.f32.gmra.mxu0 %v5411
      %v5621 = vpop.f32.mrf.mxu0
      %v5622 = vadd.f32 0.0, %v5621
      %v5623 = vpop.f32.mrf.mxu0
      %5624 = vmatprep.mubr.f32.mxu0 0.0
      %5625 = vmatmul.mubr.f32.gmra.mxu0 %v5414
      %v5626 = vpop.f32.mrf.mxu0
      %v5627 = vadd.f32 0.0, %v5626
      %v5628 = vpop.f32.mrf.mxu0
      %5629 = vmatprep.mubr.f32.mxu0 0.0
      %5630 = vmatmul.mubr.f32.gmra.mxu0 %v5417
      %v5631 = vpop.f32.mrf.mxu0
      %v5632 = vadd.f32 0.0, %v5631
      %v5633 = vpop.f32.mrf.mxu0
      %5634 = vmatprep.mubr.f32.mxu0 0.0
      %5635 = vmatmul.mubr.f32.gmra.mxu0 %v5420
      %v5636 = vpop.f32.mrf.mxu0
      %v5637 = vadd.f32 0.0, %v5636
      %v5638 = vpop.f32.mrf.mxu0
      %5639 = vmatprep.mubr.f32.mxu0 0.0
      %5640 = vmatmul.mubr.f32.gmra.mxu0 %v5423
      %v5641 = vpop.f32.mrf.mxu0
      %v5642 = vadd.f32 0.0, %v5641
      %v5643 = vpop.f32.mrf.mxu0
      %5644 = vmatprep.mubr.f32.mxu0 0.0
      %5645 = vmatmul.mubr.f32.gmra.mxu0 %v5426
      %v5646 = vpop.f32.mrf.mxu0
      %v5647 = vadd.f32 0.0, %v5646
      %v5648 = vpop.f32.mrf.mxu0
      %5649 = vmatprep.mubr.f32.mxu0 0.0
      %5650 = vmatmul.mubr.f32.gmra.mxu0 %v5429
      %v5651 = vpop.f32.mrf.mxu0
      %v5652 = vadd.f32 0.0, %v5651
      %v5653 = vpop.f32.mrf.mxu0
      %5654 = vmatprep.mubr.f32.mxu0 0.0
      %5655 = vmatmul.mubr.f32.gmra.mxu0 %v5432
      %v5656 = vpop.f32.mrf.mxu0
      %v5657 = vadd.f32 0.0, %v5656
      %v5658 = vpop.f32.mrf.mxu0
      %5659 = vmatprep.mubr.f32.mxu0 0.0
      %5660 = vmatmul.mubr.f32.gmra.mxu0 %v5435
      %v5661 = vpop.f32.mrf.mxu0
      %v5662 = vadd.f32 0.0, %v5661
      %v5663 = vpop.f32.mrf.mxu0
      %5664 = vmatprep.mubr.f32.mxu0 0.0
      %5665 = vmatmul.mubr.f32.gmra.mxu0 %v5438
      %v5666 = vpop.f32.mrf.mxu0
      %v5667 = vadd.f32 0.0, %v5666
      %v5668 = vpop.f32.mrf.mxu0
      %5669 = vmatprep.mubr.f32.mxu0 0.0
      %5670 = vmatmul.mubr.f32.gmra.mxu0 %v5441
      %v5671 = vpop.f32.mrf.mxu0
      %v5672 = vadd.f32 0.0, %v5671
      %v5673 = vpop.f32.mrf.mxu0
      %5674 = vmatprep.mubr.f32.mxu0 0.0
      %5675 = vmatmul.mubr.f32.gmra.mxu0 %v5444
      %v5676 = vpop.f32.mrf.mxu0
      %v5677 = vadd.f32 0.0, %v5676
      %v5678 = vpop.f32.mrf.mxu0
      %5679 = vmatprep.mubr.f32.mxu0 0.0
      %5680 = vmatmul.mubr.f32.gmra.mxu0 %v5447
      %v5681 = vpop.f32.mrf.mxu0
      %v5682 = vadd.f32 0.0, %v5681
      %v5683 = vpop.f32.mrf.mxu0
      %5684 = vmatprep.mubr.f32.mxu0 0.0
      %5685 = vmatmul.mubr.f32.gmra.mxu0 %v5450
      %v5686 = vpop.f32.mrf.mxu0
      %v5687 = vadd.f32 0.0, %v5686
      %v5688 = vpop.f32.mrf.mxu0
      %5689 = vmatprep.mubr.f32.mxu0 0.0
      %5690 = vmatmul.mubr.f32.gmra.mxu0 %v5453
      %v5691 = vpop.f32.mrf.mxu0
      %v5692 = vadd.f32 0.0, %v5691
      %v5693 = vpop.f32.mrf.mxu0
      %5694 = vmatprep.mubr.f32.mxu0 0.0
      %5695 = vmatmul.mubr.f32.gmra.mxu0 %v5456
      %v5696 = vpop.f32.mrf.mxu0
      %v5697 = vadd.f32 0.0, %v5696
      %v5698 = vpop.f32.mrf.mxu0
      %5699 = vmatprep.mubr.f32.mxu0 0.0
      %5700 = vmatmul.mubr.f32.gmra.mxu0 %v5459
      %v5701 = vpop.f32.mrf.mxu0
      %v5702 = vadd.f32 0.0, %v5701
      %v5703 = vpop.f32.mrf.mxu0
      %5704 = vmatprep.mubr.f32.mxu0 0.0
      %5705 = vmatmul.mubr.f32.gmra.mxu0 %v5462
      %v5706 = vpop.f32.mrf.mxu0
      %v5707 = vadd.f32 0.0, %v5706
      %v5708 = vpop.f32.mrf.mxu0
      %5709 = vmatprep.mubr.f32.mxu0 0.0
      %5710 = vmatmul.mubr.f32.gmra.mxu0 %v5465
      %v5711 = vpop.f32.mrf.mxu0
      %v5712 = vadd.f32 0.0, %v5711
      %v5713 = vpop.f32.mrf.mxu0
      %5714 = vdwg.mxu0
      %v5715 = vld [vmem:[#allocation2 + $0x13] sm:$0xff]
      %v5716 = vld [vmem:[#allocation2 + $0x1b] sm:$0xff]
      %v5717 = vld [vmem:[#allocation2 + $0x23] sm:$0xff]
      %v5718 = vld [vmem:[#allocation2 + $0x2b] sm:$0xff]
      %v5719 = vld [vmem:[#allocation2 + $0x33] sm:$0xff]
      %v5720 = vld [vmem:[#allocation2 + $0x3b] sm:$0xff]
      %v5721 = vld [vmem:[#allocation2 + $0x43] sm:$0xff]
      %v5722 = vld [vmem:[#allocation2 + $0x4b] sm:$0xff]
      %v5723 = vld [vmem:[#allocation2 + $0x53] sm:$0xff]
      %v5724 = vld [vmem:[#allocation2 + $0x5b] sm:$0xff]
      %v5725 = vld [vmem:[#allocation2 + $0x63] sm:$0xff]
      %v5726 = vld [vmem:[#allocation2 + $0x6b] sm:$0xff]
      %v5727 = vld [vmem:[#allocation2 + $0x73] sm:$0xff]
      %v5728 = vld [vmem:[#allocation2 + $0x7b] sm:$0xff]
      %v5729 = vld [vmem:[#allocation2 + $0x83] sm:$0xff]
      %v5730 = vld [vmem:[#allocation2 + $0x8b] sm:$0xff]
      %v5731 = vld [vmem:[#allocation2 + $0x93] sm:$0xff]
      %v5732 = vld [vmem:[#allocation2 + $0x9b] sm:$0xff]
      %v5733 = vld [vmem:[#allocation2 + $0xa3] sm:$0xff]
      %v5734 = vld [vmem:[#allocation2 + $0xab] sm:$0xff]
      %v5735 = vld [vmem:[#allocation2 + $0xb3] sm:$0xff]
      %v5736 = vld [vmem:[#allocation2 + $0xbb] sm:$0xff]
      %v5737 = vld [vmem:[#allocation2 + $0xc3] sm:$0xff]
      %v5738 = vld [vmem:[#allocation2 + $0xcb] sm:$0xff]
      %v5739 = vld [vmem:[#allocation2 + $0xd3] sm:$0xff]
      %v5740 = vld [vmem:[#allocation2 + $0xdb] sm:$0xff]
      %v5741 = vld [vmem:[#allocation2 + $0xe3] sm:$0xff]
      %v5742 = vld [vmem:[#allocation2 + $0xeb] sm:$0xff]
      %v5743 = vld [vmem:[#allocation2 + $0xf3] sm:$0xff]
      %v5744 = vld [vmem:[#allocation2 + $0xfb] sm:$0xff]
      %v5745 = vld [vmem:[#allocation2 + $0x103] sm:$0xff]
      %v5746 = vld [vmem:[#allocation2 + $0x10b] sm:$0xff]
      %v5747 = vld [vmem:[#allocation2 + $0x113] sm:$0xff]
      %v5748 = vld [vmem:[#allocation2 + $0x11b] sm:$0xff]
      %v5749 = vld [vmem:[#allocation2 + $0x123] sm:$0xff]
      %v5750 = vld [vmem:[#allocation2 + $0x12b] sm:$0xff]
      %v5751 = vld [vmem:[%s5] sm:$0x1]
      %v5753 = vlaneseq
      %v5754 = vshrl.u32 %v5753, 7
      %v5755 = vsub.s32 0, %v5754
      %v5756 = vrot.slane %v5751, %v5755
      %v5758 = vmul.f32 %v5537, %v5756
      %v5759 = vmul.f32 %v5542, %v5756
      %v5760 = vmul.f32 %v5547, %v5756
      %v5761 = vmul.f32 %v5552, %v5756
      %v5762 = vmul.f32 %v5557, %v5756
      %v5763 = vmul.f32 %v5562, %v5756
      %v5764 = vmul.f32 %v5567, %v5756
      %v5765 = vmul.f32 %v5572, %v5756
      %v5766 = vmul.f32 %v5577, %v5756
      %v5767 = vmul.f32 %v5582, %v5756
      %v5768 = vmul.f32 %v5587, %v5756
      %v5769 = vmul.f32 %v5592, %v5756
      %v5770 = vmul.f32 %v5597, %v5756
      %v5771 = vmul.f32 %v5602, %v5756
      %v5772 = vmul.f32 %v5607, %v5756
      %v5773 = vmul.f32 %v5612, %v5756
      %v5774 = vmul.f32 %v5617, %v5756
      %v5775 = vmul.f32 %v5622, %v5756
      %v5776 = vmul.f32 %v5627, %v5756
      %v5777 = vmul.f32 %v5632, %v5756
      %v5778 = vmul.f32 %v5637, %v5756
      %v5779 = vmul.f32 %v5642, %v5756
      %v5780 = vmul.f32 %v5647, %v5756
      %v5781 = vmul.f32 %v5652, %v5756
      %v5782 = vmul.f32 %v5657, %v5756
      %v5783 = vmul.f32 %v5662, %v5756
      %v5784 = vmul.f32 %v5667, %v5756
      %v5785 = vmul.f32 %v5672, %v5756
      %v5786 = vmul.f32 %v5677, %v5756
      %v5787 = vmul.f32 %v5682, %v5756
      %v5788 = vmul.f32 %v5687, %v5756
      %v5789 = vmul.f32 %v5692, %v5756
      %v5790 = vmul.f32 %v5697, %v5756
      %v5791 = vmul.f32 %v5702, %v5756
      %v5792 = vmul.f32 %v5707, %v5756
      %v5793 = vmul.f32 %v5712, %v5756
      %v5794 = vld [vmem:[%s6] sm:$0x1]
      %v5796 = vlaneseq
      %v5797 = vshrl.u32 %v5796, 7
      %v5798 = vsub.s32 0, %v5797
      %v5799 = vrot.slane %v5794, %v5798
      %v5801 = vadd.f32 %v5758, %v5799
      %v5802 = vadd.f32 %v5759, %v5799
      %v5803 = vadd.f32 %v5760, %v5799
      %v5804 = vadd.f32 %v5761, %v5799
      %v5805 = vadd.f32 %v5762, %v5799
      %v5806 = vadd.f32 %v5763, %v5799
      %v5807 = vadd.f32 %v5764, %v5799
      %v5808 = vadd.f32 %v5765, %v5799
      %v5809 = vadd.f32 %v5766, %v5799
      %v5810 = vadd.f32 %v5767, %v5799
      %v5811 = vadd.f32 %v5768, %v5799
      %v5812 = vadd.f32 %v5769, %v5799
      %v5813 = vadd.f32 %v5770, %v5799
      %v5814 = vadd.f32 %v5771, %v5799
      %v5815 = vadd.f32 %v5772, %v5799
      %v5816 = vadd.f32 %v5773, %v5799
      %v5817 = vadd.f32 %v5774, %v5799
      %v5818 = vadd.f32 %v5775, %v5799
      %v5819 = vadd.f32 %v5776, %v5799
      %v5820 = vadd.f32 %v5777, %v5799
      %v5821 = vadd.f32 %v5778, %v5799
      %v5822 = vadd.f32 %v5779, %v5799
      %v5823 = vadd.f32 %v5780, %v5799
      %v5824 = vadd.f32 %v5781, %v5799
      %v5825 = vadd.f32 %v5782, %v5799
      %v5826 = vadd.f32 %v5783, %v5799
      %v5827 = vadd.f32 %v5784, %v5799
      %v5828 = vadd.f32 %v5785, %v5799
      %v5829 = vadd.f32 %v5786, %v5799
      %v5830 = vadd.f32 %v5787, %v5799
      %v5831 = vadd.f32 %v5788, %v5799
      %v5832 = vadd.f32 %v5789, %v5799
      %v5833 = vadd.f32 %v5790, %v5799
      %v5834 = vadd.f32 %v5791, %v5799
      %v5835 = vadd.f32 %v5792, %v5799
      %v5836 = vadd.f32 %v5793, %v5799
      %v5837 = vadd.f32 %v5801, %v5715
      %v5838 = vadd.f32 %v5802, %v5716
      %v5839 = vadd.f32 %v5803, %v5717
      %v5840 = vadd.f32 %v5804, %v5718
      %v5841 = vadd.f32 %v5805, %v5719
      %v5842 = vadd.f32 %v5806, %v5720
      %v5843 = vadd.f32 %v5807, %v5721
      %v5844 = vadd.f32 %v5808, %v5722
      %v5845 = vadd.f32 %v5809, %v5723
      %v5846 = vadd.f32 %v5810, %v5724
      %v5847 = vadd.f32 %v5811, %v5725
      %v5848 = vadd.f32 %v5812, %v5726
      %v5849 = vadd.f32 %v5813, %v5727
      %v5850 = vadd.f32 %v5814, %v5728
      %v5851 = vadd.f32 %v5815, %v5729
      %v5852 = vadd.f32 %v5816, %v5730
      %v5853 = vadd.f32 %v5817, %v5731
      %v5854 = vadd.f32 %v5818, %v5732
      %v5855 = vadd.f32 %v5819, %v5733
      %v5856 = vadd.f32 %v5820, %v5734
      %v5857 = vadd.f32 %v5821, %v5735
      %v5858 = vadd.f32 %v5822, %v5736
      %v5859 = vadd.f32 %v5823, %v5737
      %v5860 = vadd.f32 %v5824, %v5738
      %v5861 = vadd.f32 %v5825, %v5739
      %v5862 = vadd.f32 %v5826, %v5740
      %v5863 = vadd.f32 %v5827, %v5741
      %v5864 = vadd.f32 %v5828, %v5742
      %v5865 = vadd.f32 %v5829, %v5743
      %v5866 = vadd.f32 %v5830, %v5744
      %v5867 = vadd.f32 %v5831, %v5745
      %v5868 = vadd.f32 %v5832, %v5746
      %v5869 = vadd.f32 %v5833, %v5747
      %v5870 = vadd.f32 %v5834, %v5748
      %v5871 = vadd.f32 %v5835, %v5749
      %v5872 = vadd.f32 %v5836, %v5750
      %v5873 = vmax.f32 %v5837, 0.0
      %v5874 = vmax.f32 %v5838, 0.0
      %v5875 = vmax.f32 %v5839, 0.0
      %v5876 = vmax.f32 %v5840, 0.0
      %v5877 = vmax.f32 %v5841, 0.0
      %v5878 = vmax.f32 %v5842, 0.0
      %v5879 = vmax.f32 %v5843, 0.0
      %v5880 = vmax.f32 %v5844, 0.0
      %v5881 = vmax.f32 %v5845, 0.0
      %v5882 = vmax.f32 %v5846, 0.0
      %v5883 = vmax.f32 %v5847, 0.0
      %v5884 = vmax.f32 %v5848, 0.0
      %v5885 = vmax.f32 %v5849, 0.0
      %v5886 = vmax.f32 %v5850, 0.0
      %v5887 = vmax.f32 %v5851, 0.0
      %v5888 = vmax.f32 %v5852, 0.0
      %v5889 = vmax.f32 %v5853, 0.0
      %v5890 = vmax.f32 %v5854, 0.0
      %v5891 = vmax.f32 %v5855, 0.0
      %v5892 = vmax.f32 %v5856, 0.0
      %v5893 = vmax.f32 %v5857, 0.0
      %v5894 = vmax.f32 %v5858, 0.0
      %v5895 = vmax.f32 %v5859, 0.0
      %v5896 = vmax.f32 %v5860, 0.0
      %v5897 = vmax.f32 %v5861, 0.0
      %v5898 = vmax.f32 %v5862, 0.0
      %v5899 = vmax.f32 %v5863, 0.0
      %v5900 = vmax.f32 %v5864, 0.0
      %v5901 = vmax.f32 %v5865, 0.0
      %v5902 = vmax.f32 %v5866, 0.0
      %v5903 = vmax.f32 %v5867, 0.0
      %v5904 = vmax.f32 %v5868, 0.0
      %v5905 = vmax.f32 %v5869, 0.0
      %v5906 = vmax.f32 %v5870, 0.0
      %v5907 = vmax.f32 %v5871, 0.0
      %v5908 = vmax.f32 %v5872, 0.0
      %5909 = vst.msk [vmem:[%s278] sm:$0xff] %vm279, %v5873
      %5910 = vst.msk [vmem:[%s278 + $0x8] sm:$0xff] %vm279, %v5874
      %5911 = vst.msk [vmem:[%s278 + $0x10] sm:$0xff] %vm279, %v5875
      %5912 = vst.msk [vmem:[%s278 + $0x18] sm:$0xff] %vm279, %v5876
      %5913 = vst.msk [vmem:[%s278 + $0x20] sm:$0xff] %vm279, %v5877
      %5914 = vst.msk [vmem:[%s278 + $0x28] sm:$0xff] %vm279, %v5878
      %5915 = vst.msk [vmem:[%s278 + $0x30] sm:$0xff] %vm279, %v5879
      %5916 = vst.msk [vmem:[%s278 + $0x38] sm:$0xff] %vm279, %v5880
      %5917 = vst.msk [vmem:[%s278 + $0x40] sm:$0xff] %vm279, %v5881
      %5918 = vst.msk [vmem:[%s278 + $0x48] sm:$0xff] %vm279, %v5882
      %5919 = vst.msk [vmem:[%s278 + $0x50] sm:$0xff] %vm279, %v5883
      %5920 = vst.msk [vmem:[%s278 + $0x58] sm:$0xff] %vm279, %v5884
      %5921 = vst.msk [vmem:[%s278 + $0x60] sm:$0xff] %vm279, %v5885
      %5922 = vst.msk [vmem:[%s278 + $0x68] sm:$0xff] %vm279, %v5886
      %5923 = vst.msk [vmem:[%s278 + $0x70] sm:$0xff] %vm279, %v5887
      %5924 = vst.msk [vmem:[%s278 + $0x78] sm:$0xff] %vm279, %v5888
      %5925 = vst.msk [vmem:[%s278 + $0x80] sm:$0xff] %vm279, %v5889
      %5926 = vst.msk [vmem:[%s278 + $0x88] sm:$0xff] %vm279, %v5890
      %5927 = vst.msk [vmem:[%s278 + $0x90] sm:$0xff] %vm279, %v5891
      %5928 = vst.msk [vmem:[%s278 + $0x98] sm:$0xff] %vm279, %v5892
      %5929 = vst.msk [vmem:[%s278 + $0xa0] sm:$0xff] %vm279, %v5893
      %5930 = vst.msk [vmem:[%s278 + $0xa8] sm:$0xff] %vm279, %v5894
      %5931 = vst.msk [vmem:[%s278 + $0xb0] sm:$0xff] %vm279, %v5895
      %5932 = vst.msk [vmem:[%s278 + $0xb8] sm:$0xff] %vm279, %v5896
      %5933 = vst.msk [vmem:[%s278 + $0xc0] sm:$0xff] %vm279, %v5897
      %5934 = vst.msk [vmem:[%s278 + $0xc8] sm:$0xff] %vm279, %v5898
      %5935 = vst.msk [vmem:[%s278 + $0xd0] sm:$0xff] %vm279, %v5899
      %5936 = vst.msk [vmem:[%s278 + $0xd8] sm:$0xff] %vm279, %v5900
      %5937 = vst.msk [vmem:[%s278 + $0xe0] sm:$0xff] %vm279, %v5901
      %5938 = vst.msk [vmem:[%s278 + $0xe8] sm:$0xff] %vm279, %v5902
      %5939 = vst.msk [vmem:[%s278 + $0xf0] sm:$0xff] %vm279, %v5903
      %5940 = vst.msk [vmem:[%s278 + $0xf8] sm:$0xff] %vm279, %v5904
      %5941 = vst.msk [vmem:[%s278 + $0x100] sm:$0xff] %vm279, %v5905
      %5942 = vst.msk [vmem:[%s278 + $0x108] sm:$0xff] %vm279, %v5906
      %5943 = vst.msk [vmem:[%s278 + $0x110] sm:$0xff] %vm279, %v5907
      %5944 = vst.msk [vmem:[%s278 + $0x118] sm:$0xff] %vm279, %v5908
      %p5945 = scmp.lt.s32.totalorder %s18, 1
      %s5946 = scalar_select %p5945, %s18, 1
      %s5947 = smul.addr %s5946, 36
      %s5948 = smul.addr %s5947, 8
      %s5949 = scalar_lea.vmem %s7, %s5948
      // Predicated region
      $region49: #{tpu_custom_call.1} parent=47 // pred_check
        %p5950 = pneg %p188
      $region50: #{tpu_custom_call.1} parent=47 // pred_check_branch
        %5952 = sbr.rel (%p5950) target = $region52
      $region51: #{tpu_custom_call.1} parent=47 // pred_region
        _
      $region52: #{tpu_custom_call.1} parent=47 // pred_fallthru
        _
    $region48: #{tpu_custom_call.1} parent=5 // pred_fallthru
      _
    %p5953 = scmp.le.s32.totalorder 2, %s13
    // Predicated region
    $region53: #{tpu_custom_call.1} parent=5 // pred_check
      %p5954 = pneg %p5953
    $region54: #{tpu_custom_call.1} parent=5 // pred_check_branch
      %5956 = sbr.rel (%p5954) target = $region56
    $region55: #{tpu_custom_call.1} parent=5 // pred_region
      %s5957 = ssub.s32 %s13, 2
      // Predicated region
      $region57: #{tpu_custom_call.1} parent=55 // pred_check
        %p5958 = pneg %p194
      $region58: #{tpu_custom_call.1} parent=55 // pred_check_branch
        %5960 = sbr.rel (%p5958) target = $region60
      $region59: #{tpu_custom_call.1} parent=55 // pred_region
        %p5961 = scmp.lt.s32.totalorder %s19, 1
        %s5962 = scalar_select %p5961, %s19, 1
        %s5963 = smul.addr %s5962, 36
        %s5964 = smul.addr %s5963, 8
        %s5965 = scalar_lea.vmem %s7, %s5964
      $region60: #{tpu_custom_call.1} parent=55 // pred_fallthru
        _
    $region56: #{tpu_custom_call.1} parent=5 // pred_fallthru
      _
  $region6: #{tpu_custom_call.1} parent=0 // loop_footer
    %s17 = sadd.s32 1, %s13
  $region7: #{tpu_custom_call.1} parent=0 // loop_footer_branch
    %12 = sbr.rel target = $region3
  $region8: #{tpu_custom_call.1} parent=0 // loop_exit
    _

</llo_original>
